<compile_context>
chip_gen: v7x
topology: tpu7x:2x2x1
jax: 0.10.0
libtpu: 0.0.40
codegen_flags: <defaults>
</compile_context>

<pallas_src>
import math
import numpy as np
import jax
import jax.numpy as jnp
from jax.experimental import pallas as pl
from jax.experimental.pallas import tpu as pltpu

# Scoped-VMEM budget: 32 MiB is safe on every generation (v7x has only 64 MiB
# physical VMEM per TensorCore; v5e/v6e have 128 MiB and could go higher).
_VMEM_LIMIT = 32 * 1024 * 1024
# Target bf16 bytes for one A_hat row-slab block (double-buffered -> ~8 MiB).
_SLAB_TARGET_BYTES = 4 * 1024 * 1024
# Rows gathered per gate-kernel grid step (multiple of 8).
_GATHER_ROWS = 32


def _round_up(v, m):
    return ((v + m - 1) // m) * m


def _choose_row_tile(n, nc, target_bytes=_SLAB_TARGET_BYTES):
    """Pick (tm, nr): tm multiple of 8, nr multiple of tm, nr >= n.

    Keeps one bf16 (tm, nc) slab of A_hat under `target_bytes` while keeping
    row-padding inflation of A_hat minimal (padding waste on the dominant HBM
    read was the main issue with fixed tm=256/tk=512)."""
    n8 = _round_up(max(n, 1), 8)
    tm_cap = max(8, (target_bytes // (nc * 2)) // 8 * 8)
    if n8 <= tm_cap:
        return n8, n8                      # whole row range in one slab, no extra pad
    g = -(-n8 // tm_cap)                   # number of row tiles
    tm = _round_up(-(-n8 // g), 8)         # even split, sublane aligned, <= tm_cap
    return tm, tm * g


# -------------- kernel 1: s = A_hat @ xw + b  (row-slab matvec) --------------

def score_slab_kernel(a_ref, xw_ref, b_ref, s_ref):
    # Full K reduction in one MXU dot per row slab: no accumulator scratch,
    # no init/finalize control flow, single (tm, 1) store.
    s_ref[...] = (
        jnp.dot(a_ref[...], xw_ref[...], preferred_element_type=jnp.float32)
        + b_ref[0]
    )


def gcn_scores(a_pad, xw_pad, b_f32, *, tm):
    nr, nc = a_pad.shape
    return pl.pallas_call(
        score_slab_kernel,
        out_shape=jax.ShapeDtypeStruct((nr, 1), jnp.float32),
        grid_spec=pltpu.PrefetchScalarGridSpec(
            num_scalar_prefetch=0,
            grid=(nr // tm,),
            in_specs=[
                pl.BlockSpec((tm, nc), lambda i: (i, 0)),      # A_hat row slab (bf16)
                pl.BlockSpec((nc, 1), lambda i: (0, 0)),       # xw stays resident
                pl.BlockSpec(memory_space=pltpu.MemorySpace.SMEM),  # bias scalar
            ],
            out_specs=pl.BlockSpec((tm, 1), lambda i: (i, 0)),
        ),
        compiler_params=pltpu.CompilerParams(
            dimension_semantics=("parallel",),
            vmem_limit_bytes=_VMEM_LIMIT,
        ),
    )(a_pad, xw_pad, b_f32)


# -------- kernel 2: blocked gather + gate  x[perm] * tanh(score[perm]) -------

def gate_kernel(perm_ref, gate_ref, x_hbm, o_ref, xbuf, sems):
    # perm_ref : SMEM (k_pad,) int32            (scalar prefetch)
    # gate_ref : VMEM (RB, 1) f32, tanh(score)[perm] for this block (pipelined)
    # x_hbm    : raw HBM ref (N, C)
    # o_ref    : VMEM (RB, C) output block
    # xbuf     : VMEM (2, RB, C) double-buffered gather scratch
    # sems     : DMA semaphores (2, RB), one per in-flight row copy
    i = pl.program_id(0)
    nblk = pl.num_programs(0)
    rb = o_ref.shape[0]
    slot = i % 2

    def start_block(blk, slot_):
        base = blk * rb
        for j in range(rb):
            pltpu.make_async_copy(
                x_hbm.at[pl.ds(perm_ref[base + j], 1), :],
                xbuf.at[slot_, pl.ds(j, 1), :],
                sems.at[slot_, j],
            ).start()

    def wait_block(slot_):
        for j in range(rb):
            pltpu.make_async_copy(
                x_hbm.at[pl.ds(0, 1), :],          # dummy src, shapes must match
                xbuf.at[slot_, pl.ds(j, 1), :],
                sems.at[slot_, j],
            ).wait()

    @pl.when(i == 0)
    def _():
        start_block(0, 0)                          # prime the pipeline

    @pl.when(i + 1 < nblk)
    def _():
        start_block(i + 1, 1 - slot)               # prefetch next block's rows

    wait_block(slot)
    o_ref[...] = (xbuf[slot] * gate_ref[...]).astype(o_ref.dtype)


def gated_gather(x, gate_pad, perm_pad, *, rb=_GATHER_ROWS):
    # TODO(synk): grid is "arbitrary" because the manual cross-step prefetch is
    # primed only at step 0; per-core priming would be needed to mark it
    # "parallel" for v7x's two TensorCores.
    k_pad = perm_pad.shape[0]
    _, c = x.shape
    return pl.pallas_call(
        gate_kernel,
        out_shape=jax.ShapeDtypeStruct((k_pad, c), x.dtype),
        grid_spec=pltpu.PrefetchScalarGridSpec(
            num_scalar_prefetch=1,                             # perm lives in SMEM
            grid=(k_pad // rb,),
            in_specs=[
                pl.BlockSpec((rb, 1), lambda i, perm_ref: (i, 0)),  # gate values
                pl.BlockSpec(memory_space=pl.ANY),                  # x stays in HBM
            ],
            out_specs=pl.BlockSpec((rb, c), lambda i, perm_ref: (i, 0)),
            scratch_shapes=[
                pltpu.VMEM((2, rb, c), x.dtype),
                pltpu.SemaphoreType.DMA((2, rb)),
            ],
        ),
        compiler_params=pltpu.CompilerParams(
            dimension_semantics=("arbitrary",),
            vmem_limit_bytes=_VMEM_LIMIT,
        ),
    )(perm_pad, gate_pad, x)


# ------------------------------- JAX glue -----------------------------------

def build_gcn_adjacency_padded(edge_index, num_nodes, nr, nc):
    """Dense D^{-1/2}(A+I)D^{-1/2} (PyG gcn_norm, source->target), scattered
    directly into the padded (nr, nc) bf16 buffer the score kernel reads.

    Note: duplicate edges are double-counted (same as un-coalesced PyG input).
    """
    src = jnp.concatenate([edge_index[0], jnp.arange(num_nodes)])
    dst = jnp.concatenate([edge_index[1], jnp.arange(num_nodes)])
    deg = jnp.zeros((num_nodes,), jnp.float32).at[dst].add(1.0)
    dinv = jax.lax.rsqrt(deg)                      # deg >= 1 because of self-loops
    vals = (dinv[dst] * dinv[src]).astype(jnp.bfloat16)
    # TODO(synk): optional further HBM saving: store A_hat as int8+scale
    # (v5e/v6e) or fp8 e4m3 (v7x) instead of bf16.
    return jnp.zeros((nr, nc), jnp.bfloat16).at[dst, src].add(vals)


def filter_adj(edge_index, edge_attr, perm, num_nodes):
    """Keep edges whose endpoints are both in perm; remap node indices."""
    # TODO(synk): dynamic output shape -> host numpy; forces a device->host sync.
    ei = np.asarray(edge_index)
    perm_np = np.asarray(perm)
    mapping = np.full((num_nodes,), -1, dtype=np.int32)
    mapping[perm_np] = np.arange(perm_np.shape[0], dtype=np.int32)
    row, col = mapping[ei[0]], mapping[ei[1]]
    keep = (row >= 0) & (col >= 0)
    new_edge_index = np.stack([row[keep], col[keep]], axis=0)
    new_edge_attr = None if edge_attr is None else np.asarray(edge_attr)[keep]
    return new_edge_index, new_edge_attr


def sag_pool(x, edge_index, w, b, ratio, edge_attr=None, batch=None):
    n, c = x.shape
    if batch is None:
        batch = jnp.zeros((n,), dtype=jnp.int32)

    # --- tiling: minimal-padding row slab, lane-aligned columns -------------
    nc = _round_up(n, 128)
    tm, nr = _choose_row_tile(n, nc)

    # --- A_hat built directly at padded bf16 shape (no extra cast/pad pass) --
    a_pad = build_gcn_adjacency_padded(edge_index, n, nr, nc)

    # --- xw = x @ W: tiny [C,1] GEMV, plain JAX (no separate pallas launch) --
    xw = jnp.dot(x.astype(jnp.bfloat16), w.astype(jnp.bfloat16),
                 preferred_element_type=jnp.float32)                   # [n, 1]
    xw_pad = jnp.zeros((nc, 1), jnp.bfloat16).at[:n, :].set(xw.astype(jnp.bfloat16))

    # --- Pallas: s = A_hat @ xw + b, row-slab pipelined, f32 result ----------
    score_2d = gcn_scores(a_pad, xw_pad, b.astype(jnp.float32), tm=tm)  # [nr, 1]
    score = score_2d[:n, 0]

    # --- TOPK node selection (single graph) ----------------------------------
    # TODO(synk): NUCLEUS / TAILFREE / ITS sampling variants and per-graph
    # (batched) top-k segmentation not implemented.
    k = int(math.ceil(ratio * n))
    _, perm = jax.lax.top_k(score, k)   # tie-break order may differ from torch.topk
    perm = perm.astype(jnp.int32)

    # --- Pallas: blocked gather + gate  x[perm] * tanh(score[perm]) ----------
    # Gate values gathered in plain JAX (K scalars) so the kernel needs no
    # per-row 4-byte score DMAs.
    rb = _GATHER_ROWS
    k_pad = _round_up(k, rb)
    gate = jnp.tanh(jnp.take(score, perm, axis=0))[:, None]             # [K, 1]
    gate_pad = jnp.zeros((k_pad, 1), jnp.float32).at[:k, :].set(gate)
    perm_pad = jnp.zeros((k_pad,), jnp.int32).at[:k].set(perm)
    x_out = gated_gather(x, gate_pad, perm_pad, rb=rb)[:k]              # [K, C]

    batch_out = jnp.take(batch, perm, axis=0)
    new_edge_index, new_edge_attr = filter_adj(edge_index, edge_attr, perm, n)

    return x_out, new_edge_index, new_edge_attr, batch_out, perm


# --------------------------------- demo --------------------------------------

if __name__ == "__main__":
    key = jax.random.PRNGKey(0)
    k_x, k_e, k_w = jax.random.split(key, 3)

    N, C, E = 1536, 128, 6144   # lane-dense C; N exercises a multi-slab score grid
    ratio = 0.5

    x = jax.random.normal(k_x, (N, C), dtype=jnp.float32)
    edge_index = jax.random.randint(k_e, (2, E), 0, N, dtype=jnp.int32)

    # score_layer = GCNConv(in_channels=C, out_channels=1): weight [C,1], bias [1]
    limit = math.sqrt(6.0 / (C + 1))  # glorot-uniform bound, deterministic draw
    w = jax.random.uniform(k_w, (C, 1), jnp.float32, -limit, limit)
    b = jnp.zeros((1,), dtype=jnp.float32)

    x_out, ei_out, ea_out, batch_out, perm = sag_pool(x, edge_index, w, b, ratio)
    jax.block_until_ready(x_out)
    jax.block_until_ready(batch_out)
    jax.block_until_ready(perm)

    K = int(math.ceil(ratio * N))
    assert x_out.shape == (K, C)
    assert ei_out.shape[0] == 2

    # Cross-check against a plain-JAX bf16 reference (same precision recipe).
    a_bf = build_gcn_adjacency_padded(edge_index, N, N, _round_up(N, 128))[:N, :N]
    xw_bf = jnp.dot(x.astype(jnp.bfloat16), w.astype(jnp.bfloat16),
                    preferred_element_type=jnp.float32).astype(jnp.bfloat16)
    s_ref = jnp.dot(a_bf, xw_bf, preferred_element_type=jnp.float32)[:, 0] + b[0]
    x_ref_out = x[perm] * jnp.tanh(s_ref[perm])[:, None]
    assert jnp.allclose(x_out, x_ref_out, atol=1e-2, rtol=1e-2)

    print("KERNEL_OK")
</pallas_src>

<mosaic_0001>
module attributes {stable_mosaic.version = 11 : i64} {
  func.func @score_slab_kernel(%arg0: i32, %arg1: memref<768x1536xbf16, #tpu.memory_space<vmem>>, %arg2: memref<1536x1xbf16, #tpu.memory_space<vmem>>, %arg3: memref<1xf32, #tpu.memory_space<smem>>, %arg4: memref<768x1xf32, #tpu.memory_space<vmem>>) attributes {dimension_semantics = [#tpu.dimension_semantics<parallel>], iteration_bounds = array<i64: 2>, scalar_prefetch = 0 : i64, scratch_operands = 0 : i64, tpu.core_type = #tpu.core_type<tc>, window_params = [{transform_indices = @transform_0, window_bounds = array<i64: 768, 1536>}, {pipeline_mode = #tpu.pipeline_mode<synchronous>, transform_indices = @transform_1, window_bounds = array<i64: 1536, 1>}, {transform_indices = @transform_2, window_bounds = array<i64: 1>}, {transform_indices = @transform_3, window_bounds = array<i64: 768, 1>}]} {
    %c0 = arith.constant 0 : index
    %c0_0 = arith.constant 0 : index
    %0 = vector.load %arg1[%c0, %c0_0] : memref<768x1536xbf16, #tpu.memory_space<vmem>>, vector<768x1536xbf16>
    %c0_1 = arith.constant 0 : index
    %c0_2 = arith.constant 0 : index
    %1 = vector.load %arg2[%c0_1, %c0_2] : memref<1536x1xbf16, #tpu.memory_space<vmem>>, vector<1536x1xbf16>
    %cst = arith.constant dense<0.000000e+00> : vector<768x1xf32>
    %2 = tpu.matmul %0, %1, %cst {dimension_numbers = #tpu.dot_dimension_numbers<[1], [0], [0], [1], [0, 0, 1, 1], [], []>} : vector<768x1536xbf16>, vector<1536x1xbf16>, vector<768x1xf32> -> vector<768x1xf32>
    %c0_3 = arith.constant 0 : index
    %3 = memref.load %arg3[%c0_3] : memref<1xf32, #tpu.memory_space<smem>>
    %4 = vector.broadcast %3 : f32 to vector<768x1xf32>
    %5 = arith.addf %2, %4 : vector<768x1xf32>
    %c0_4 = arith.constant 0 : index
    %c0_5 = arith.constant 0 : index
    %6 = vector.load %arg4[%c0_4, %c0_5] : memref<768x1xf32, #tpu.memory_space<vmem>>, vector<768x1xf32>
    tpu.vector_store %arg4[%c0_4, %c0_5], %5 {strides = array<i32>} : memref<768x1xf32, #tpu.memory_space<vmem>>, vector<768x1xf32>,
    return
  }
  func.func @transform_0(%arg0: i32) -> (i32, i32) {
    %c0_i32 = arith.constant 0 : i32
    %c0_i32_0 = arith.constant 0 : i32
    return %arg0, %c0_i32 : i32, i32
  }
  func.func @transform_1(%arg0: i32) -> (i32, i32) {
    %c0_i32 = arith.constant 0 : i32
    %c0_i32_0 = arith.constant 0 : i32
    %c0_i32_1 = arith.constant 0 : i32
    return %c0_i32, %c0_i32_0 : i32, i32
  }
  func.func @transform_2(%arg0: i32) -> i32 {
    %c0_i32 = arith.constant 0 : i32
    %c0_i32_0 = arith.constant 0 : i32
    return %c0_i32 : i32
  }
  func.func @transform_3(%arg0: i32) -> (i32, i32) {
    %c0_i32 = arith.constant 0 : i32
    %c0_i32_0 = arith.constant 0 : i32
    return %arg0, %c0_i32 : i32, i32
  }
}

</mosaic_0001>

<llo_original>
// kernel: tpu_custom_call.1
$region0: #{tpu_custom_call.1}
  #allocation0 [shape = 'u32[]', space=smem, size = 0x4, offset = 0x4, fixed_abs, tag = 'smem constant byte address 0x4 - core index']
  #allocation1 [shape = 'u32[144,128]{1,0:T(1,128)}', space=vmem, size = 0x12000, scoped, tag = 'internal scratch']
  #allocation2 [shape = 'f32[1]{0:T(128)S(6)}', space=smem, size = 0x200, scoped, tag = 'scoped memory for tpu_custom_call.1']
  %s0 = inlined_call_operand.hbm [shape: bf16[1536,1536], index: 0, kind: input, shape index: {}]
  %s1 = inlined_call_operand.vmem [shape: bf16[1536,1], index: 1, kind: input, shape index: {}]
  %s2 = inlined_call_operand.<no memory space> [shape: f32[1], index: 2, kind: input, shape index: {}]
  %s3 = inlined_call_operand.vmem [shape: f32[1536,1], index: 3, kind: output, shape index: {}]
  %s4 = sld [smem:[#allocation0]]
  $region49: #{tpu_custom_call.1} parent=0
    _
  %s6 = ssub.s32 1, %s4
  %s7 = scalar_select 0, %s6, %s4
  %8 = sst [smem:[#allocation2]] %s2
  $region1: #{tpu_custom_call.1} parent=0
    #allocation3 [shape = 'u8[4718592]{0}', space=vmem, size = 0x480000, scoped, tag = 'input window, operand 0']
    #allocation4 [shape = 's32[2]{0}', space=sflag, size = 0x8, scoped, tag = 'scoped memory for tpu_custom_call.1']
    %9 = vsyncpa [#allocation4], 0
    %s10 = scalar_lea.sflag [#allocation4], 1
    %11 = vsyncpa %s10, 0
    loop: start=0, step=1, limit=4
    $region2: #{tpu_custom_call.1} parent=1 // loop_pre_header
      _
    $region3: #{tpu_custom_call.1} parent=1 // loop_header
      %s13 = sphi 0, %s17
      %p14 = scmp.ge.s32.totalorder %s13, 4
      %s23 = sphi 0, %s25
      %s26 = sphi 0, %s23
      %s27 = sphi 0, %s26
      %s43 = sphi 0, %s27
      %s47 = sphi 0, %s47
      %s49 = sphi 0, %s47
      %s50 = sphi 0, %s49
      %s64 = sphi 0, %s50
      %s68 = sphi 0, %s68
      %s70 = sphi 0, %s68
      %s71 = sphi 0, %s70
      %s85 = sphi 0, %s71
      %s91 = sphi 0, %s93
      %s94 = sphi 0, %s91
      %s95 = sphi 0, %s94
      %s111 = sphi 0, %s95
    $region4: #{tpu_custom_call.1} parent=1 // loop_header_branch
      %16 = sbr.rel (%p14) target = $region8
    $region5: #{tpu_custom_call.1} parent=1 // loop_body
      %s18 = ssub.s32 %s13, 1
      %s19 = ssub.s32 %s13, 2
      %s20 = sadd.s32 %s13, 1
      %s21 = ssub.s32 %s13, %s20
      %p22 = scmp.eq.s32.totalorder %s21, 0
      %s24 = sadd.s32 %s23, 1
      %s25 = scalar_select %p22, %s23, %s24
      %p28 = pneg %p22
      %p29 = scmp.eq.s32.totalorder %s13, 1
      %p30 = por %p28, %p29
      %p31 = scmp.ne.s32.totalorder %s23, %s26
      %p32 = scmp.eq.s32.totalorder %s13, 0
      %p33 = por %p31, %p32
      %p34 = scmp.ne.s32.totalorder %s23, %s26
      %p35 = scmp.eq.s32.totalorder %s18, 1
      %p36 = por %p34, %p35
      %p37 = scmp.ne.s32.totalorder %s26, %s27
      %p38 = scmp.eq.s32.totalorder %s18, 0
      %p39 = por %p37, %p38
      %p40 = scmp.ne.s32.totalorder %s26, %s27
      %p41 = scmp.eq.s32.totalorder %s19, 1
      %p42 = por %p40, %p41
      %p44 = scmp.ne.s32.totalorder %s27, %s43
      %p45 = scmp.eq.s32.totalorder %s19, 0
      %p46 = por %p44, %p45
      %s48 = sadd.s32 %s47, 1
      %p51 = scmp.eq.s32.totalorder %s13, 1
      %p52 = scmp.ne.s32.totalorder %s47, %s49
      %p53 = scmp.eq.s32.totalorder %s13, 0
      %p54 = por %p52, %p53
      %p55 = scmp.ne.s32.totalorder %s47, %s49
      %p56 = scmp.eq.s32.totalorder %s18, 1
      %p57 = por %p55, %p56
      %p58 = scmp.ne.s32.totalorder %s49, %s50
      %p59 = scmp.eq.s32.totalorder %s18, 0
      %p60 = por %p58, %p59
      %p61 = scmp.ne.s32.totalorder %s49, %s50
      %p62 = scmp.eq.s32.totalorder %s19, 1
      %p63 = por %p61, %p62
      %p65 = scmp.ne.s32.totalorder %s50, %s64
      %p66 = scmp.eq.s32.totalorder %s19, 0
      %p67 = por %p65, %p66
      %s69 = sadd.s32 %s68, 1
      %p72 = scmp.eq.s32.totalorder %s13, 1
      %p73 = scmp.ne.s32.totalorder %s68, %s70
      %p74 = scmp.eq.s32.totalorder %s13, 0
      %p75 = por %p73, %p74
      %p76 = scmp.ne.s32.totalorder %s68, %s70
      %p77 = scmp.eq.s32.totalorder %s18, 1
      %p78 = por %p76, %p77
      %p79 = scmp.ne.s32.totalorder %s70, %s71
      %p80 = scmp.eq.s32.totalorder %s18, 0
      %p81 = por %p79, %p80
      %p82 = scmp.ne.s32.totalorder %s70, %s71
      %p83 = scmp.eq.s32.totalorder %s19, 1
      %p84 = por %p82, %p83
      %p86 = scmp.ne.s32.totalorder %s71, %s85
      %p87 = scmp.eq.s32.totalorder %s19, 0
      %p88 = por %p86, %p87
      %s89 = ssub.s32 %s13, %s20
      %p90 = scmp.eq.s32.totalorder %s89, 0
      %s92 = sadd.s32 %s91, 1
      %s93 = scalar_select %p90, %s91, %s92
      %p96 = pneg %p90
      %p97 = scmp.eq.s32.totalorder %s13, 1
      %p98 = por %p96, %p97
      %p99 = scmp.ne.s32.totalorder %s91, %s94
      %p100 = scmp.eq.s32.totalorder %s13, 0
      %p101 = por %p99, %p100
      %p102 = scmp.ne.s32.totalorder %s91, %s94
      %p103 = scmp.eq.s32.totalorder %s18, 1
      %p104 = por %p102, %p103
      %p105 = scmp.ne.s32.totalorder %s94, %s95
      %p106 = scmp.eq.s32.totalorder %s18, 0
      %p107 = por %p105, %p106
      %p108 = scmp.ne.s32.totalorder %s94, %s95
      %p109 = scmp.eq.s32.totalorder %s19, 1
      %p110 = por %p108, %p109
      %p112 = scmp.ne.s32.totalorder %s95, %s111
      %p113 = scmp.eq.s32.totalorder %s19, 0
      %p114 = por %p112, %p113
      %p115 = scmp.le.s32.totalorder 1, %s13
      %p116 = scmp.lt.s32.totalorder %s13, 3
      %p117 = pnand %p115, %p116
      %p118 = pneg %p117
      // Predicated region
      $region9: #{tpu_custom_call.1} parent=5 // pred_check
        _
      $region10: #{tpu_custom_call.1} parent=5 // pred_check_branch
        %120 = sbr.rel (%p117) target = $region12
      $region11: #{tpu_custom_call.1} parent=5 // pred_region
        %s121 = ssub.s32 %s13, 1
        // Predicated region
        $region13: #{tpu_custom_call.1} parent=11 // pred_check
          %p122 = pneg %p60
        $region14: #{tpu_custom_call.1} parent=11 // pred_check_branch
          %124 = sbr.rel (%p122) target = $region16
        $region15: #{tpu_custom_call.1} parent=11 // pred_region
          _
        $region16: #{tpu_custom_call.1} parent=11 // pred_fallthru
          _
        // Predicated region
        $region17: #{tpu_custom_call.1} parent=11 // pred_check
          %p125 = pneg %p81
        $region18: #{tpu_custom_call.1} parent=11 // pred_check_branch
          %127 = sbr.rel (%p125) target = $region20
        $region19: #{tpu_custom_call.1} parent=11 // pred_region
          _
        $region20: #{tpu_custom_call.1} parent=11 // pred_fallthru
          _
      $region12: #{tpu_custom_call.1} parent=5 // pred_fallthru
        _
      %p128 = scmp.lt.s32.totalorder %s13, 2
      // Predicated region
      $region21: #{tpu_custom_call.1} parent=5 // pred_check
        %p129 = pneg %p128
      $region22: #{tpu_custom_call.1} parent=5 // pred_check_branch
        %131 = sbr.rel (%p129) target = $region24
      $region23: #{tpu_custom_call.1} parent=5 // pred_region
        // Predicated region
        $region25: #{tpu_custom_call.1} parent=23 // pred_check
          %p132 = pneg %p33
        $region26: #{tpu_custom_call.1} parent=23 // pred_check_branch
          %134 = sbr.rel (%p132) target = $region28
        $region27: #{tpu_custom_call.1} parent=23 // pred_region
          %s135 = sand.u32 %s23, 1
          %s136 = scalar_lea.sflag [#allocation4], %s135
          %s137 = sand.u32 %s23, 1
          %s138 = smul.addr %s137, 4608
          %s139 = scalar_lea.vmem [#allocation3], %s138
          %s140 = smul.u32 96, %s13
          %s142 = ssub.s32 73728, 73728
          %143 = vsyncadd %s136, %s142
          %s144 = smul.addr %s140, 12
          %s145 = smul.addr %s144, 64
          %s146 = scalar_lea.hbm %s0, %s145
          %s147 = sshll.u32 %s139, 4
          %s148 = int_to_ptr.vmem [resolvable:$true] %s147
          %153 = dma.hbm_to_vmem [thread:$0]  %s146, 73728, %s148, %s136, 768, 768, 48
        $region28: #{tpu_custom_call.1} parent=23 // pred_fallthru
          _
      $region24: #{tpu_custom_call.1} parent=5 // pred_fallthru
        _
      %p154 = scmp.le.s32.totalorder 1, %s13
      %p155 = scmp.lt.s32.totalorder %s13, 3
      %p156 = pnand %p154, %p155
      %p157 = pneg %p156
      // Predicated region
      $region29: #{tpu_custom_call.1} parent=5 // pred_check
        _
      $region30: #{tpu_custom_call.1} parent=5 // pred_check_branch
        %159 = sbr.rel (%p156) target = $region32
      $region31: #{tpu_custom_call.1} parent=5 // pred_region
        %s160 = ssub.s32 %s13, 1
        %s161 = sand.u32 %s26, 1
        %s162 = scalar_lea.sflag [#allocation4], %s161
        %s163 = sand.u32 %s26, 1
        %s164 = smul.addr %s163, 4608
        %s165 = scalar_lea.vmem [#allocation3], %s164
        // Predicated region
        $region33: #{tpu_custom_call.1} parent=31 // pred_check
          %p166 = pneg %p39
        $region34: #{tpu_custom_call.1} parent=31 // pred_check_branch
          %168 = sbr.rel (%p166) target = $region36
        $region35: #{tpu_custom_call.1} parent=31 // pred_region
          %169 = dma.done %s162, 73728
        $region36: #{tpu_custom_call.1} parent=31 // pred_fallthru
          _
        %s170 = sand.u32 %s26, 1
        %s171 = scalar_lea.sflag [#allocation4], %s170
        %s172 = sand.u32 %s26, 1
        %s173 = smul.addr %s172, 4608
        %s174 = scalar_lea.vmem [#allocation3], %s173
        %p175 = pneg %p39
        %p176 = pneg %p36
        %p177 = pneg %p60
        %p178 = pneg %p57
        %p179 = pneg %p81
        %p180 = pneg %p78
        %p181 = pneg %p107
        %p182 = pneg %p104
        %s183 = smul.u32 96, %s18
        %p184 = scmp.lt.s32.totalorder %s183, 191
        %s185 = scalar_select %p184, %s183, 191
        %s186 = smul.addr %s185, 8
        %s187 = scalar_lea.vmem %s3, %s186
        %s188 = smul.u32 96, %s18
        %s189 = smul.u32 96, %s18
        %p190 = scmp.lt.s32.totalorder %s189, 191
        %s191 = scalar_select %p190, %s189, 191
        %s192 = smul.addr %s191, 8
        %s193 = scalar_lea.vmem %s3, %s192
        %s194 = smul.u32 96, %s18
        %v196 = vld [vmem:[%s165] sm:$0xff]
        %v197 = vld [vmem:[%s165 + $0x8] sm:$0xff]
        %v198 = vld [vmem:[%s165 + $0x10] sm:$0xff]
        %v199 = vld [vmem:[%s165 + $0x18] sm:$0xff]
        %v200 = vld [vmem:[%s165 + $0x20] sm:$0xff]
        %v201 = vld [vmem:[%s165 + $0x28] sm:$0xff]
        %v202 = vld [vmem:[%s165 + $0x30] sm:$0xff]
        %v203 = vld [vmem:[%s165 + $0x38] sm:$0xff]
        %v204 = vld [vmem:[%s165 + $0x40] sm:$0xff]
        %v205 = vld [vmem:[%s165 + $0x48] sm:$0xff]
        %v206 = vld [vmem:[%s165 + $0x50] sm:$0xff]
        %v207 = vld [vmem:[%s165 + $0x58] sm:$0xff]
        %v208 = vld [vmem:[%s165 + $0x60] sm:$0xff]
        %v209 = vld [vmem:[%s165 + $0x68] sm:$0xff]
        %v210 = vld [vmem:[%s165 + $0x70] sm:$0xff]
        %v211 = vld [vmem:[%s165 + $0x78] sm:$0xff]
        %v212 = vld [vmem:[%s165 + $0x80] sm:$0xff]
        %v213 = vld [vmem:[%s165 + $0x88] sm:$0xff]
        %v214 = vld [vmem:[%s165 + $0x90] sm:$0xff]
        %v215 = vld [vmem:[%s165 + $0x98] sm:$0xff]
        %v216 = vld [vmem:[%s165 + $0xa0] sm:$0xff]
        %v217 = vld [vmem:[%s165 + $0xa8] sm:$0xff]
        %v218 = vld [vmem:[%s165 + $0xb0] sm:$0xff]
        %v219 = vld [vmem:[%s165 + $0xb8] sm:$0xff]
        %v220 = vld [vmem:[%s165 + $0xc0] sm:$0xff]
        %v221 = vld [vmem:[%s165 + $0xc8] sm:$0xff]
        %v222 = vld [vmem:[%s165 + $0xd0] sm:$0xff]
        %v223 = vld [vmem:[%s165 + $0xd8] sm:$0xff]
        %v224 = vld [vmem:[%s165 + $0xe0] sm:$0xff]
        %v225 = vld [vmem:[%s165 + $0xe8] sm:$0xff]
        %v226 = vld [vmem:[%s165 + $0xf0] sm:$0xff]
        %v227 = vld [vmem:[%s165 + $0xf8] sm:$0xff]
        %v228 = vld [vmem:[%s165 + $0x100] sm:$0xff]
        %v229 = vld [vmem:[%s165 + $0x108] sm:$0xff]
        %v230 = vld [vmem:[%s165 + $0x110] sm:$0xff]
        %v231 = vld [vmem:[%s165 + $0x118] sm:$0xff]
        %v232 = vld [vmem:[%s165 + $0x120] sm:$0xff]
        %v233 = vld [vmem:[%s165 + $0x128] sm:$0xff]
        %v234 = vld [vmem:[%s165 + $0x130] sm:$0xff]
        %v235 = vld [vmem:[%s165 + $0x138] sm:$0xff]
        %v236 = vld [vmem:[%s165 + $0x140] sm:$0xff]
        %v237 = vld [vmem:[%s165 + $0x148] sm:$0xff]
        %v238 = vld [vmem:[%s165 + $0x150] sm:$0xff]
        %v239 = vld [vmem:[%s165 + $0x158] sm:$0xff]
        %v240 = vld [vmem:[%s165 + $0x160] sm:$0xff]
        %v241 = vld [vmem:[%s165 + $0x168] sm:$0xff]
        %v242 = vld [vmem:[%s165 + $0x170] sm:$0xff]
        %v243 = vld [vmem:[%s165 + $0x178] sm:$0xff]
        %v244 = vld [vmem:[%s165 + $0x180] sm:$0xff]
        %v245 = vld [vmem:[%s165 + $0x188] sm:$0xff]
        %v246 = vld [vmem:[%s165 + $0x190] sm:$0xff]
        %v247 = vld [vmem:[%s165 + $0x198] sm:$0xff]
        %v248 = vld [vmem:[%s165 + $0x1a0] sm:$0xff]
        %v249 = vld [vmem:[%s165 + $0x1a8] sm:$0xff]
        %v250 = vld [vmem:[%s165 + $0x1b0] sm:$0xff]
        %v251 = vld [vmem:[%s165 + $0x1b8] sm:$0xff]
        %v252 = vld [vmem:[%s165 + $0x1c0] sm:$0xff]
        %v253 = vld [vmem:[%s165 + $0x1c8] sm:$0xff]
        %v254 = vld [vmem:[%s165 + $0x1d0] sm:$0xff]
        %v255 = vld [vmem:[%s165 + $0x1d8] sm:$0xff]
        %v256 = vld [vmem:[%s165 + $0x1e0] sm:$0xff]
        %v257 = vld [vmem:[%s165 + $0x1e8] sm:$0xff]
        %v258 = vld [vmem:[%s165 + $0x1f0] sm:$0xff]
        %v259 = vld [vmem:[%s165 + $0x1f8] sm:$0xff]
        %v260 = vld [vmem:[%s165 + $0x200] sm:$0xff]
        %v261 = vld [vmem:[%s165 + $0x208] sm:$0xff]
        %v262 = vld [vmem:[%s165 + $0x210] sm:$0xff]
        %v263 = vld [vmem:[%s165 + $0x218] sm:$0xff]
        %v264 = vld [vmem:[%s165 + $0x220] sm:$0xff]
        %v265 = vld [vmem:[%s165 + $0x228] sm:$0xff]
        %v266 = vld [vmem:[%s165 + $0x230] sm:$0xff]
        %v267 = vld [vmem:[%s165 + $0x238] sm:$0xff]
        %v268 = vld [vmem:[%s165 + $0x240] sm:$0xff]
        %v269 = vld [vmem:[%s165 + $0x248] sm:$0xff]
        %v270 = vld [vmem:[%s165 + $0x250] sm:$0xff]
        %v271 = vld [vmem:[%s165 + $0x258] sm:$0xff]
        %v272 = vld [vmem:[%s165 + $0x260] sm:$0xff]
        %v273 = vld [vmem:[%s165 + $0x268] sm:$0xff]
        %v274 = vld [vmem:[%s165 + $0x270] sm:$0xff]
        %v275 = vld [vmem:[%s165 + $0x278] sm:$0xff]
        %v276 = vld [vmem:[%s165 + $0x280] sm:$0xff]
        %v277 = vld [vmem:[%s165 + $0x288] sm:$0xff]
        %v278 = vld [vmem:[%s165 + $0x290] sm:$0xff]
        %v279 = vld [vmem:[%s165 + $0x298] sm:$0xff]
        %v280 = vld [vmem:[%s165 + $0x2a0] sm:$0xff]
        %v281 = vld [vmem:[%s165 + $0x2a8] sm:$0xff]
        %v282 = vld [vmem:[%s165 + $0x2b0] sm:$0xff]
        %v283 = vld [vmem:[%s165 + $0x2b8] sm:$0xff]
        %v284 = vld [vmem:[%s165 + $0x2c0] sm:$0xff]
        %v285 = vld [vmem:[%s165 + $0x2c8] sm:$0xff]
        %v286 = vld [vmem:[%s165 + $0x2d0] sm:$0xff]
        %v287 = vld [vmem:[%s165 + $0x2d8] sm:$0xff]
        %v288 = vld [vmem:[%s165 + $0x2e0] sm:$0xff]
        %v289 = vld [vmem:[%s165 + $0x2e8] sm:$0xff]
        %v290 = vld [vmem:[%s165 + $0x2f0] sm:$0xff]
        %v291 = vld [vmem:[%s165 + $0x2f8] sm:$0xff]
        %v292 = vld [vmem:[%s165 + $0x300] sm:$0xff]
        %v293 = vld [vmem:[%s165 + $0x308] sm:$0xff]
        %v294 = vld [vmem:[%s165 + $0x310] sm:$0xff]
        %v295 = vld [vmem:[%s165 + $0x318] sm:$0xff]
        %v296 = vld [vmem:[%s165 + $0x320] sm:$0xff]
        %v297 = vld [vmem:[%s165 + $0x328] sm:$0xff]
        %v298 = vld [vmem:[%s165 + $0x330] sm:$0xff]
        %v299 = vld [vmem:[%s165 + $0x338] sm:$0xff]
        %v300 = vld [vmem:[%s165 + $0x340] sm:$0xff]
        %v301 = vld [vmem:[%s165 + $0x348] sm:$0xff]
        %v302 = vld [vmem:[%s165 + $0x350] sm:$0xff]
        %v303 = vld [vmem:[%s165 + $0x358] sm:$0xff]
        %v304 = vld [vmem:[%s165 + $0x360] sm:$0xff]
        %v305 = vld [vmem:[%s165 + $0x368] sm:$0xff]
        %v306 = vld [vmem:[%s165 + $0x370] sm:$0xff]
        %v307 = vld [vmem:[%s165 + $0x378] sm:$0xff]
        %v308 = vld [vmem:[%s165 + $0x380] sm:$0xff]
        %v309 = vld [vmem:[%s165 + $0x388] sm:$0xff]
        %v310 = vld [vmem:[%s165 + $0x390] sm:$0xff]
        %v311 = vld [vmem:[%s165 + $0x398] sm:$0xff]
        %v312 = vld [vmem:[%s165 + $0x3a0] sm:$0xff]
        %v313 = vld [vmem:[%s165 + $0x3a8] sm:$0xff]
        %v314 = vld [vmem:[%s165 + $0x3b0] sm:$0xff]
        %v315 = vld [vmem:[%s165 + $0x3b8] sm:$0xff]
        %v316 = vld [vmem:[%s165 + $0x3c0] sm:$0xff]
        %v317 = vld [vmem:[%s165 + $0x3c8] sm:$0xff]
        %v318 = vld [vmem:[%s165 + $0x3d0] sm:$0xff]
        %v319 = vld [vmem:[%s165 + $0x3d8] sm:$0xff]
        %v320 = vld [vmem:[%s165 + $0x3e0] sm:$0xff]
        %v321 = vld [vmem:[%s165 + $0x3e8] sm:$0xff]
        %v322 = vld [vmem:[%s165 + $0x3f0] sm:$0xff]
        %v323 = vld [vmem:[%s165 + $0x3f8] sm:$0xff]
        %v324 = vld [vmem:[%s165 + $0x400] sm:$0xff]
        %v325 = vld [vmem:[%s165 + $0x408] sm:$0xff]
        %v326 = vld [vmem:[%s165 + $0x410] sm:$0xff]
        %v327 = vld [vmem:[%s165 + $0x418] sm:$0xff]
        %v328 = vld [vmem:[%s165 + $0x420] sm:$0xff]
        %v329 = vld [vmem:[%s165 + $0x428] sm:$0xff]
        %v330 = vld [vmem:[%s165 + $0x430] sm:$0xff]
        %v331 = vld [vmem:[%s165 + $0x438] sm:$0xff]
        %v332 = vld [vmem:[%s165 + $0x440] sm:$0xff]
        %v333 = vld [vmem:[%s165 + $0x448] sm:$0xff]
        %v334 = vld [vmem:[%s165 + $0x450] sm:$0xff]
        %v335 = vld [vmem:[%s165 + $0x458] sm:$0xff]
        %v336 = vld [vmem:[%s165 + $0x460] sm:$0xff]
        %v337 = vld [vmem:[%s165 + $0x468] sm:$0xff]
        %v338 = vld [vmem:[%s165 + $0x470] sm:$0xff]
        %v339 = vld [vmem:[%s165 + $0x478] sm:$0xff]
        %v340 = vld [vmem:[%s165 + $0x480] sm:$0xff]
        %v341 = vld [vmem:[%s165 + $0x488] sm:$0xff]
        %v342 = vld [vmem:[%s165 + $0x490] sm:$0xff]
        %v343 = vld [vmem:[%s165 + $0x498] sm:$0xff]
        %v344 = vld [vmem:[%s165 + $0x4a0] sm:$0xff]
        %v345 = vld [vmem:[%s165 + $0x4a8] sm:$0xff]
        %v346 = vld [vmem:[%s165 + $0x4b0] sm:$0xff]
        %v347 = vld [vmem:[%s165 + $0x4b8] sm:$0xff]
        %v348 = vld [vmem:[%s165 + $0x4c0] sm:$0xff]
        %v349 = vld [vmem:[%s165 + $0x4c8] sm:$0xff]
        %v350 = vld [vmem:[%s165 + $0x4d0] sm:$0xff]
        %v351 = vld [vmem:[%s165 + $0x4d8] sm:$0xff]
        %v352 = vld [vmem:[%s165 + $0x4e0] sm:$0xff]
        %v353 = vld [vmem:[%s165 + $0x4e8] sm:$0xff]
        %v354 = vld [vmem:[%s165 + $0x4f0] sm:$0xff]
        %v355 = vld [vmem:[%s165 + $0x4f8] sm:$0xff]
        %v356 = vld [vmem:[%s165 + $0x500] sm:$0xff]
        %v357 = vld [vmem:[%s165 + $0x508] sm:$0xff]
        %v358 = vld [vmem:[%s165 + $0x510] sm:$0xff]
        %v359 = vld [vmem:[%s165 + $0x518] sm:$0xff]
        %v360 = vld [vmem:[%s165 + $0x520] sm:$0xff]
        %v361 = vld [vmem:[%s165 + $0x528] sm:$0xff]
        %v362 = vld [vmem:[%s165 + $0x530] sm:$0xff]
        %v363 = vld [vmem:[%s165 + $0x538] sm:$0xff]
        %v364 = vld [vmem:[%s165 + $0x540] sm:$0xff]
        %v365 = vld [vmem:[%s165 + $0x548] sm:$0xff]
        %v366 = vld [vmem:[%s165 + $0x550] sm:$0xff]
        %v367 = vld [vmem:[%s165 + $0x558] sm:$0xff]
        %v368 = vld [vmem:[%s165 + $0x560] sm:$0xff]
        %v369 = vld [vmem:[%s165 + $0x568] sm:$0xff]
        %v370 = vld [vmem:[%s165 + $0x570] sm:$0xff]
        %v371 = vld [vmem:[%s165 + $0x578] sm:$0xff]
        %v372 = vld [vmem:[%s165 + $0x580] sm:$0xff]
        %v373 = vld [vmem:[%s165 + $0x588] sm:$0xff]
        %v374 = vld [vmem:[%s165 + $0x590] sm:$0xff]
        %v375 = vld [vmem:[%s165 + $0x598] sm:$0xff]
        %v376 = vld [vmem:[%s165 + $0x5a0] sm:$0xff]
        %v377 = vld [vmem:[%s165 + $0x5a8] sm:$0xff]
        %v378 = vld [vmem:[%s165 + $0x5b0] sm:$0xff]
        %v379 = vld [vmem:[%s165 + $0x5b8] sm:$0xff]
        %v380 = vld [vmem:[%s165 + $0x5c0] sm:$0xff]
        %v381 = vld [vmem:[%s165 + $0x5c8] sm:$0xff]
        %v382 = vld [vmem:[%s165 + $0x5d0] sm:$0xff]
        %v383 = vld [vmem:[%s165 + $0x5d8] sm:$0xff]
        %v384 = vld [vmem:[%s165 + $0x5e0] sm:$0xff]
        %v385 = vld [vmem:[%s165 + $0x5e8] sm:$0xff]
        %v386 = vld [vmem:[%s165 + $0x5f0] sm:$0xff]
        %v387 = vld [vmem:[%s165 + $0x5f8] sm:$0xff]
        %v388 = vld [vmem:[%s165 + $0x600] sm:$0xff]
        %v389 = vld [vmem:[%s165 + $0x608] sm:$0xff]
        %v390 = vld [vmem:[%s165 + $0x610] sm:$0xff]
        %v391 = vld [vmem:[%s165 + $0x618] sm:$0xff]
        %v392 = vld [vmem:[%s165 + $0x620] sm:$0xff]
        %v393 = vld [vmem:[%s165 + $0x628] sm:$0xff]
        %v394 = vld [vmem:[%s165 + $0x630] sm:$0xff]
        %v395 = vld [vmem:[%s165 + $0x638] sm:$0xff]
        %v396 = vld [vmem:[%s165 + $0x640] sm:$0xff]
        %v397 = vld [vmem:[%s165 + $0x648] sm:$0xff]
        %v398 = vld [vmem:[%s165 + $0x650] sm:$0xff]
        %v399 = vld [vmem:[%s165 + $0x658] sm:$0xff]
        %v400 = vld [vmem:[%s165 + $0x660] sm:$0xff]
        %v401 = vld [vmem:[%s165 + $0x668] sm:$0xff]
        %v402 = vld [vmem:[%s165 + $0x670] sm:$0xff]
        %v403 = vld [vmem:[%s165 + $0x678] sm:$0xff]
        %v404 = vld [vmem:[%s165 + $0x680] sm:$0xff]
        %v405 = vld [vmem:[%s165 + $0x688] sm:$0xff]
        %v406 = vld [vmem:[%s165 + $0x690] sm:$0xff]
        %v407 = vld [vmem:[%s165 + $0x698] sm:$0xff]
        %v408 = vld [vmem:[%s165 + $0x6a0] sm:$0xff]
        %v409 = vld [vmem:[%s165 + $0x6a8] sm:$0xff]
        %v410 = vld [vmem:[%s165 + $0x6b0] sm:$0xff]
        %v411 = vld [vmem:[%s165 + $0x6b8] sm:$0xff]
        %v412 = vld [vmem:[%s165 + $0x6c0] sm:$0xff]
        %v413 = vld [vmem:[%s165 + $0x6c8] sm:$0xff]
        %v414 = vld [vmem:[%s165 + $0x6d0] sm:$0xff]
        %v415 = vld [vmem:[%s165 + $0x6d8] sm:$0xff]
        %v416 = vld [vmem:[%s165 + $0x6e0] sm:$0xff]
        %v417 = vld [vmem:[%s165 + $0x6e8] sm:$0xff]
        %v418 = vld [vmem:[%s165 + $0x6f0] sm:$0xff]
        %v419 = vld [vmem:[%s165 + $0x6f8] sm:$0xff]
        %v420 = vld [vmem:[%s165 + $0x700] sm:$0xff]
        %v421 = vld [vmem:[%s165 + $0x708] sm:$0xff]
        %v422 = vld [vmem:[%s165 + $0x710] sm:$0xff]
        %v423 = vld [vmem:[%s165 + $0x718] sm:$0xff]
        %v424 = vld [vmem:[%s165 + $0x720] sm:$0xff]
        %v425 = vld [vmem:[%s165 + $0x728] sm:$0xff]
        %v426 = vld [vmem:[%s165 + $0x730] sm:$0xff]
        %v427 = vld [vmem:[%s165 + $0x738] sm:$0xff]
        %v428 = vld [vmem:[%s165 + $0x740] sm:$0xff]
        %v429 = vld [vmem:[%s165 + $0x748] sm:$0xff]
        %v430 = vld [vmem:[%s165 + $0x750] sm:$0xff]
        %v431 = vld [vmem:[%s165 + $0x758] sm:$0xff]
        %v432 = vld [vmem:[%s165 + $0x760] sm:$0xff]
        %v433 = vld [vmem:[%s165 + $0x768] sm:$0xff]
        %v434 = vld [vmem:[%s165 + $0x770] sm:$0xff]
        %v435 = vld [vmem:[%s165 + $0x778] sm:$0xff]
        %v436 = vld [vmem:[%s165 + $0x780] sm:$0xff]
        %v437 = vld [vmem:[%s165 + $0x788] sm:$0xff]
        %v438 = vld [vmem:[%s165 + $0x790] sm:$0xff]
        %v439 = vld [vmem:[%s165 + $0x798] sm:$0xff]
        %v440 = vld [vmem:[%s165 + $0x7a0] sm:$0xff]
        %v441 = vld [vmem:[%s165 + $0x7a8] sm:$0xff]
        %v442 = vld [vmem:[%s165 + $0x7b0] sm:$0xff]
        %v443 = vld [vmem:[%s165 + $0x7b8] sm:$0xff]
        %v444 = vld [vmem:[%s165 + $0x7c0] sm:$0xff]
        %v445 = vld [vmem:[%s165 + $0x7c8] sm:$0xff]
        %v446 = vld [vmem:[%s165 + $0x7d0] sm:$0xff]
        %v447 = vld [vmem:[%s165 + $0x7d8] sm:$0xff]
        %v448 = vld [vmem:[%s165 + $0x7e0] sm:$0xff]
        %v449 = vld [vmem:[%s165 + $0x7e8] sm:$0xff]
        %v450 = vld [vmem:[%s165 + $0x7f0] sm:$0xff]
        %v451 = vld [vmem:[%s165 + $0x7f8] sm:$0xff]
        %v452 = vld [vmem:[%s165 + $0x800] sm:$0xff]
        %v453 = vld [vmem:[%s165 + $0x808] sm:$0xff]
        %v454 = vld [vmem:[%s165 + $0x810] sm:$0xff]
        %v455 = vld [vmem:[%s165 + $0x818] sm:$0xff]
        %v456 = vld [vmem:[%s165 + $0x820] sm:$0xff]
        %v457 = vld [vmem:[%s165 + $0x828] sm:$0xff]
        %v458 = vld [vmem:[%s165 + $0x830] sm:$0xff]
        %v459 = vld [vmem:[%s165 + $0x838] sm:$0xff]
        %v460 = vld [vmem:[%s165 + $0x840] sm:$0xff]
        %v461 = vld [vmem:[%s165 + $0x848] sm:$0xff]
        %v462 = vld [vmem:[%s165 + $0x850] sm:$0xff]
        %v463 = vld [vmem:[%s165 + $0x858] sm:$0xff]
        %v464 = vld [vmem:[%s165 + $0x860] sm:$0xff]
        %v465 = vld [vmem:[%s165 + $0x868] sm:$0xff]
        %v466 = vld [vmem:[%s165 + $0x870] sm:$0xff]
        %v467 = vld [vmem:[%s165 + $0x878] sm:$0xff]
        %v468 = vld [vmem:[%s165 + $0x880] sm:$0xff]
        %v469 = vld [vmem:[%s165 + $0x888] sm:$0xff]
        %v470 = vld [vmem:[%s165 + $0x890] sm:$0xff]
        %v471 = vld [vmem:[%s165 + $0x898] sm:$0xff]
        %v472 = vld [vmem:[%s165 + $0x8a0] sm:$0xff]
        %v473 = vld [vmem:[%s165 + $0x8a8] sm:$0xff]
        %v474 = vld [vmem:[%s165 + $0x8b0] sm:$0xff]
        %v475 = vld [vmem:[%s165 + $0x8b8] sm:$0xff]
        %v476 = vld [vmem:[%s165 + $0x8c0] sm:$0xff]
        %v477 = vld [vmem:[%s165 + $0x8c8] sm:$0xff]
        %v478 = vld [vmem:[%s165 + $0x8d0] sm:$0xff]
        %v479 = vld [vmem:[%s165 + $0x8d8] sm:$0xff]
        %v480 = vld [vmem:[%s165 + $0x8e0] sm:$0xff]
        %v481 = vld [vmem:[%s165 + $0x8e8] sm:$0xff]
        %v482 = vld [vmem:[%s165 + $0x8f0] sm:$0xff]
        %v483 = vld [vmem:[%s165 + $0x8f8] sm:$0xff]
        %v484 = vld [vmem:[%s165 + $0x900] sm:$0xff]
        %v485 = vld [vmem:[%s165 + $0x908] sm:$0xff]
        %v486 = vld [vmem:[%s165 + $0x910] sm:$0xff]
        %v487 = vld [vmem:[%s165 + $0x918] sm:$0xff]
        %v488 = vld [vmem:[%s165 + $0x920] sm:$0xff]
        %v489 = vld [vmem:[%s165 + $0x928] sm:$0xff]
        %v490 = vld [vmem:[%s165 + $0x930] sm:$0xff]
        %v491 = vld [vmem:[%s165 + $0x938] sm:$0xff]
        %v492 = vld [vmem:[%s165 + $0x940] sm:$0xff]
        %v493 = vld [vmem:[%s165 + $0x948] sm:$0xff]
        %v494 = vld [vmem:[%s165 + $0x950] sm:$0xff]
        %v495 = vld [vmem:[%s165 + $0x958] sm:$0xff]
        %v496 = vld [vmem:[%s165 + $0x960] sm:$0xff]
        %v497 = vld [vmem:[%s165 + $0x968] sm:$0xff]
        %v498 = vld [vmem:[%s165 + $0x970] sm:$0xff]
        %v499 = vld [vmem:[%s165 + $0x978] sm:$0xff]
        %v500 = vld [vmem:[%s165 + $0x980] sm:$0xff]
        %v501 = vld [vmem:[%s165 + $0x988] sm:$0xff]
        %v502 = vld [vmem:[%s165 + $0x990] sm:$0xff]
        %v503 = vld [vmem:[%s165 + $0x998] sm:$0xff]
        %v504 = vld [vmem:[%s165 + $0x9a0] sm:$0xff]
        %v505 = vld [vmem:[%s165 + $0x9a8] sm:$0xff]
        %v506 = vld [vmem:[%s165 + $0x9b0] sm:$0xff]
        %v507 = vld [vmem:[%s165 + $0x9b8] sm:$0xff]
        %v508 = vld [vmem:[%s165 + $0x9c0] sm:$0xff]
        %v509 = vld [vmem:[%s165 + $0x9c8] sm:$0xff]
        %v510 = vld [vmem:[%s165 + $0x9d0] sm:$0xff]
        %v511 = vld [vmem:[%s165 + $0x9d8] sm:$0xff]
        %v512 = vld [vmem:[%s165 + $0x9e0] sm:$0xff]
        %v513 = vld [vmem:[%s165 + $0x9e8] sm:$0xff]
        %v514 = vld [vmem:[%s165 + $0x9f0] sm:$0xff]
        %v515 = vld [vmem:[%s165 + $0x9f8] sm:$0xff]
        %v516 = vld [vmem:[%s165 + $0xa00] sm:$0xff]
        %v517 = vld [vmem:[%s165 + $0xa08] sm:$0xff]
        %v518 = vld [vmem:[%s165 + $0xa10] sm:$0xff]
        %v519 = vld [vmem:[%s165 + $0xa18] sm:$0xff]
        %v520 = vld [vmem:[%s165 + $0xa20] sm:$0xff]
        %v521 = vld [vmem:[%s165 + $0xa28] sm:$0xff]
        %v522 = vld [vmem:[%s165 + $0xa30] sm:$0xff]
        %v523 = vld [vmem:[%s165 + $0xa38] sm:$0xff]
        %v524 = vld [vmem:[%s165 + $0xa40] sm:$0xff]
        %v525 = vld [vmem:[%s165 + $0xa48] sm:$0xff]
        %v526 = vld [vmem:[%s165 + $0xa50] sm:$0xff]
        %v527 = vld [vmem:[%s165 + $0xa58] sm:$0xff]
        %v528 = vld [vmem:[%s165 + $0xa60] sm:$0xff]
        %v529 = vld [vmem:[%s165 + $0xa68] sm:$0xff]
        %v530 = vld [vmem:[%s165 + $0xa70] sm:$0xff]
        %v531 = vld [vmem:[%s165 + $0xa78] sm:$0xff]
        %v532 = vld [vmem:[%s165 + $0xa80] sm:$0xff]
        %v533 = vld [vmem:[%s165 + $0xa88] sm:$0xff]
        %v534 = vld [vmem:[%s165 + $0xa90] sm:$0xff]
        %v535 = vld [vmem:[%s165 + $0xa98] sm:$0xff]
        %v536 = vld [vmem:[%s165 + $0xaa0] sm:$0xff]
        %v537 = vld [vmem:[%s165 + $0xaa8] sm:$0xff]
        %v538 = vld [vmem:[%s165 + $0xab0] sm:$0xff]
        %v539 = vld [vmem:[%s165 + $0xab8] sm:$0xff]
        %v540 = vld [vmem:[%s165 + $0xac0] sm:$0xff]
        %v541 = vld [vmem:[%s165 + $0xac8] sm:$0xff]
        %v542 = vld [vmem:[%s165 + $0xad0] sm:$0xff]
        %v543 = vld [vmem:[%s165 + $0xad8] sm:$0xff]
        %v544 = vld [vmem:[%s165 + $0xae0] sm:$0xff]
        %v545 = vld [vmem:[%s165 + $0xae8] sm:$0xff]
        %v546 = vld [vmem:[%s165 + $0xaf0] sm:$0xff]
        %v547 = vld [vmem:[%s165 + $0xaf8] sm:$0xff]
        %v548 = vld [vmem:[%s165 + $0xb00] sm:$0xff]
        %v549 = vld [vmem:[%s165 + $0xb08] sm:$0xff]
        %v550 = vld [vmem:[%s165 + $0xb10] sm:$0xff]
        %v551 = vld [vmem:[%s165 + $0xb18] sm:$0xff]
        %v552 = vld [vmem:[%s165 + $0xb20] sm:$0xff]
        %v553 = vld [vmem:[%s165 + $0xb28] sm:$0xff]
        %v554 = vld [vmem:[%s165 + $0xb30] sm:$0xff]
        %v555 = vld [vmem:[%s165 + $0xb38] sm:$0xff]
        %v556 = vld [vmem:[%s165 + $0xb40] sm:$0xff]
        %v557 = vld [vmem:[%s165 + $0xb48] sm:$0xff]
        %v558 = vld [vmem:[%s165 + $0xb50] sm:$0xff]
        %v559 = vld [vmem:[%s165 + $0xb58] sm:$0xff]
        %v560 = vld [vmem:[%s165 + $0xb60] sm:$0xff]
        %v561 = vld [vmem:[%s165 + $0xb68] sm:$0xff]
        %v562 = vld [vmem:[%s165 + $0xb70] sm:$0xff]
        %v563 = vld [vmem:[%s165 + $0xb78] sm:$0xff]
        %v564 = vld [vmem:[%s165 + $0xb80] sm:$0xff]
        %v565 = vld [vmem:[%s165 + $0xb88] sm:$0xff]
        %v566 = vld [vmem:[%s165 + $0xb90] sm:$0xff]
        %v567 = vld [vmem:[%s165 + $0xb98] sm:$0xff]
        %v568 = vld [vmem:[%s165 + $0xba0] sm:$0xff]
        %v569 = vld [vmem:[%s165 + $0xba8] sm:$0xff]
        %v570 = vld [vmem:[%s165 + $0xbb0] sm:$0xff]
        %v571 = vld [vmem:[%s165 + $0xbb8] sm:$0xff]
        %v572 = vld [vmem:[%s165 + $0xbc0] sm:$0xff]
        %v573 = vld [vmem:[%s165 + $0xbc8] sm:$0xff]
        %v574 = vld [vmem:[%s165 + $0xbd0] sm:$0xff]
        %v575 = vld [vmem:[%s165 + $0xbd8] sm:$0xff]
        %v576 = vld [vmem:[%s165 + $0xbe0] sm:$0xff]
        %v577 = vld [vmem:[%s165 + $0xbe8] sm:$0xff]
        %v578 = vld [vmem:[%s165 + $0xbf0] sm:$0xff]
        %v579 = vld [vmem:[%s165 + $0xbf8] sm:$0xff]
        %v580 = vld [vmem:[%s165 + $0xc00] sm:$0xff]
        %v581 = vld [vmem:[%s165 + $0xc08] sm:$0xff]
        %v582 = vld [vmem:[%s165 + $0xc10] sm:$0xff]
        %v583 = vld [vmem:[%s165 + $0xc18] sm:$0xff]
        %v584 = vld [vmem:[%s165 + $0xc20] sm:$0xff]
        %v585 = vld [vmem:[%s165 + $0xc28] sm:$0xff]
        %v586 = vld [vmem:[%s165 + $0xc30] sm:$0xff]
        %v587 = vld [vmem:[%s165 + $0xc38] sm:$0xff]
        %v588 = vld [vmem:[%s165 + $0xc40] sm:$0xff]
        %v589 = vld [vmem:[%s165 + $0xc48] sm:$0xff]
        %v590 = vld [vmem:[%s165 + $0xc50] sm:$0xff]
        %v591 = vld [vmem:[%s165 + $0xc58] sm:$0xff]
        %v592 = vld [vmem:[%s165 + $0xc60] sm:$0xff]
        %v593 = vld [vmem:[%s165 + $0xc68] sm:$0xff]
        %v594 = vld [vmem:[%s165 + $0xc70] sm:$0xff]
        %v595 = vld [vmem:[%s165 + $0xc78] sm:$0xff]
        %v596 = vld [vmem:[%s165 + $0xc80] sm:$0xff]
        %v597 = vld [vmem:[%s165 + $0xc88] sm:$0xff]
        %v598 = vld [vmem:[%s165 + $0xc90] sm:$0xff]
        %v599 = vld [vmem:[%s165 + $0xc98] sm:$0xff]
        %v600 = vld [vmem:[%s165 + $0xca0] sm:$0xff]
        %v601 = vld [vmem:[%s165 + $0xca8] sm:$0xff]
        %v602 = vld [vmem:[%s165 + $0xcb0] sm:$0xff]
        %v603 = vld [vmem:[%s165 + $0xcb8] sm:$0xff]
        %v604 = vld [vmem:[%s165 + $0xcc0] sm:$0xff]
        %v605 = vld [vmem:[%s165 + $0xcc8] sm:$0xff]
        %v606 = vld [vmem:[%s165 + $0xcd0] sm:$0xff]
        %v607 = vld [vmem:[%s165 + $0xcd8] sm:$0xff]
        %v608 = vld [vmem:[%s165 + $0xce0] sm:$0xff]
        %v609 = vld [vmem:[%s165 + $0xce8] sm:$0xff]
        %v610 = vld [vmem:[%s165 + $0xcf0] sm:$0xff]
        %v611 = vld [vmem:[%s165 + $0xcf8] sm:$0xff]
        %v612 = vld [vmem:[%s165 + $0xd00] sm:$0xff]
        %v613 = vld [vmem:[%s165 + $0xd08] sm:$0xff]
        %v614 = vld [vmem:[%s165 + $0xd10] sm:$0xff]
        %v615 = vld [vmem:[%s165 + $0xd18] sm:$0xff]
        %v616 = vld [vmem:[%s165 + $0xd20] sm:$0xff]
        %v617 = vld [vmem:[%s165 + $0xd28] sm:$0xff]
        %v618 = vld [vmem:[%s165 + $0xd30] sm:$0xff]
        %v619 = vld [vmem:[%s165 + $0xd38] sm:$0xff]
        %v620 = vld [vmem:[%s165 + $0xd40] sm:$0xff]
        %v621 = vld [vmem:[%s165 + $0xd48] sm:$0xff]
        %v622 = vld [vmem:[%s165 + $0xd50] sm:$0xff]
        %v623 = vld [vmem:[%s165 + $0xd58] sm:$0xff]
        %v624 = vld [vmem:[%s165 + $0xd60] sm:$0xff]
        %v625 = vld [vmem:[%s165 + $0xd68] sm:$0xff]
        %v626 = vld [vmem:[%s165 + $0xd70] sm:$0xff]
        %v627 = vld [vmem:[%s165 + $0xd78] sm:$0xff]
        %v628 = vld [vmem:[%s165 + $0xd80] sm:$0xff]
        %v629 = vld [vmem:[%s165 + $0xd88] sm:$0xff]
        %v630 = vld [vmem:[%s165 + $0xd90] sm:$0xff]
        %v631 = vld [vmem:[%s165 + $0xd98] sm:$0xff]
        %v632 = vld [vmem:[%s165 + $0xda0] sm:$0xff]
        %v633 = vld [vmem:[%s165 + $0xda8] sm:$0xff]
        %v634 = vld [vmem:[%s165 + $0xdb0] sm:$0xff]
        %v635 = vld [vmem:[%s165 + $0xdb8] sm:$0xff]
        %v636 = vld [vmem:[%s165 + $0xdc0] sm:$0xff]
        %v637 = vld [vmem:[%s165 + $0xdc8] sm:$0xff]
        %v638 = vld [vmem:[%s165 + $0xdd0] sm:$0xff]
        %v639 = vld [vmem:[%s165 + $0xdd8] sm:$0xff]
        %v640 = vld [vmem:[%s165 + $0xde0] sm:$0xff]
        %v641 = vld [vmem:[%s165 + $0xde8] sm:$0xff]
        %v642 = vld [vmem:[%s165 + $0xdf0] sm:$0xff]
        %v643 = vld [vmem:[%s165 + $0xdf8] sm:$0xff]
        %v644 = vld [vmem:[%s165 + $0xe00] sm:$0xff]
        %v645 = vld [vmem:[%s165 + $0xe08] sm:$0xff]
        %v646 = vld [vmem:[%s165 + $0xe10] sm:$0xff]
        %v647 = vld [vmem:[%s165 + $0xe18] sm:$0xff]
        %v648 = vld [vmem:[%s165 + $0xe20] sm:$0xff]
        %v649 = vld [vmem:[%s165 + $0xe28] sm:$0xff]
        %v650 = vld [vmem:[%s165 + $0xe30] sm:$0xff]
        %v651 = vld [vmem:[%s165 + $0xe38] sm:$0xff]
        %v652 = vld [vmem:[%s165 + $0xe40] sm:$0xff]
        %v653 = vld [vmem:[%s165 + $0xe48] sm:$0xff]
        %v654 = vld [vmem:[%s165 + $0xe50] sm:$0xff]
        %v655 = vld [vmem:[%s165 + $0xe58] sm:$0xff]
        %v656 = vld [vmem:[%s165 + $0xe60] sm:$0xff]
        %v657 = vld [vmem:[%s165 + $0xe68] sm:$0xff]
        %v658 = vld [vmem:[%s165 + $0xe70] sm:$0xff]
        %v659 = vld [vmem:[%s165 + $0xe78] sm:$0xff]
        %v660 = vld [vmem:[%s165 + $0xe80] sm:$0xff]
        %v661 = vld [vmem:[%s165 + $0xe88] sm:$0xff]
        %v662 = vld [vmem:[%s165 + $0xe90] sm:$0xff]
        %v663 = vld [vmem:[%s165 + $0xe98] sm:$0xff]
        %v664 = vld [vmem:[%s165 + $0xea0] sm:$0xff]
        %v665 = vld [vmem:[%s165 + $0xea8] sm:$0xff]
        %v666 = vld [vmem:[%s165 + $0xeb0] sm:$0xff]
        %v667 = vld [vmem:[%s165 + $0xeb8] sm:$0xff]
        %v668 = vld [vmem:[%s165 + $0xec0] sm:$0xff]
        %v669 = vld [vmem:[%s165 + $0xec8] sm:$0xff]
        %v670 = vld [vmem:[%s165 + $0xed0] sm:$0xff]
        %v671 = vld [vmem:[%s165 + $0xed8] sm:$0xff]
        %v672 = vld [vmem:[%s165 + $0xee0] sm:$0xff]
        %v673 = vld [vmem:[%s165 + $0xee8] sm:$0xff]
        %v674 = vld [vmem:[%s165 + $0xef0] sm:$0xff]
        %v675 = vld [vmem:[%s165 + $0xef8] sm:$0xff]
        %v676 = vld [vmem:[%s165 + $0xf00] sm:$0xff]
        %v677 = vld [vmem:[%s165 + $0xf08] sm:$0xff]
        %v678 = vld [vmem:[%s165 + $0xf10] sm:$0xff]
        %v679 = vld [vmem:[%s165 + $0xf18] sm:$0xff]
        %v680 = vld [vmem:[%s165 + $0xf20] sm:$0xff]
        %v681 = vld [vmem:[%s165 + $0xf28] sm:$0xff]
        %v682 = vld [vmem:[%s165 + $0xf30] sm:$0xff]
        %v683 = vld [vmem:[%s165 + $0xf38] sm:$0xff]
        %v684 = vld [vmem:[%s165 + $0xf40] sm:$0xff]
        %v685 = vld [vmem:[%s165 + $0xf48] sm:$0xff]
        %v686 = vld [vmem:[%s165 + $0xf50] sm:$0xff]
        %v687 = vld [vmem:[%s165 + $0xf58] sm:$0xff]
        %v688 = vld [vmem:[%s165 + $0xf60] sm:$0xff]
        %v689 = vld [vmem:[%s165 + $0xf68] sm:$0xff]
        %v690 = vld [vmem:[%s165 + $0xf70] sm:$0xff]
        %v691 = vld [vmem:[%s165 + $0xf78] sm:$0xff]
        %v692 = vld [vmem:[%s165 + $0xf80] sm:$0xff]
        %v693 = vld [vmem:[%s165 + $0xf88] sm:$0xff]
        %v694 = vld [vmem:[%s165 + $0xf90] sm:$0xff]
        %v695 = vld [vmem:[%s165 + $0xf98] sm:$0xff]
        %v696 = vld [vmem:[%s165 + $0xfa0] sm:$0xff]
        %v697 = vld [vmem:[%s165 + $0xfa8] sm:$0xff]
        %v698 = vld [vmem:[%s165 + $0xfb0] sm:$0xff]
        %v699 = vld [vmem:[%s165 + $0xfb8] sm:$0xff]
        %v700 = vld [vmem:[%s165 + $0xfc0] sm:$0xff]
        %v701 = vld [vmem:[%s165 + $0xfc8] sm:$0xff]
        %v702 = vld [vmem:[%s165 + $0xfd0] sm:$0xff]
        %v703 = vld [vmem:[%s165 + $0xfd8] sm:$0xff]
        %v704 = vld [vmem:[%s165 + $0xfe0] sm:$0xff]
        %v705 = vld [vmem:[%s165 + $0xfe8] sm:$0xff]
        %v706 = vld [vmem:[%s165 + $0xff0] sm:$0xff]
        %v707 = vld [vmem:[%s165 + $0xff8] sm:$0xff]
        %v708 = vld [vmem:[%s165 + $0x1000] sm:$0xff]
        %v709 = vld [vmem:[%s165 + $0x1008] sm:$0xff]
        %v710 = vld [vmem:[%s165 + $0x1010] sm:$0xff]
        %v711 = vld [vmem:[%s165 + $0x1018] sm:$0xff]
        %v712 = vld [vmem:[%s165 + $0x1020] sm:$0xff]
        %v713 = vld [vmem:[%s165 + $0x1028] sm:$0xff]
        %v714 = vld [vmem:[%s165 + $0x1030] sm:$0xff]
        %v715 = vld [vmem:[%s165 + $0x1038] sm:$0xff]
        %v716 = vld [vmem:[%s165 + $0x1040] sm:$0xff]
        %v717 = vld [vmem:[%s165 + $0x1048] sm:$0xff]
        %v718 = vld [vmem:[%s165 + $0x1050] sm:$0xff]
        %v719 = vld [vmem:[%s165 + $0x1058] sm:$0xff]
        %v720 = vld [vmem:[%s165 + $0x1060] sm:$0xff]
        %v721 = vld [vmem:[%s165 + $0x1068] sm:$0xff]
        %v722 = vld [vmem:[%s165 + $0x1070] sm:$0xff]
        %v723 = vld [vmem:[%s165 + $0x1078] sm:$0xff]
        %v724 = vld [vmem:[%s165 + $0x1080] sm:$0xff]
        %v725 = vld [vmem:[%s165 + $0x1088] sm:$0xff]
        %v726 = vld [vmem:[%s165 + $0x1090] sm:$0xff]
        %v727 = vld [vmem:[%s165 + $0x1098] sm:$0xff]
        %v728 = vld [vmem:[%s165 + $0x10a0] sm:$0xff]
        %v729 = vld [vmem:[%s165 + $0x10a8] sm:$0xff]
        %v730 = vld [vmem:[%s165 + $0x10b0] sm:$0xff]
        %v731 = vld [vmem:[%s165 + $0x10b8] sm:$0xff]
        %v732 = vld [vmem:[%s165 + $0x10c0] sm:$0xff]
        %v733 = vld [vmem:[%s165 + $0x10c8] sm:$0xff]
        %v734 = vld [vmem:[%s165 + $0x10d0] sm:$0xff]
        %v735 = vld [vmem:[%s165 + $0x10d8] sm:$0xff]
        %v736 = vld [vmem:[%s165 + $0x10e0] sm:$0xff]
        %v737 = vld [vmem:[%s165 + $0x10e8] sm:$0xff]
        %v738 = vld [vmem:[%s165 + $0x10f0] sm:$0xff]
        %v739 = vld [vmem:[%s165 + $0x10f8] sm:$0xff]
        %v740 = vld [vmem:[%s165 + $0x1100] sm:$0xff]
        %v741 = vld [vmem:[%s165 + $0x1108] sm:$0xff]
        %v742 = vld [vmem:[%s165 + $0x1110] sm:$0xff]
        %v743 = vld [vmem:[%s165 + $0x1118] sm:$0xff]
        %v744 = vld [vmem:[%s165 + $0x1120] sm:$0xff]
        %v745 = vld [vmem:[%s165 + $0x1128] sm:$0xff]
        %v746 = vld [vmem:[%s165 + $0x1130] sm:$0xff]
        %v747 = vld [vmem:[%s165 + $0x1138] sm:$0xff]
        %v748 = vld [vmem:[%s165 + $0x1140] sm:$0xff]
        %v749 = vld [vmem:[%s165 + $0x1148] sm:$0xff]
        %v750 = vld [vmem:[%s165 + $0x1150] sm:$0xff]
        %v751 = vld [vmem:[%s165 + $0x1158] sm:$0xff]
        %v752 = vld [vmem:[%s165 + $0x1160] sm:$0xff]
        %v753 = vld [vmem:[%s165 + $0x1168] sm:$0xff]
        %v754 = vld [vmem:[%s165 + $0x1170] sm:$0xff]
        %v755 = vld [vmem:[%s165 + $0x1178] sm:$0xff]
        %v756 = vld [vmem:[%s165 + $0x1180] sm:$0xff]
        %v757 = vld [vmem:[%s165 + $0x1188] sm:$0xff]
        %v758 = vld [vmem:[%s165 + $0x1190] sm:$0xff]
        %v759 = vld [vmem:[%s165 + $0x1198] sm:$0xff]
        %v760 = vld [vmem:[%s165 + $0x11a0] sm:$0xff]
        %v761 = vld [vmem:[%s165 + $0x11a8] sm:$0xff]
        %v762 = vld [vmem:[%s165 + $0x11b0] sm:$0xff]
        %v763 = vld [vmem:[%s165 + $0x11b8] sm:$0xff]
        %v764 = vld [vmem:[%s165 + $0x11c0] sm:$0xff]
        %v765 = vld [vmem:[%s165 + $0x11c8] sm:$0xff]
        %v766 = vld [vmem:[%s165 + $0x11d0] sm:$0xff]
        %v767 = vld [vmem:[%s165 + $0x11d8] sm:$0xff]
        %v768 = vld [vmem:[%s165 + $0x11e0] sm:$0xff]
        %v769 = vld [vmem:[%s165 + $0x11e8] sm:$0xff]
        %v770 = vld [vmem:[%s165 + $0x11f0] sm:$0xff]
        %v771 = vld [vmem:[%s165 + $0x11f8] sm:$0xff]
        %v772 = vld [vmem:[%s1] sm:$0xf]
        %v773 = vld [vmem:[%s1 + $0x4] sm:$0xf]
        %v774 = vld [vmem:[%s1 + $0x8] sm:$0xf]
        %v775 = vld [vmem:[%s1 + $0xc] sm:$0xf]
        %v776 = vld [vmem:[%s1 + $0x10] sm:$0xf]
        %v777 = vld [vmem:[%s1 + $0x14] sm:$0xf]
        %v778 = vld [vmem:[%s1 + $0x18] sm:$0xf]
        %v779 = vld [vmem:[%s1 + $0x1c] sm:$0xf]
        %v780 = vld [vmem:[%s1 + $0x20] sm:$0xf]
        %v781 = vld [vmem:[%s1 + $0x24] sm:$0xf]
        %v782 = vld [vmem:[%s1 + $0x28] sm:$0xf]
        %v783 = vld [vmem:[%s1 + $0x2c] sm:$0xf]
        %v784 = vld [vmem:[%s1 + $0x30] sm:$0xf]
        %v785 = vld [vmem:[%s1 + $0x34] sm:$0xf]
        %v786 = vld [vmem:[%s1 + $0x38] sm:$0xf]
        %v787 = vld [vmem:[%s1 + $0x3c] sm:$0xf]
        %v788 = vld [vmem:[%s1 + $0x40] sm:$0xf]
        %v789 = vld [vmem:[%s1 + $0x44] sm:$0xf]
        %v790 = vld [vmem:[%s1 + $0x48] sm:$0xf]
        %v791 = vld [vmem:[%s1 + $0x4c] sm:$0xf]
        %v792 = vld [vmem:[%s1 + $0x50] sm:$0xf]
        %v793 = vld [vmem:[%s1 + $0x54] sm:$0xf]
        %v794 = vld [vmem:[%s1 + $0x58] sm:$0xf]
        %v795 = vld [vmem:[%s1 + $0x5c] sm:$0xf]
        %v796 = vld [vmem:[%s1 + $0x60] sm:$0xf]
        %v797 = vld [vmem:[%s1 + $0x64] sm:$0xf]
        %v798 = vld [vmem:[%s1 + $0x68] sm:$0xf]
        %v799 = vld [vmem:[%s1 + $0x6c] sm:$0xf]
        %v800 = vld [vmem:[%s1 + $0x70] sm:$0xf]
        %v801 = vld [vmem:[%s1 + $0x74] sm:$0xf]
        %v802 = vld [vmem:[%s1 + $0x78] sm:$0xf]
        %v803 = vld [vmem:[%s1 + $0x7c] sm:$0xf]
        %v804 = vld [vmem:[%s1 + $0x80] sm:$0xf]
        %v805 = vld [vmem:[%s1 + $0x84] sm:$0xf]
        %v806 = vld [vmem:[%s1 + $0x88] sm:$0xf]
        %v807 = vld [vmem:[%s1 + $0x8c] sm:$0xf]
        %v808 = vld [vmem:[%s1 + $0x90] sm:$0xf]
        %v809 = vld [vmem:[%s1 + $0x94] sm:$0xf]
        %v810 = vld [vmem:[%s1 + $0x98] sm:$0xf]
        %v811 = vld [vmem:[%s1 + $0x9c] sm:$0xf]
        %v812 = vld [vmem:[%s1 + $0xa0] sm:$0xf]
        %v813 = vld [vmem:[%s1 + $0xa4] sm:$0xf]
        %v814 = vld [vmem:[%s1 + $0xa8] sm:$0xf]
        %v815 = vld [vmem:[%s1 + $0xac] sm:$0xf]
        %v816 = vld [vmem:[%s1 + $0xb0] sm:$0xf]
        %v817 = vld [vmem:[%s1 + $0xb4] sm:$0xf]
        %v818 = vld [vmem:[%s1 + $0xb8] sm:$0xf]
        %v819 = vld [vmem:[%s1 + $0xbc] sm:$0xf]
        %v820 = vld [vmem:[%s1 + $0xc0] sm:$0xf]
        %v821 = vld [vmem:[%s1 + $0xc4] sm:$0xf]
        %v822 = vld [vmem:[%s1 + $0xc8] sm:$0xf]
        %v823 = vld [vmem:[%s1 + $0xcc] sm:$0xf]
        %v824 = vld [vmem:[%s1 + $0xd0] sm:$0xf]
        %v825 = vld [vmem:[%s1 + $0xd4] sm:$0xf]
        %v826 = vld [vmem:[%s1 + $0xd8] sm:$0xf]
        %v827 = vld [vmem:[%s1 + $0xdc] sm:$0xf]
        %v828 = vld [vmem:[%s1 + $0xe0] sm:$0xf]
        %v829 = vld [vmem:[%s1 + $0xe4] sm:$0xf]
        %v830 = vld [vmem:[%s1 + $0xe8] sm:$0xf]
        %v831 = vld [vmem:[%s1 + $0xec] sm:$0xf]
        %v832 = vld [vmem:[%s1 + $0xf0] sm:$0xf]
        %v833 = vld [vmem:[%s1 + $0xf4] sm:$0xf]
        %v834 = vld [vmem:[%s1 + $0xf8] sm:$0xf]
        %v835 = vld [vmem:[%s1 + $0xfc] sm:$0xf]
        %v836 = vld [vmem:[%s1 + $0x100] sm:$0xf]
        %v837 = vld [vmem:[%s1 + $0x104] sm:$0xf]
        %v838 = vld [vmem:[%s1 + $0x108] sm:$0xf]
        %v839 = vld [vmem:[%s1 + $0x10c] sm:$0xf]
        %v840 = vld [vmem:[%s1 + $0x110] sm:$0xf]
        %v841 = vld [vmem:[%s1 + $0x114] sm:$0xf]
        %v842 = vld [vmem:[%s1 + $0x118] sm:$0xf]
        %v843 = vld [vmem:[%s1 + $0x11c] sm:$0xf]
        %v844 = vld [vmem:[%s1 + $0x120] sm:$0xf]
        %v845 = vld [vmem:[%s1 + $0x124] sm:$0xf]
        %v846 = vld [vmem:[%s1 + $0x128] sm:$0xf]
        %v847 = vld [vmem:[%s1 + $0x12c] sm:$0xf]
        %v848 = vld [vmem:[%s1 + $0x130] sm:$0xf]
        %v849 = vld [vmem:[%s1 + $0x134] sm:$0xf]
        %v850 = vld [vmem:[%s1 + $0x138] sm:$0xf]
        %v851 = vld [vmem:[%s1 + $0x13c] sm:$0xf]
        %v852 = vld [vmem:[%s1 + $0x140] sm:$0xf]
        %v853 = vld [vmem:[%s1 + $0x144] sm:$0xf]
        %v854 = vld [vmem:[%s1 + $0x148] sm:$0xf]
        %v855 = vld [vmem:[%s1 + $0x14c] sm:$0xf]
        %v856 = vld [vmem:[%s1 + $0x150] sm:$0xf]
        %v857 = vld [vmem:[%s1 + $0x154] sm:$0xf]
        %v858 = vld [vmem:[%s1 + $0x158] sm:$0xf]
        %v859 = vld [vmem:[%s1 + $0x15c] sm:$0xf]
        %v860 = vld [vmem:[%s1 + $0x160] sm:$0xf]
        %v861 = vld [vmem:[%s1 + $0x164] sm:$0xf]
        %v862 = vld [vmem:[%s1 + $0x168] sm:$0xf]
        %v863 = vld [vmem:[%s1 + $0x16c] sm:$0xf]
        %v864 = vld [vmem:[%s1 + $0x170] sm:$0xf]
        %v865 = vld [vmem:[%s1 + $0x174] sm:$0xf]
        %v866 = vld [vmem:[%s1 + $0x178] sm:$0xf]
        %v867 = vld [vmem:[%s1 + $0x17c] sm:$0xf]
        %v868 = vld [vmem:[%s1 + $0x180] sm:$0xf]
        %v869 = vld [vmem:[%s1 + $0x184] sm:$0xf]
        %v870 = vld [vmem:[%s1 + $0x188] sm:$0xf]
        %v871 = vld [vmem:[%s1 + $0x18c] sm:$0xf]
        %v872 = vld [vmem:[%s1 + $0x190] sm:$0xf]
        %v873 = vld [vmem:[%s1 + $0x194] sm:$0xf]
        %v874 = vld [vmem:[%s1 + $0x198] sm:$0xf]
        %v875 = vld [vmem:[%s1 + $0x19c] sm:$0xf]
        %v876 = vld [vmem:[%s1 + $0x1a0] sm:$0xf]
        %v877 = vld [vmem:[%s1 + $0x1a4] sm:$0xf]
        %v878 = vld [vmem:[%s1 + $0x1a8] sm:$0xf]
        %v879 = vld [vmem:[%s1 + $0x1ac] sm:$0xf]
        %v880 = vld [vmem:[%s1 + $0x1b0] sm:$0xf]
        %v881 = vld [vmem:[%s1 + $0x1b4] sm:$0xf]
        %v882 = vld [vmem:[%s1 + $0x1b8] sm:$0xf]
        %v883 = vld [vmem:[%s1 + $0x1bc] sm:$0xf]
        %v884 = vld [vmem:[%s1 + $0x1c0] sm:$0xf]
        %v885 = vld [vmem:[%s1 + $0x1c4] sm:$0xf]
        %v886 = vld [vmem:[%s1 + $0x1c8] sm:$0xf]
        %v887 = vld [vmem:[%s1 + $0x1cc] sm:$0xf]
        %v888 = vld [vmem:[%s1 + $0x1d0] sm:$0xf]
        %v889 = vld [vmem:[%s1 + $0x1d4] sm:$0xf]
        %v890 = vld [vmem:[%s1 + $0x1d8] sm:$0xf]
        %v891 = vld [vmem:[%s1 + $0x1dc] sm:$0xf]
        %v892 = vld [vmem:[%s1 + $0x1e0] sm:$0xf]
        %v893 = vld [vmem:[%s1 + $0x1e4] sm:$0xf]
        %v894 = vld [vmem:[%s1 + $0x1e8] sm:$0xf]
        %v895 = vld [vmem:[%s1 + $0x1ec] sm:$0xf]
        %v896 = vld [vmem:[%s1 + $0x1f0] sm:$0xf]
        %v897 = vld [vmem:[%s1 + $0x1f4] sm:$0xf]
        %v898 = vld [vmem:[%s1 + $0x1f8] sm:$0xf]
        %v899 = vld [vmem:[%s1 + $0x1fc] sm:$0xf]
        %v900 = vld [vmem:[%s1 + $0x200] sm:$0xf]
        %v901 = vld [vmem:[%s1 + $0x204] sm:$0xf]
        %v902 = vld [vmem:[%s1 + $0x208] sm:$0xf]
        %v903 = vld [vmem:[%s1 + $0x20c] sm:$0xf]
        %v904 = vld [vmem:[%s1 + $0x210] sm:$0xf]
        %v905 = vld [vmem:[%s1 + $0x214] sm:$0xf]
        %v906 = vld [vmem:[%s1 + $0x218] sm:$0xf]
        %v907 = vld [vmem:[%s1 + $0x21c] sm:$0xf]
        %v908 = vld [vmem:[%s1 + $0x220] sm:$0xf]
        %v909 = vld [vmem:[%s1 + $0x224] sm:$0xf]
        %v910 = vld [vmem:[%s1 + $0x228] sm:$0xf]
        %v911 = vld [vmem:[%s1 + $0x22c] sm:$0xf]
        %v912 = vld [vmem:[%s1 + $0x230] sm:$0xf]
        %v913 = vld [vmem:[%s1 + $0x234] sm:$0xf]
        %v914 = vld [vmem:[%s1 + $0x238] sm:$0xf]
        %v915 = vld [vmem:[%s1 + $0x23c] sm:$0xf]
        %v916 = vld [vmem:[%s1 + $0x240] sm:$0xf]
        %v917 = vld [vmem:[%s1 + $0x244] sm:$0xf]
        %v918 = vld [vmem:[%s1 + $0x248] sm:$0xf]
        %v919 = vld [vmem:[%s1 + $0x24c] sm:$0xf]
        %v920 = vld [vmem:[%s1 + $0x250] sm:$0xf]
        %v921 = vld [vmem:[%s1 + $0x254] sm:$0xf]
        %v922 = vld [vmem:[%s1 + $0x258] sm:$0xf]
        %v923 = vld [vmem:[%s1 + $0x25c] sm:$0xf]
        %v924 = vld [vmem:[%s1 + $0x260] sm:$0xf]
        %v925 = vld [vmem:[%s1 + $0x264] sm:$0xf]
        %v926 = vld [vmem:[%s1 + $0x268] sm:$0xf]
        %v927 = vld [vmem:[%s1 + $0x26c] sm:$0xf]
        %v928 = vld [vmem:[%s1 + $0x270] sm:$0xf]
        %v929 = vld [vmem:[%s1 + $0x274] sm:$0xf]
        %v930 = vld [vmem:[%s1 + $0x278] sm:$0xf]
        %v931 = vld [vmem:[%s1 + $0x27c] sm:$0xf]
        %v932 = vld [vmem:[%s1 + $0x280] sm:$0xf]
        %v933 = vld [vmem:[%s1 + $0x284] sm:$0xf]
        %v934 = vld [vmem:[%s1 + $0x288] sm:$0xf]
        %v935 = vld [vmem:[%s1 + $0x28c] sm:$0xf]
        %v936 = vld [vmem:[%s1 + $0x290] sm:$0xf]
        %v937 = vld [vmem:[%s1 + $0x294] sm:$0xf]
        %v938 = vld [vmem:[%s1 + $0x298] sm:$0xf]
        %v939 = vld [vmem:[%s1 + $0x29c] sm:$0xf]
        %v940 = vld [vmem:[%s1 + $0x2a0] sm:$0xf]
        %v941 = vld [vmem:[%s1 + $0x2a4] sm:$0xf]
        %v942 = vld [vmem:[%s1 + $0x2a8] sm:$0xf]
        %v943 = vld [vmem:[%s1 + $0x2ac] sm:$0xf]
        %v944 = vld [vmem:[%s1 + $0x2b0] sm:$0xf]
        %v945 = vld [vmem:[%s1 + $0x2b4] sm:$0xf]
        %v946 = vld [vmem:[%s1 + $0x2b8] sm:$0xf]
        %v947 = vld [vmem:[%s1 + $0x2bc] sm:$0xf]
        %v948 = vld [vmem:[%s1 + $0x2c0] sm:$0xf]
        %v949 = vld [vmem:[%s1 + $0x2c4] sm:$0xf]
        %v950 = vld [vmem:[%s1 + $0x2c8] sm:$0xf]
        %v951 = vld [vmem:[%s1 + $0x2cc] sm:$0xf]
        %v952 = vld [vmem:[%s1 + $0x2d0] sm:$0xf]
        %v953 = vld [vmem:[%s1 + $0x2d4] sm:$0xf]
        %v954 = vld [vmem:[%s1 + $0x2d8] sm:$0xf]
        %v955 = vld [vmem:[%s1 + $0x2dc] sm:$0xf]
        %v956 = vld [vmem:[%s1 + $0x2e0] sm:$0xf]
        %v957 = vld [vmem:[%s1 + $0x2e4] sm:$0xf]
        %v958 = vld [vmem:[%s1 + $0x2e8] sm:$0xf]
        %v959 = vld [vmem:[%s1 + $0x2ec] sm:$0xf]
        %v960 = vld [vmem:[%s1 + $0x2f0] sm:$0xf]
        %v961 = vld [vmem:[%s1 + $0x2f4] sm:$0xf]
        %v962 = vld [vmem:[%s1 + $0x2f8] sm:$0xf]
        %v963 = vld [vmem:[%s1 + $0x2fc] sm:$0xf]
        %s964 = sld [smem:[#allocation2]]
        %v965 = vstv %s964
        %v1542 = vunpack.c.l.b16 %v196
        %v1543 = vunpack.c.h.b16 %v196
        %v1544 = vunpack.c.l.b16 %v197
        %v1545 = vunpack.c.h.b16 %v197
        %v1546 = vunpack.c.l.b16 %v198
        %v1547 = vunpack.c.h.b16 %v198
        %v1548 = vunpack.c.l.b16 %v199
        %v1549 = vunpack.c.h.b16 %v199
        %v1550 = vunpack.c.l.b16 %v200
        %v1551 = vunpack.c.h.b16 %v200
        %v1552 = vunpack.c.l.b16 %v201
        %v1553 = vunpack.c.h.b16 %v201
        %v1554 = vunpack.c.l.b16 %v202
        %v1555 = vunpack.c.h.b16 %v202
        %v1556 = vunpack.c.l.b16 %v203
        %v1557 = vunpack.c.h.b16 %v203
        %v1558 = vunpack.c.l.b16 %v204
        %v1559 = vunpack.c.h.b16 %v204
        %v1560 = vunpack.c.l.b16 %v205
        %v1561 = vunpack.c.h.b16 %v205
        %v1562 = vunpack.c.l.b16 %v206
        %v1563 = vunpack.c.h.b16 %v206
        %v1564 = vunpack.c.l.b16 %v207
        %v1565 = vunpack.c.h.b16 %v207
        %v1566 = vunpack.c.l.b16 %v208
        %v1567 = vunpack.c.h.b16 %v208
        %v1568 = vunpack.c.l.b16 %v209
        %v1569 = vunpack.c.h.b16 %v209
        %v1570 = vunpack.c.l.b16 %v210
        %v1571 = vunpack.c.h.b16 %v210
        %v1572 = vunpack.c.l.b16 %v211
        %v1573 = vunpack.c.h.b16 %v211
        %v1574 = vunpack.c.l.b16 %v212
        %v1575 = vunpack.c.h.b16 %v212
        %v1576 = vunpack.c.l.b16 %v213
        %v1577 = vunpack.c.h.b16 %v213
        %v1578 = vunpack.c.l.b16 %v214
        %v1579 = vunpack.c.h.b16 %v214
        %v1580 = vunpack.c.l.b16 %v215
        %v1581 = vunpack.c.h.b16 %v215
        %v1582 = vunpack.c.l.b16 %v216
        %v1583 = vunpack.c.h.b16 %v216
        %v1584 = vunpack.c.l.b16 %v217
        %v1585 = vunpack.c.h.b16 %v217
        %v1586 = vunpack.c.l.b16 %v218
        %v1587 = vunpack.c.h.b16 %v218
        %v1588 = vunpack.c.l.b16 %v219
        %v1589 = vunpack.c.h.b16 %v219
        %v1590 = vunpack.c.l.b16 %v220
        %v1591 = vunpack.c.h.b16 %v220
        %v1592 = vunpack.c.l.b16 %v221
        %v1593 = vunpack.c.h.b16 %v221
        %v1594 = vunpack.c.l.b16 %v222
        %v1595 = vunpack.c.h.b16 %v222
        %v1596 = vunpack.c.l.b16 %v223
        %v1597 = vunpack.c.h.b16 %v223
        %v1598 = vunpack.c.l.b16 %v224
        %v1599 = vunpack.c.h.b16 %v224
        %v1600 = vunpack.c.l.b16 %v225
        %v1601 = vunpack.c.h.b16 %v225
        %v1602 = vunpack.c.l.b16 %v226
        %v1603 = vunpack.c.h.b16 %v226
        %v1604 = vunpack.c.l.b16 %v227
        %v1605 = vunpack.c.h.b16 %v227
        %v1606 = vunpack.c.l.b16 %v228
        %v1607 = vunpack.c.h.b16 %v228
        %v1608 = vunpack.c.l.b16 %v229
        %v1609 = vunpack.c.h.b16 %v229
        %v1610 = vunpack.c.l.b16 %v230
        %v1611 = vunpack.c.h.b16 %v230
        %v1612 = vunpack.c.l.b16 %v231
        %v1613 = vunpack.c.h.b16 %v231
        %v1614 = vunpack.c.l.b16 %v232
        %v1615 = vunpack.c.h.b16 %v232
        %v1616 = vunpack.c.l.b16 %v233
        %v1617 = vunpack.c.h.b16 %v233
        %v1618 = vunpack.c.l.b16 %v234
        %v1619 = vunpack.c.h.b16 %v234
        %v1620 = vunpack.c.l.b16 %v235
        %v1621 = vunpack.c.h.b16 %v235
        %v1622 = vunpack.c.l.b16 %v236
        %v1623 = vunpack.c.h.b16 %v236
        %v1624 = vunpack.c.l.b16 %v237
        %v1625 = vunpack.c.h.b16 %v237
        %v1626 = vunpack.c.l.b16 %v238
        %v1627 = vunpack.c.h.b16 %v238
        %v1628 = vunpack.c.l.b16 %v239
        %v1629 = vunpack.c.h.b16 %v239
        %v1630 = vunpack.c.l.b16 %v240
        %v1631 = vunpack.c.h.b16 %v240
        %v1632 = vunpack.c.l.b16 %v241
        %v1633 = vunpack.c.h.b16 %v241
        %v1634 = vunpack.c.l.b16 %v242
        %v1635 = vunpack.c.h.b16 %v242
        %v1636 = vunpack.c.l.b16 %v243
        %v1637 = vunpack.c.h.b16 %v243
        %v1638 = vunpack.c.l.b16 %v244
        %v1639 = vunpack.c.h.b16 %v244
        %v1640 = vunpack.c.l.b16 %v245
        %v1641 = vunpack.c.h.b16 %v245
        %v1642 = vunpack.c.l.b16 %v246
        %v1643 = vunpack.c.h.b16 %v246
        %v1644 = vunpack.c.l.b16 %v247
        %v1645 = vunpack.c.h.b16 %v247
        %v1646 = vunpack.c.l.b16 %v248
        %v1647 = vunpack.c.h.b16 %v248
        %v1648 = vunpack.c.l.b16 %v249
        %v1649 = vunpack.c.h.b16 %v249
        %v1650 = vunpack.c.l.b16 %v250
        %v1651 = vunpack.c.h.b16 %v250
        %v1652 = vunpack.c.l.b16 %v251
        %v1653 = vunpack.c.h.b16 %v251
        %v1654 = vunpack.c.l.b16 %v252
        %v1655 = vunpack.c.h.b16 %v252
        %v1656 = vunpack.c.l.b16 %v253
        %v1657 = vunpack.c.h.b16 %v253
        %v1658 = vunpack.c.l.b16 %v254
        %v1659 = vunpack.c.h.b16 %v254
        %v1660 = vunpack.c.l.b16 %v255
        %v1661 = vunpack.c.h.b16 %v255
        %v1662 = vunpack.c.l.b16 %v256
        %v1663 = vunpack.c.h.b16 %v256
        %v1664 = vunpack.c.l.b16 %v257
        %v1665 = vunpack.c.h.b16 %v257
        %v1666 = vunpack.c.l.b16 %v258
        %v1667 = vunpack.c.h.b16 %v258
        %v1668 = vunpack.c.l.b16 %v259
        %v1669 = vunpack.c.h.b16 %v259
        %v1670 = vunpack.c.l.b16 %v260
        %v1671 = vunpack.c.h.b16 %v260
        %v1672 = vunpack.c.l.b16 %v261
        %v1673 = vunpack.c.h.b16 %v261
        %v1674 = vunpack.c.l.b16 %v262
        %v1675 = vunpack.c.h.b16 %v262
        %v1676 = vunpack.c.l.b16 %v263
        %v1677 = vunpack.c.h.b16 %v263
        %v1678 = vunpack.c.l.b16 %v264
        %v1679 = vunpack.c.h.b16 %v264
        %v1680 = vunpack.c.l.b16 %v265
        %v1681 = vunpack.c.h.b16 %v265
        %v1682 = vunpack.c.l.b16 %v266
        %v1683 = vunpack.c.h.b16 %v266
        %v1684 = vunpack.c.l.b16 %v267
        %v1685 = vunpack.c.h.b16 %v267
        %v1686 = vunpack.c.l.b16 %v268
        %v1687 = vunpack.c.h.b16 %v268
        %v1688 = vunpack.c.l.b16 %v269
        %v1689 = vunpack.c.h.b16 %v269
        %v1690 = vunpack.c.l.b16 %v270
        %v1691 = vunpack.c.h.b16 %v270
        %v1692 = vunpack.c.l.b16 %v271
        %v1693 = vunpack.c.h.b16 %v271
        %v1694 = vunpack.c.l.b16 %v272
        %v1695 = vunpack.c.h.b16 %v272
        %v1696 = vunpack.c.l.b16 %v273
        %v1697 = vunpack.c.h.b16 %v273
        %v1698 = vunpack.c.l.b16 %v274
        %v1699 = vunpack.c.h.b16 %v274
        %v1700 = vunpack.c.l.b16 %v275
        %v1701 = vunpack.c.h.b16 %v275
        %v1702 = vunpack.c.l.b16 %v276
        %v1703 = vunpack.c.h.b16 %v276
        %v1704 = vunpack.c.l.b16 %v277
        %v1705 = vunpack.c.h.b16 %v277
        %v1706 = vunpack.c.l.b16 %v278
        %v1707 = vunpack.c.h.b16 %v278
        %v1708 = vunpack.c.l.b16 %v279
        %v1709 = vunpack.c.h.b16 %v279
        %v1710 = vunpack.c.l.b16 %v280
        %v1711 = vunpack.c.h.b16 %v280
        %v1712 = vunpack.c.l.b16 %v281
        %v1713 = vunpack.c.h.b16 %v281
        %v1714 = vunpack.c.l.b16 %v282
        %v1715 = vunpack.c.h.b16 %v282
        %v1716 = vunpack.c.l.b16 %v283
        %v1717 = vunpack.c.h.b16 %v283
        %v1718 = vunpack.c.l.b16 %v284
        %v1719 = vunpack.c.h.b16 %v284
        %v1720 = vunpack.c.l.b16 %v285
        %v1721 = vunpack.c.h.b16 %v285
        %v1722 = vunpack.c.l.b16 %v286
        %v1723 = vunpack.c.h.b16 %v286
        %v1724 = vunpack.c.l.b16 %v287
        %v1725 = vunpack.c.h.b16 %v287
        %v1726 = vunpack.c.l.b16 %v288
        %v1727 = vunpack.c.h.b16 %v288
        %v1728 = vunpack.c.l.b16 %v289
        %v1729 = vunpack.c.h.b16 %v289
        %v1730 = vunpack.c.l.b16 %v290
        %v1731 = vunpack.c.h.b16 %v290
        %v1732 = vunpack.c.l.b16 %v291
        %v1733 = vunpack.c.h.b16 %v291
        %v1734 = vunpack.c.l.b16 %v292
        %v1735 = vunpack.c.h.b16 %v292
        %v1736 = vunpack.c.l.b16 %v293
        %v1737 = vunpack.c.h.b16 %v293
        %v1738 = vunpack.c.l.b16 %v294
        %v1739 = vunpack.c.h.b16 %v294
        %v1740 = vunpack.c.l.b16 %v295
        %v1741 = vunpack.c.h.b16 %v295
        %v1742 = vunpack.c.l.b16 %v296
        %v1743 = vunpack.c.h.b16 %v296
        %v1744 = vunpack.c.l.b16 %v297
        %v1745 = vunpack.c.h.b16 %v297
        %v1746 = vunpack.c.l.b16 %v298
        %v1747 = vunpack.c.h.b16 %v298
        %v1748 = vunpack.c.l.b16 %v299
        %v1749 = vunpack.c.h.b16 %v299
        %v1750 = vunpack.c.l.b16 %v300
        %v1751 = vunpack.c.h.b16 %v300
        %v1752 = vunpack.c.l.b16 %v301
        %v1753 = vunpack.c.h.b16 %v301
        %v1754 = vunpack.c.l.b16 %v302
        %v1755 = vunpack.c.h.b16 %v302
        %v1756 = vunpack.c.l.b16 %v303
        %v1757 = vunpack.c.h.b16 %v303
        %v1758 = vunpack.c.l.b16 %v304
        %v1759 = vunpack.c.h.b16 %v304
        %v1760 = vunpack.c.l.b16 %v305
        %v1761 = vunpack.c.h.b16 %v305
        %v1762 = vunpack.c.l.b16 %v306
        %v1763 = vunpack.c.h.b16 %v306
        %v1764 = vunpack.c.l.b16 %v307
        %v1765 = vunpack.c.h.b16 %v307
        %v1766 = vunpack.c.l.b16 %v308
        %v1767 = vunpack.c.h.b16 %v308
        %v1768 = vunpack.c.l.b16 %v309
        %v1769 = vunpack.c.h.b16 %v309
        %v1770 = vunpack.c.l.b16 %v310
        %v1771 = vunpack.c.h.b16 %v310
        %v1772 = vunpack.c.l.b16 %v311
        %v1773 = vunpack.c.h.b16 %v311
        %v1774 = vunpack.c.l.b16 %v312
        %v1775 = vunpack.c.h.b16 %v312
        %v1776 = vunpack.c.l.b16 %v313
        %v1777 = vunpack.c.h.b16 %v313
        %v1778 = vunpack.c.l.b16 %v314
        %v1779 = vunpack.c.h.b16 %v314
        %v1780 = vunpack.c.l.b16 %v315
        %v1781 = vunpack.c.h.b16 %v315
        %v1782 = vunpack.c.l.b16 %v316
        %v1783 = vunpack.c.h.b16 %v316
        %v1784 = vunpack.c.l.b16 %v317
        %v1785 = vunpack.c.h.b16 %v317
        %v1786 = vunpack.c.l.b16 %v318
        %v1787 = vunpack.c.h.b16 %v318
        %v1788 = vunpack.c.l.b16 %v319
        %v1789 = vunpack.c.h.b16 %v319
        %v1790 = vunpack.c.l.b16 %v320
        %v1791 = vunpack.c.h.b16 %v320
        %v1792 = vunpack.c.l.b16 %v321
        %v1793 = vunpack.c.h.b16 %v321
        %v1794 = vunpack.c.l.b16 %v322
        %v1795 = vunpack.c.h.b16 %v322
        %v1796 = vunpack.c.l.b16 %v323
        %v1797 = vunpack.c.h.b16 %v323
        %v1798 = vunpack.c.l.b16 %v324
        %v1799 = vunpack.c.h.b16 %v324
        %v1800 = vunpack.c.l.b16 %v325
        %v1801 = vunpack.c.h.b16 %v325
        %v1802 = vunpack.c.l.b16 %v326
        %v1803 = vunpack.c.h.b16 %v326
        %v1804 = vunpack.c.l.b16 %v327
        %v1805 = vunpack.c.h.b16 %v327
        %v1806 = vunpack.c.l.b16 %v328
        %v1807 = vunpack.c.h.b16 %v328
        %v1808 = vunpack.c.l.b16 %v329
        %v1809 = vunpack.c.h.b16 %v329
        %v1810 = vunpack.c.l.b16 %v330
        %v1811 = vunpack.c.h.b16 %v330
        %v1812 = vunpack.c.l.b16 %v331
        %v1813 = vunpack.c.h.b16 %v331
        %v1814 = vunpack.c.l.b16 %v332
        %v1815 = vunpack.c.h.b16 %v332
        %v1816 = vunpack.c.l.b16 %v333
        %v1817 = vunpack.c.h.b16 %v333
        %v1818 = vunpack.c.l.b16 %v334
        %v1819 = vunpack.c.h.b16 %v334
        %v1820 = vunpack.c.l.b16 %v335
        %v1821 = vunpack.c.h.b16 %v335
        %v1822 = vunpack.c.l.b16 %v336
        %v1823 = vunpack.c.h.b16 %v336
        %v1824 = vunpack.c.l.b16 %v337
        %v1825 = vunpack.c.h.b16 %v337
        %v1826 = vunpack.c.l.b16 %v338
        %v1827 = vunpack.c.h.b16 %v338
        %v1828 = vunpack.c.l.b16 %v339
        %v1829 = vunpack.c.h.b16 %v339
        %v1830 = vunpack.c.l.b16 %v340
        %v1831 = vunpack.c.h.b16 %v340
        %v1832 = vunpack.c.l.b16 %v341
        %v1833 = vunpack.c.h.b16 %v341
        %v1834 = vunpack.c.l.b16 %v342
        %v1835 = vunpack.c.h.b16 %v342
        %v1836 = vunpack.c.l.b16 %v343
        %v1837 = vunpack.c.h.b16 %v343
        %v1838 = vunpack.c.l.b16 %v344
        %v1839 = vunpack.c.h.b16 %v344
        %v1840 = vunpack.c.l.b16 %v345
        %v1841 = vunpack.c.h.b16 %v345
        %v1842 = vunpack.c.l.b16 %v346
        %v1843 = vunpack.c.h.b16 %v346
        %v1844 = vunpack.c.l.b16 %v347
        %v1845 = vunpack.c.h.b16 %v347
        %v1846 = vunpack.c.l.b16 %v348
        %v1847 = vunpack.c.h.b16 %v348
        %v1848 = vunpack.c.l.b16 %v349
        %v1849 = vunpack.c.h.b16 %v349
        %v1850 = vunpack.c.l.b16 %v350
        %v1851 = vunpack.c.h.b16 %v350
        %v1852 = vunpack.c.l.b16 %v351
        %v1853 = vunpack.c.h.b16 %v351
        %v1854 = vunpack.c.l.b16 %v352
        %v1855 = vunpack.c.h.b16 %v352
        %v1856 = vunpack.c.l.b16 %v353
        %v1857 = vunpack.c.h.b16 %v353
        %v1858 = vunpack.c.l.b16 %v354
        %v1859 = vunpack.c.h.b16 %v354
        %v1860 = vunpack.c.l.b16 %v355
        %v1861 = vunpack.c.h.b16 %v355
        %v1862 = vunpack.c.l.b16 %v356
        %v1863 = vunpack.c.h.b16 %v356
        %v1864 = vunpack.c.l.b16 %v357
        %v1865 = vunpack.c.h.b16 %v357
        %v1866 = vunpack.c.l.b16 %v358
        %v1867 = vunpack.c.h.b16 %v358
        %v1868 = vunpack.c.l.b16 %v359
        %v1869 = vunpack.c.h.b16 %v359
        %v1870 = vunpack.c.l.b16 %v360
        %v1871 = vunpack.c.h.b16 %v360
        %v1872 = vunpack.c.l.b16 %v361
        %v1873 = vunpack.c.h.b16 %v361
        %v1874 = vunpack.c.l.b16 %v362
        %v1875 = vunpack.c.h.b16 %v362
        %v1876 = vunpack.c.l.b16 %v363
        %v1877 = vunpack.c.h.b16 %v363
        %v1878 = vunpack.c.l.b16 %v364
        %v1879 = vunpack.c.h.b16 %v364
        %v1880 = vunpack.c.l.b16 %v365
        %v1881 = vunpack.c.h.b16 %v365
        %v1882 = vunpack.c.l.b16 %v366
        %v1883 = vunpack.c.h.b16 %v366
        %v1884 = vunpack.c.l.b16 %v367
        %v1885 = vunpack.c.h.b16 %v367
        %v1886 = vunpack.c.l.b16 %v368
        %v1887 = vunpack.c.h.b16 %v368
        %v1888 = vunpack.c.l.b16 %v369
        %v1889 = vunpack.c.h.b16 %v369
        %v1890 = vunpack.c.l.b16 %v370
        %v1891 = vunpack.c.h.b16 %v370
        %v1892 = vunpack.c.l.b16 %v371
        %v1893 = vunpack.c.h.b16 %v371
        %v1894 = vunpack.c.l.b16 %v372
        %v1895 = vunpack.c.h.b16 %v372
        %v1896 = vunpack.c.l.b16 %v373
        %v1897 = vunpack.c.h.b16 %v373
        %v1898 = vunpack.c.l.b16 %v374
        %v1899 = vunpack.c.h.b16 %v374
        %v1900 = vunpack.c.l.b16 %v375
        %v1901 = vunpack.c.h.b16 %v375
        %v1902 = vunpack.c.l.b16 %v376
        %v1903 = vunpack.c.h.b16 %v376
        %v1904 = vunpack.c.l.b16 %v377
        %v1905 = vunpack.c.h.b16 %v377
        %v1906 = vunpack.c.l.b16 %v378
        %v1907 = vunpack.c.h.b16 %v378
        %v1908 = vunpack.c.l.b16 %v379
        %v1909 = vunpack.c.h.b16 %v379
        %v1910 = vunpack.c.l.b16 %v380
        %v1911 = vunpack.c.h.b16 %v380
        %v1912 = vunpack.c.l.b16 %v381
        %v1913 = vunpack.c.h.b16 %v381
        %v1914 = vunpack.c.l.b16 %v382
        %v1915 = vunpack.c.h.b16 %v382
        %v1916 = vunpack.c.l.b16 %v383
        %v1917 = vunpack.c.h.b16 %v383
        %v1918 = vunpack.c.l.b16 %v384
        %v1919 = vunpack.c.h.b16 %v384
        %v1920 = vunpack.c.l.b16 %v385
        %v1921 = vunpack.c.h.b16 %v385
        %v1922 = vunpack.c.l.b16 %v386
        %v1923 = vunpack.c.h.b16 %v386
        %v1924 = vunpack.c.l.b16 %v387
        %v1925 = vunpack.c.h.b16 %v387
        %v1926 = vunpack.c.l.b16 %v388
        %v1927 = vunpack.c.h.b16 %v388
        %v1928 = vunpack.c.l.b16 %v389
        %v1929 = vunpack.c.h.b16 %v389
        %v1930 = vunpack.c.l.b16 %v390
        %v1931 = vunpack.c.h.b16 %v390
        %v1932 = vunpack.c.l.b16 %v391
        %v1933 = vunpack.c.h.b16 %v391
        %v1934 = vunpack.c.l.b16 %v392
        %v1935 = vunpack.c.h.b16 %v392
        %v1936 = vunpack.c.l.b16 %v393
        %v1937 = vunpack.c.h.b16 %v393
        %v1938 = vunpack.c.l.b16 %v394
        %v1939 = vunpack.c.h.b16 %v394
        %v1940 = vunpack.c.l.b16 %v395
        %v1941 = vunpack.c.h.b16 %v395
        %v1942 = vunpack.c.l.b16 %v396
        %v1943 = vunpack.c.h.b16 %v396
        %v1944 = vunpack.c.l.b16 %v397
        %v1945 = vunpack.c.h.b16 %v397
        %v1946 = vunpack.c.l.b16 %v398
        %v1947 = vunpack.c.h.b16 %v398
        %v1948 = vunpack.c.l.b16 %v399
        %v1949 = vunpack.c.h.b16 %v399
        %v1950 = vunpack.c.l.b16 %v400
        %v1951 = vunpack.c.h.b16 %v400
        %v1952 = vunpack.c.l.b16 %v401
        %v1953 = vunpack.c.h.b16 %v401
        %v1954 = vunpack.c.l.b16 %v402
        %v1955 = vunpack.c.h.b16 %v402
        %v1956 = vunpack.c.l.b16 %v403
        %v1957 = vunpack.c.h.b16 %v403
        %v1958 = vunpack.c.l.b16 %v404
        %v1959 = vunpack.c.h.b16 %v404
        %v1960 = vunpack.c.l.b16 %v405
        %v1961 = vunpack.c.h.b16 %v405
        %v1962 = vunpack.c.l.b16 %v406
        %v1963 = vunpack.c.h.b16 %v406
        %v1964 = vunpack.c.l.b16 %v407
        %v1965 = vunpack.c.h.b16 %v407
        %v1966 = vunpack.c.l.b16 %v408
        %v1967 = vunpack.c.h.b16 %v408
        %v1968 = vunpack.c.l.b16 %v409
        %v1969 = vunpack.c.h.b16 %v409
        %v1970 = vunpack.c.l.b16 %v410
        %v1971 = vunpack.c.h.b16 %v410
        %v1972 = vunpack.c.l.b16 %v411
        %v1973 = vunpack.c.h.b16 %v411
        %v1974 = vunpack.c.l.b16 %v412
        %v1975 = vunpack.c.h.b16 %v412
        %v1976 = vunpack.c.l.b16 %v413
        %v1977 = vunpack.c.h.b16 %v413
        %v1978 = vunpack.c.l.b16 %v414
        %v1979 = vunpack.c.h.b16 %v414
        %v1980 = vunpack.c.l.b16 %v415
        %v1981 = vunpack.c.h.b16 %v415
        %v1982 = vunpack.c.l.b16 %v416
        %v1983 = vunpack.c.h.b16 %v416
        %v1984 = vunpack.c.l.b16 %v417
        %v1985 = vunpack.c.h.b16 %v417
        %v1986 = vunpack.c.l.b16 %v418
        %v1987 = vunpack.c.h.b16 %v418
        %v1988 = vunpack.c.l.b16 %v419
        %v1989 = vunpack.c.h.b16 %v419
        %v1990 = vunpack.c.l.b16 %v420
        %v1991 = vunpack.c.h.b16 %v420
        %v1992 = vunpack.c.l.b16 %v421
        %v1993 = vunpack.c.h.b16 %v421
        %v1994 = vunpack.c.l.b16 %v422
        %v1995 = vunpack.c.h.b16 %v422
        %v1996 = vunpack.c.l.b16 %v423
        %v1997 = vunpack.c.h.b16 %v423
        %v1998 = vunpack.c.l.b16 %v424
        %v1999 = vunpack.c.h.b16 %v424
        %v2000 = vunpack.c.l.b16 %v425
        %v2001 = vunpack.c.h.b16 %v425
        %v2002 = vunpack.c.l.b16 %v426
        %v2003 = vunpack.c.h.b16 %v426
        %v2004 = vunpack.c.l.b16 %v427
        %v2005 = vunpack.c.h.b16 %v427
        %v2006 = vunpack.c.l.b16 %v428
        %v2007 = vunpack.c.h.b16 %v428
        %v2008 = vunpack.c.l.b16 %v429
        %v2009 = vunpack.c.h.b16 %v429
        %v2010 = vunpack.c.l.b16 %v430
        %v2011 = vunpack.c.h.b16 %v430
        %v2012 = vunpack.c.l.b16 %v431
        %v2013 = vunpack.c.h.b16 %v431
        %v2014 = vunpack.c.l.b16 %v432
        %v2015 = vunpack.c.h.b16 %v432
        %v2016 = vunpack.c.l.b16 %v433
        %v2017 = vunpack.c.h.b16 %v433
        %v2018 = vunpack.c.l.b16 %v434
        %v2019 = vunpack.c.h.b16 %v434
        %v2020 = vunpack.c.l.b16 %v435
        %v2021 = vunpack.c.h.b16 %v435
        %v2022 = vunpack.c.l.b16 %v436
        %v2023 = vunpack.c.h.b16 %v436
        %v2024 = vunpack.c.l.b16 %v437
        %v2025 = vunpack.c.h.b16 %v437
        %v2026 = vunpack.c.l.b16 %v438
        %v2027 = vunpack.c.h.b16 %v438
        %v2028 = vunpack.c.l.b16 %v439
        %v2029 = vunpack.c.h.b16 %v439
        %v2030 = vunpack.c.l.b16 %v440
        %v2031 = vunpack.c.h.b16 %v440
        %v2032 = vunpack.c.l.b16 %v441
        %v2033 = vunpack.c.h.b16 %v441
        %v2034 = vunpack.c.l.b16 %v442
        %v2035 = vunpack.c.h.b16 %v442
        %v2036 = vunpack.c.l.b16 %v443
        %v2037 = vunpack.c.h.b16 %v443
        %v2038 = vunpack.c.l.b16 %v444
        %v2039 = vunpack.c.h.b16 %v444
        %v2040 = vunpack.c.l.b16 %v445
        %v2041 = vunpack.c.h.b16 %v445
        %v2042 = vunpack.c.l.b16 %v446
        %v2043 = vunpack.c.h.b16 %v446
        %v2044 = vunpack.c.l.b16 %v447
        %v2045 = vunpack.c.h.b16 %v447
        %v2046 = vunpack.c.l.b16 %v448
        %v2047 = vunpack.c.h.b16 %v448
        %v2048 = vunpack.c.l.b16 %v449
        %v2049 = vunpack.c.h.b16 %v449
        %v2050 = vunpack.c.l.b16 %v450
        %v2051 = vunpack.c.h.b16 %v450
        %v2052 = vunpack.c.l.b16 %v451
        %v2053 = vunpack.c.h.b16 %v451
        %v2054 = vunpack.c.l.b16 %v452
        %v2055 = vunpack.c.h.b16 %v452
        %v2056 = vunpack.c.l.b16 %v453
        %v2057 = vunpack.c.h.b16 %v453
        %v2058 = vunpack.c.l.b16 %v454
        %v2059 = vunpack.c.h.b16 %v454
        %v2060 = vunpack.c.l.b16 %v455
        %v2061 = vunpack.c.h.b16 %v455
        %v2062 = vunpack.c.l.b16 %v456
        %v2063 = vunpack.c.h.b16 %v456
        %v2064 = vunpack.c.l.b16 %v457
        %v2065 = vunpack.c.h.b16 %v457
        %v2066 = vunpack.c.l.b16 %v458
        %v2067 = vunpack.c.h.b16 %v458
        %v2068 = vunpack.c.l.b16 %v459
        %v2069 = vunpack.c.h.b16 %v459
        %v2070 = vunpack.c.l.b16 %v460
        %v2071 = vunpack.c.h.b16 %v460
        %v2072 = vunpack.c.l.b16 %v461
        %v2073 = vunpack.c.h.b16 %v461
        %v2074 = vunpack.c.l.b16 %v462
        %v2075 = vunpack.c.h.b16 %v462
        %v2076 = vunpack.c.l.b16 %v463
        %v2077 = vunpack.c.h.b16 %v463
        %v2078 = vunpack.c.l.b16 %v464
        %v2079 = vunpack.c.h.b16 %v464
        %v2080 = vunpack.c.l.b16 %v465
        %v2081 = vunpack.c.h.b16 %v465
        %v2082 = vunpack.c.l.b16 %v466
        %v2083 = vunpack.c.h.b16 %v466
        %v2084 = vunpack.c.l.b16 %v467
        %v2085 = vunpack.c.h.b16 %v467
        %v2086 = vunpack.c.l.b16 %v468
        %v2087 = vunpack.c.h.b16 %v468
        %v2088 = vunpack.c.l.b16 %v469
        %v2089 = vunpack.c.h.b16 %v469
        %v2090 = vunpack.c.l.b16 %v470
        %v2091 = vunpack.c.h.b16 %v470
        %v2092 = vunpack.c.l.b16 %v471
        %v2093 = vunpack.c.h.b16 %v471
        %v2094 = vunpack.c.l.b16 %v472
        %v2095 = vunpack.c.h.b16 %v472
        %v2096 = vunpack.c.l.b16 %v473
        %v2097 = vunpack.c.h.b16 %v473
        %v2098 = vunpack.c.l.b16 %v474
        %v2099 = vunpack.c.h.b16 %v474
        %v2100 = vunpack.c.l.b16 %v475
        %v2101 = vunpack.c.h.b16 %v475
        %v2102 = vunpack.c.l.b16 %v476
        %v2103 = vunpack.c.h.b16 %v476
        %v2104 = vunpack.c.l.b16 %v477
        %v2105 = vunpack.c.h.b16 %v477
        %v2106 = vunpack.c.l.b16 %v478
        %v2107 = vunpack.c.h.b16 %v478
        %v2108 = vunpack.c.l.b16 %v479
        %v2109 = vunpack.c.h.b16 %v479
        %v2110 = vunpack.c.l.b16 %v480
        %v2111 = vunpack.c.h.b16 %v480
        %v2112 = vunpack.c.l.b16 %v481
        %v2113 = vunpack.c.h.b16 %v481
        %v2114 = vunpack.c.l.b16 %v482
        %v2115 = vunpack.c.h.b16 %v482
        %v2116 = vunpack.c.l.b16 %v483
        %v2117 = vunpack.c.h.b16 %v483
        %v2118 = vunpack.c.l.b16 %v484
        %v2119 = vunpack.c.h.b16 %v484
        %v2120 = vunpack.c.l.b16 %v485
        %v2121 = vunpack.c.h.b16 %v485
        %v2122 = vunpack.c.l.b16 %v486
        %v2123 = vunpack.c.h.b16 %v486
        %v2124 = vunpack.c.l.b16 %v487
        %v2125 = vunpack.c.h.b16 %v487
        %v2126 = vunpack.c.l.b16 %v488
        %v2127 = vunpack.c.h.b16 %v488
        %v2128 = vunpack.c.l.b16 %v489
        %v2129 = vunpack.c.h.b16 %v489
        %v2130 = vunpack.c.l.b16 %v490
        %v2131 = vunpack.c.h.b16 %v490
        %v2132 = vunpack.c.l.b16 %v491
        %v2133 = vunpack.c.h.b16 %v491
        %v2134 = vunpack.c.l.b16 %v492
        %v2135 = vunpack.c.h.b16 %v492
        %v2136 = vunpack.c.l.b16 %v493
        %v2137 = vunpack.c.h.b16 %v493
        %v2138 = vunpack.c.l.b16 %v494
        %v2139 = vunpack.c.h.b16 %v494
        %v2140 = vunpack.c.l.b16 %v495
        %v2141 = vunpack.c.h.b16 %v495
        %v2142 = vunpack.c.l.b16 %v496
        %v2143 = vunpack.c.h.b16 %v496
        %v2144 = vunpack.c.l.b16 %v497
        %v2145 = vunpack.c.h.b16 %v497
        %v2146 = vunpack.c.l.b16 %v498
        %v2147 = vunpack.c.h.b16 %v498
        %v2148 = vunpack.c.l.b16 %v499
        %v2149 = vunpack.c.h.b16 %v499
        %v2150 = vunpack.c.l.b16 %v500
        %v2151 = vunpack.c.h.b16 %v500
        %v2152 = vunpack.c.l.b16 %v501
        %v2153 = vunpack.c.h.b16 %v501
        %v2154 = vunpack.c.l.b16 %v502
        %v2155 = vunpack.c.h.b16 %v502
        %v2156 = vunpack.c.l.b16 %v503
        %v2157 = vunpack.c.h.b16 %v503
        %v2158 = vunpack.c.l.b16 %v504
        %v2159 = vunpack.c.h.b16 %v504
        %v2160 = vunpack.c.l.b16 %v505
        %v2161 = vunpack.c.h.b16 %v505
        %v2162 = vunpack.c.l.b16 %v506
        %v2163 = vunpack.c.h.b16 %v506
        %v2164 = vunpack.c.l.b16 %v507
        %v2165 = vunpack.c.h.b16 %v507
        %v2166 = vunpack.c.l.b16 %v508
        %v2167 = vunpack.c.h.b16 %v508
        %v2168 = vunpack.c.l.b16 %v509
        %v2169 = vunpack.c.h.b16 %v509
        %v2170 = vunpack.c.l.b16 %v510
        %v2171 = vunpack.c.h.b16 %v510
        %v2172 = vunpack.c.l.b16 %v511
        %v2173 = vunpack.c.h.b16 %v511
        %v2174 = vunpack.c.l.b16 %v512
        %v2175 = vunpack.c.h.b16 %v512
        %v2176 = vunpack.c.l.b16 %v513
        %v2177 = vunpack.c.h.b16 %v513
        %v2178 = vunpack.c.l.b16 %v514
        %v2179 = vunpack.c.h.b16 %v514
        %v2180 = vunpack.c.l.b16 %v515
        %v2181 = vunpack.c.h.b16 %v515
        %v2182 = vunpack.c.l.b16 %v516
        %v2183 = vunpack.c.h.b16 %v516
        %v2184 = vunpack.c.l.b16 %v517
        %v2185 = vunpack.c.h.b16 %v517
        %v2186 = vunpack.c.l.b16 %v518
        %v2187 = vunpack.c.h.b16 %v518
        %v2188 = vunpack.c.l.b16 %v519
        %v2189 = vunpack.c.h.b16 %v519
        %v2190 = vunpack.c.l.b16 %v520
        %v2191 = vunpack.c.h.b16 %v520
        %v2192 = vunpack.c.l.b16 %v521
        %v2193 = vunpack.c.h.b16 %v521
        %v2194 = vunpack.c.l.b16 %v522
        %v2195 = vunpack.c.h.b16 %v522
        %v2196 = vunpack.c.l.b16 %v523
        %v2197 = vunpack.c.h.b16 %v523
        %v2198 = vunpack.c.l.b16 %v524
        %v2199 = vunpack.c.h.b16 %v524
        %v2200 = vunpack.c.l.b16 %v525
        %v2201 = vunpack.c.h.b16 %v525
        %v2202 = vunpack.c.l.b16 %v526
        %v2203 = vunpack.c.h.b16 %v526
        %v2204 = vunpack.c.l.b16 %v527
        %v2205 = vunpack.c.h.b16 %v527
        %v2206 = vunpack.c.l.b16 %v528
        %v2207 = vunpack.c.h.b16 %v528
        %v2208 = vunpack.c.l.b16 %v529
        %v2209 = vunpack.c.h.b16 %v529
        %v2210 = vunpack.c.l.b16 %v530
        %v2211 = vunpack.c.h.b16 %v530
        %v2212 = vunpack.c.l.b16 %v531
        %v2213 = vunpack.c.h.b16 %v531
        %v2214 = vunpack.c.l.b16 %v532
        %v2215 = vunpack.c.h.b16 %v532
        %v2216 = vunpack.c.l.b16 %v533
        %v2217 = vunpack.c.h.b16 %v533
        %v2218 = vunpack.c.l.b16 %v534
        %v2219 = vunpack.c.h.b16 %v534
        %v2220 = vunpack.c.l.b16 %v535
        %v2221 = vunpack.c.h.b16 %v535
        %v2222 = vunpack.c.l.b16 %v536
        %v2223 = vunpack.c.h.b16 %v536
        %v2224 = vunpack.c.l.b16 %v537
        %v2225 = vunpack.c.h.b16 %v537
        %v2226 = vunpack.c.l.b16 %v538
        %v2227 = vunpack.c.h.b16 %v538
        %v2228 = vunpack.c.l.b16 %v539
        %v2229 = vunpack.c.h.b16 %v539
        %v2230 = vunpack.c.l.b16 %v540
        %v2231 = vunpack.c.h.b16 %v540
        %v2232 = vunpack.c.l.b16 %v541
        %v2233 = vunpack.c.h.b16 %v541
        %v2234 = vunpack.c.l.b16 %v542
        %v2235 = vunpack.c.h.b16 %v542
        %v2236 = vunpack.c.l.b16 %v543
        %v2237 = vunpack.c.h.b16 %v543
        %v2238 = vunpack.c.l.b16 %v544
        %v2239 = vunpack.c.h.b16 %v544
        %v2240 = vunpack.c.l.b16 %v545
        %v2241 = vunpack.c.h.b16 %v545
        %v2242 = vunpack.c.l.b16 %v546
        %v2243 = vunpack.c.h.b16 %v546
        %v2244 = vunpack.c.l.b16 %v547
        %v2245 = vunpack.c.h.b16 %v547
        %v2246 = vunpack.c.l.b16 %v548
        %v2247 = vunpack.c.h.b16 %v548
        %v2248 = vunpack.c.l.b16 %v549
        %v2249 = vunpack.c.h.b16 %v549
        %v2250 = vunpack.c.l.b16 %v550
        %v2251 = vunpack.c.h.b16 %v550
        %v2252 = vunpack.c.l.b16 %v551
        %v2253 = vunpack.c.h.b16 %v551
        %v2254 = vunpack.c.l.b16 %v552
        %v2255 = vunpack.c.h.b16 %v552
        %v2256 = vunpack.c.l.b16 %v553
        %v2257 = vunpack.c.h.b16 %v553
        %v2258 = vunpack.c.l.b16 %v554
        %v2259 = vunpack.c.h.b16 %v554
        %v2260 = vunpack.c.l.b16 %v555
        %v2261 = vunpack.c.h.b16 %v555
        %v2262 = vunpack.c.l.b16 %v556
        %v2263 = vunpack.c.h.b16 %v556
        %v2264 = vunpack.c.l.b16 %v557
        %v2265 = vunpack.c.h.b16 %v557
        %v2266 = vunpack.c.l.b16 %v558
        %v2267 = vunpack.c.h.b16 %v558
        %v2268 = vunpack.c.l.b16 %v559
        %v2269 = vunpack.c.h.b16 %v559
        %v2270 = vunpack.c.l.b16 %v560
        %v2271 = vunpack.c.h.b16 %v560
        %v2272 = vunpack.c.l.b16 %v561
        %v2273 = vunpack.c.h.b16 %v561
        %v2274 = vunpack.c.l.b16 %v562
        %v2275 = vunpack.c.h.b16 %v562
        %v2276 = vunpack.c.l.b16 %v563
        %v2277 = vunpack.c.h.b16 %v563
        %v2278 = vunpack.c.l.b16 %v564
        %v2279 = vunpack.c.h.b16 %v564
        %v2280 = vunpack.c.l.b16 %v565
        %v2281 = vunpack.c.h.b16 %v565
        %v2282 = vunpack.c.l.b16 %v566
        %v2283 = vunpack.c.h.b16 %v566
        %v2284 = vunpack.c.l.b16 %v567
        %v2285 = vunpack.c.h.b16 %v567
        %v2286 = vunpack.c.l.b16 %v568
        %v2287 = vunpack.c.h.b16 %v568
        %v2288 = vunpack.c.l.b16 %v569
        %v2289 = vunpack.c.h.b16 %v569
        %v2290 = vunpack.c.l.b16 %v570
        %v2291 = vunpack.c.h.b16 %v570
        %v2292 = vunpack.c.l.b16 %v571
        %v2293 = vunpack.c.h.b16 %v571
        %v2294 = vunpack.c.l.b16 %v572
        %v2295 = vunpack.c.h.b16 %v572
        %v2296 = vunpack.c.l.b16 %v573
        %v2297 = vunpack.c.h.b16 %v573
        %v2298 = vunpack.c.l.b16 %v574
        %v2299 = vunpack.c.h.b16 %v574
        %v2300 = vunpack.c.l.b16 %v575
        %v2301 = vunpack.c.h.b16 %v575
        %v2302 = vunpack.c.l.b16 %v576
        %v2303 = vunpack.c.h.b16 %v576
        %v2304 = vunpack.c.l.b16 %v577
        %v2305 = vunpack.c.h.b16 %v577
        %v2306 = vunpack.c.l.b16 %v578
        %v2307 = vunpack.c.h.b16 %v578
        %v2308 = vunpack.c.l.b16 %v579
        %v2309 = vunpack.c.h.b16 %v579
        %v2310 = vunpack.c.l.b16 %v580
        %v2311 = vunpack.c.h.b16 %v580
        %v2312 = vunpack.c.l.b16 %v581
        %v2313 = vunpack.c.h.b16 %v581
        %v2314 = vunpack.c.l.b16 %v582
        %v2315 = vunpack.c.h.b16 %v582
        %v2316 = vunpack.c.l.b16 %v583
        %v2317 = vunpack.c.h.b16 %v583
        %v2318 = vunpack.c.l.b16 %v584
        %v2319 = vunpack.c.h.b16 %v584
        %v2320 = vunpack.c.l.b16 %v585
        %v2321 = vunpack.c.h.b16 %v585
        %v2322 = vunpack.c.l.b16 %v586
        %v2323 = vunpack.c.h.b16 %v586
        %v2324 = vunpack.c.l.b16 %v587
        %v2325 = vunpack.c.h.b16 %v587
        %v2326 = vunpack.c.l.b16 %v588
        %v2327 = vunpack.c.h.b16 %v588
        %v2328 = vunpack.c.l.b16 %v589
        %v2329 = vunpack.c.h.b16 %v589
        %v2330 = vunpack.c.l.b16 %v590
        %v2331 = vunpack.c.h.b16 %v590
        %v2332 = vunpack.c.l.b16 %v591
        %v2333 = vunpack.c.h.b16 %v591
        %v2334 = vunpack.c.l.b16 %v592
        %v2335 = vunpack.c.h.b16 %v592
        %v2336 = vunpack.c.l.b16 %v593
        %v2337 = vunpack.c.h.b16 %v593
        %v2338 = vunpack.c.l.b16 %v594
        %v2339 = vunpack.c.h.b16 %v594
        %v2340 = vunpack.c.l.b16 %v595
        %v2341 = vunpack.c.h.b16 %v595
        %v2342 = vunpack.c.l.b16 %v596
        %v2343 = vunpack.c.h.b16 %v596
        %v2344 = vunpack.c.l.b16 %v597
        %v2345 = vunpack.c.h.b16 %v597
        %v2346 = vunpack.c.l.b16 %v598
        %v2347 = vunpack.c.h.b16 %v598
        %v2348 = vunpack.c.l.b16 %v599
        %v2349 = vunpack.c.h.b16 %v599
        %v2350 = vunpack.c.l.b16 %v600
        %v2351 = vunpack.c.h.b16 %v600
        %v2352 = vunpack.c.l.b16 %v601
        %v2353 = vunpack.c.h.b16 %v601
        %v2354 = vunpack.c.l.b16 %v602
        %v2355 = vunpack.c.h.b16 %v602
        %v2356 = vunpack.c.l.b16 %v603
        %v2357 = vunpack.c.h.b16 %v603
        %v2358 = vunpack.c.l.b16 %v604
        %v2359 = vunpack.c.h.b16 %v604
        %v2360 = vunpack.c.l.b16 %v605
        %v2361 = vunpack.c.h.b16 %v605
        %v2362 = vunpack.c.l.b16 %v606
        %v2363 = vunpack.c.h.b16 %v606
        %v2364 = vunpack.c.l.b16 %v607
        %v2365 = vunpack.c.h.b16 %v607
        %v2366 = vunpack.c.l.b16 %v608
        %v2367 = vunpack.c.h.b16 %v608
        %v2368 = vunpack.c.l.b16 %v609
        %v2369 = vunpack.c.h.b16 %v609
        %v2370 = vunpack.c.l.b16 %v610
        %v2371 = vunpack.c.h.b16 %v610
        %v2372 = vunpack.c.l.b16 %v611
        %v2373 = vunpack.c.h.b16 %v611
        %v2374 = vunpack.c.l.b16 %v612
        %v2375 = vunpack.c.h.b16 %v612
        %v2376 = vunpack.c.l.b16 %v613
        %v2377 = vunpack.c.h.b16 %v613
        %v2378 = vunpack.c.l.b16 %v614
        %v2379 = vunpack.c.h.b16 %v614
        %v2380 = vunpack.c.l.b16 %v615
        %v2381 = vunpack.c.h.b16 %v615
        %v2382 = vunpack.c.l.b16 %v616
        %v2383 = vunpack.c.h.b16 %v616
        %v2384 = vunpack.c.l.b16 %v617
        %v2385 = vunpack.c.h.b16 %v617
        %v2386 = vunpack.c.l.b16 %v618
        %v2387 = vunpack.c.h.b16 %v618
        %v2388 = vunpack.c.l.b16 %v619
        %v2389 = vunpack.c.h.b16 %v619
        %v2390 = vunpack.c.l.b16 %v620
        %v2391 = vunpack.c.h.b16 %v620
        %v2392 = vunpack.c.l.b16 %v621
        %v2393 = vunpack.c.h.b16 %v621
        %v2394 = vunpack.c.l.b16 %v622
        %v2395 = vunpack.c.h.b16 %v622
        %v2396 = vunpack.c.l.b16 %v623
        %v2397 = vunpack.c.h.b16 %v623
        %v2398 = vunpack.c.l.b16 %v624
        %v2399 = vunpack.c.h.b16 %v624
        %v2400 = vunpack.c.l.b16 %v625
        %v2401 = vunpack.c.h.b16 %v625
        %v2402 = vunpack.c.l.b16 %v626
        %v2403 = vunpack.c.h.b16 %v626
        %v2404 = vunpack.c.l.b16 %v627
        %v2405 = vunpack.c.h.b16 %v627
        %v2406 = vunpack.c.l.b16 %v628
        %v2407 = vunpack.c.h.b16 %v628
        %v2408 = vunpack.c.l.b16 %v629
        %v2409 = vunpack.c.h.b16 %v629
        %v2410 = vunpack.c.l.b16 %v630
        %v2411 = vunpack.c.h.b16 %v630
        %v2412 = vunpack.c.l.b16 %v631
        %v2413 = vunpack.c.h.b16 %v631
        %v2414 = vunpack.c.l.b16 %v632
        %v2415 = vunpack.c.h.b16 %v632
        %v2416 = vunpack.c.l.b16 %v633
        %v2417 = vunpack.c.h.b16 %v633
        %v2418 = vunpack.c.l.b16 %v634
        %v2419 = vunpack.c.h.b16 %v634
        %v2420 = vunpack.c.l.b16 %v635
        %v2421 = vunpack.c.h.b16 %v635
        %v2422 = vunpack.c.l.b16 %v636
        %v2423 = vunpack.c.h.b16 %v636
        %v2424 = vunpack.c.l.b16 %v637
        %v2425 = vunpack.c.h.b16 %v637
        %v2426 = vunpack.c.l.b16 %v638
        %v2427 = vunpack.c.h.b16 %v638
        %v2428 = vunpack.c.l.b16 %v639
        %v2429 = vunpack.c.h.b16 %v639
        %v2430 = vunpack.c.l.b16 %v640
        %v2431 = vunpack.c.h.b16 %v640
        %v2432 = vunpack.c.l.b16 %v641
        %v2433 = vunpack.c.h.b16 %v641
        %v2434 = vunpack.c.l.b16 %v642
        %v2435 = vunpack.c.h.b16 %v642
        %v2436 = vunpack.c.l.b16 %v643
        %v2437 = vunpack.c.h.b16 %v643
        %v2438 = vunpack.c.l.b16 %v644
        %v2439 = vunpack.c.h.b16 %v644
        %v2440 = vunpack.c.l.b16 %v645
        %v2441 = vunpack.c.h.b16 %v645
        %v2442 = vunpack.c.l.b16 %v646
        %v2443 = vunpack.c.h.b16 %v646
        %v2444 = vunpack.c.l.b16 %v647
        %v2445 = vunpack.c.h.b16 %v647
        %v2446 = vunpack.c.l.b16 %v648
        %v2447 = vunpack.c.h.b16 %v648
        %v2448 = vunpack.c.l.b16 %v649
        %v2449 = vunpack.c.h.b16 %v649
        %v2450 = vunpack.c.l.b16 %v650
        %v2451 = vunpack.c.h.b16 %v650
        %v2452 = vunpack.c.l.b16 %v651
        %v2453 = vunpack.c.h.b16 %v651
        %v2454 = vunpack.c.l.b16 %v652
        %v2455 = vunpack.c.h.b16 %v652
        %v2456 = vunpack.c.l.b16 %v653
        %v2457 = vunpack.c.h.b16 %v653
        %v2458 = vunpack.c.l.b16 %v654
        %v2459 = vunpack.c.h.b16 %v654
        %v2460 = vunpack.c.l.b16 %v655
        %v2461 = vunpack.c.h.b16 %v655
        %v2462 = vunpack.c.l.b16 %v656
        %v2463 = vunpack.c.h.b16 %v656
        %v2464 = vunpack.c.l.b16 %v657
        %v2465 = vunpack.c.h.b16 %v657
        %v2466 = vunpack.c.l.b16 %v658
        %v2467 = vunpack.c.h.b16 %v658
        %v2468 = vunpack.c.l.b16 %v659
        %v2469 = vunpack.c.h.b16 %v659
        %v2470 = vunpack.c.l.b16 %v660
        %v2471 = vunpack.c.h.b16 %v660
        %v2472 = vunpack.c.l.b16 %v661
        %v2473 = vunpack.c.h.b16 %v661
        %v2474 = vunpack.c.l.b16 %v662
        %v2475 = vunpack.c.h.b16 %v662
        %v2476 = vunpack.c.l.b16 %v663
        %v2477 = vunpack.c.h.b16 %v663
        %v2478 = vunpack.c.l.b16 %v664
        %v2479 = vunpack.c.h.b16 %v664
        %v2480 = vunpack.c.l.b16 %v665
        %v2481 = vunpack.c.h.b16 %v665
        %v2482 = vunpack.c.l.b16 %v666
        %v2483 = vunpack.c.h.b16 %v666
        %v2484 = vunpack.c.l.b16 %v667
        %v2485 = vunpack.c.h.b16 %v667
        %v2486 = vunpack.c.l.b16 %v668
        %v2487 = vunpack.c.h.b16 %v668
        %v2488 = vunpack.c.l.b16 %v669
        %v2489 = vunpack.c.h.b16 %v669
        %v2490 = vunpack.c.l.b16 %v670
        %v2491 = vunpack.c.h.b16 %v670
        %v2492 = vunpack.c.l.b16 %v671
        %v2493 = vunpack.c.h.b16 %v671
        %v2494 = vunpack.c.l.b16 %v672
        %v2495 = vunpack.c.h.b16 %v672
        %v2496 = vunpack.c.l.b16 %v673
        %v2497 = vunpack.c.h.b16 %v673
        %v2498 = vunpack.c.l.b16 %v674
        %v2499 = vunpack.c.h.b16 %v674
        %v2500 = vunpack.c.l.b16 %v675
        %v2501 = vunpack.c.h.b16 %v675
        %v2502 = vunpack.c.l.b16 %v676
        %v2503 = vunpack.c.h.b16 %v676
        %v2504 = vunpack.c.l.b16 %v677
        %v2505 = vunpack.c.h.b16 %v677
        %v2506 = vunpack.c.l.b16 %v678
        %v2507 = vunpack.c.h.b16 %v678
        %v2508 = vunpack.c.l.b16 %v679
        %v2509 = vunpack.c.h.b16 %v679
        %v2510 = vunpack.c.l.b16 %v680
        %v2511 = vunpack.c.h.b16 %v680
        %v2512 = vunpack.c.l.b16 %v681
        %v2513 = vunpack.c.h.b16 %v681
        %v2514 = vunpack.c.l.b16 %v682
        %v2515 = vunpack.c.h.b16 %v682
        %v2516 = vunpack.c.l.b16 %v683
        %v2517 = vunpack.c.h.b16 %v683
        %v2518 = vunpack.c.l.b16 %v684
        %v2519 = vunpack.c.h.b16 %v684
        %v2520 = vunpack.c.l.b16 %v685
        %v2521 = vunpack.c.h.b16 %v685
        %v2522 = vunpack.c.l.b16 %v686
        %v2523 = vunpack.c.h.b16 %v686
        %v2524 = vunpack.c.l.b16 %v687
        %v2525 = vunpack.c.h.b16 %v687
        %v2526 = vunpack.c.l.b16 %v688
        %v2527 = vunpack.c.h.b16 %v688
        %v2528 = vunpack.c.l.b16 %v689
        %v2529 = vunpack.c.h.b16 %v689
        %v2530 = vunpack.c.l.b16 %v690
        %v2531 = vunpack.c.h.b16 %v690
        %v2532 = vunpack.c.l.b16 %v691
        %v2533 = vunpack.c.h.b16 %v691
        %v2534 = vunpack.c.l.b16 %v692
        %v2535 = vunpack.c.h.b16 %v692
        %v2536 = vunpack.c.l.b16 %v693
        %v2537 = vunpack.c.h.b16 %v693
        %v2538 = vunpack.c.l.b16 %v694
        %v2539 = vunpack.c.h.b16 %v694
        %v2540 = vunpack.c.l.b16 %v695
        %v2541 = vunpack.c.h.b16 %v695
        %v2542 = vunpack.c.l.b16 %v696
        %v2543 = vunpack.c.h.b16 %v696
        %v2544 = vunpack.c.l.b16 %v697
        %v2545 = vunpack.c.h.b16 %v697
        %v2546 = vunpack.c.l.b16 %v698
        %v2547 = vunpack.c.h.b16 %v698
        %v2548 = vunpack.c.l.b16 %v699
        %v2549 = vunpack.c.h.b16 %v699
        %v2550 = vunpack.c.l.b16 %v700
        %v2551 = vunpack.c.h.b16 %v700
        %v2552 = vunpack.c.l.b16 %v701
        %v2553 = vunpack.c.h.b16 %v701
        %v2554 = vunpack.c.l.b16 %v702
        %v2555 = vunpack.c.h.b16 %v702
        %v2556 = vunpack.c.l.b16 %v703
        %v2557 = vunpack.c.h.b16 %v703
        %v2558 = vunpack.c.l.b16 %v704
        %v2559 = vunpack.c.h.b16 %v704
        %v2560 = vunpack.c.l.b16 %v705
        %v2561 = vunpack.c.h.b16 %v705
        %v2562 = vunpack.c.l.b16 %v706
        %v2563 = vunpack.c.h.b16 %v706
        %v2564 = vunpack.c.l.b16 %v707
        %v2565 = vunpack.c.h.b16 %v707
        %v2566 = vunpack.c.l.b16 %v708
        %v2567 = vunpack.c.h.b16 %v708
        %v2568 = vunpack.c.l.b16 %v709
        %v2569 = vunpack.c.h.b16 %v709
        %v2570 = vunpack.c.l.b16 %v710
        %v2571 = vunpack.c.h.b16 %v710
        %v2572 = vunpack.c.l.b16 %v711
        %v2573 = vunpack.c.h.b16 %v711
        %v2574 = vunpack.c.l.b16 %v712
        %v2575 = vunpack.c.h.b16 %v712
        %v2576 = vunpack.c.l.b16 %v713
        %v2577 = vunpack.c.h.b16 %v713
        %v2578 = vunpack.c.l.b16 %v714
        %v2579 = vunpack.c.h.b16 %v714
        %v2580 = vunpack.c.l.b16 %v715
        %v2581 = vunpack.c.h.b16 %v715
        %v2582 = vunpack.c.l.b16 %v716
        %v2583 = vunpack.c.h.b16 %v716
        %v2584 = vunpack.c.l.b16 %v717
        %v2585 = vunpack.c.h.b16 %v717
        %v2586 = vunpack.c.l.b16 %v718
        %v2587 = vunpack.c.h.b16 %v718
        %v2588 = vunpack.c.l.b16 %v719
        %v2589 = vunpack.c.h.b16 %v719
        %v2590 = vunpack.c.l.b16 %v720
        %v2591 = vunpack.c.h.b16 %v720
        %v2592 = vunpack.c.l.b16 %v721
        %v2593 = vunpack.c.h.b16 %v721
        %v2594 = vunpack.c.l.b16 %v722
        %v2595 = vunpack.c.h.b16 %v722
        %v2596 = vunpack.c.l.b16 %v723
        %v2597 = vunpack.c.h.b16 %v723
        %v2598 = vunpack.c.l.b16 %v724
        %v2599 = vunpack.c.h.b16 %v724
        %v2600 = vunpack.c.l.b16 %v725
        %v2601 = vunpack.c.h.b16 %v725
        %v2602 = vunpack.c.l.b16 %v726
        %v2603 = vunpack.c.h.b16 %v726
        %v2604 = vunpack.c.l.b16 %v727
        %v2605 = vunpack.c.h.b16 %v727
        %v2606 = vunpack.c.l.b16 %v728
        %v2607 = vunpack.c.h.b16 %v728
        %v2608 = vunpack.c.l.b16 %v729
        %v2609 = vunpack.c.h.b16 %v729
        %v2610 = vunpack.c.l.b16 %v730
        %v2611 = vunpack.c.h.b16 %v730
        %v2612 = vunpack.c.l.b16 %v731
        %v2613 = vunpack.c.h.b16 %v731
        %v2614 = vunpack.c.l.b16 %v732
        %v2615 = vunpack.c.h.b16 %v732
        %v2616 = vunpack.c.l.b16 %v733
        %v2617 = vunpack.c.h.b16 %v733
        %v2618 = vunpack.c.l.b16 %v734
        %v2619 = vunpack.c.h.b16 %v734
        %v2620 = vunpack.c.l.b16 %v735
        %v2621 = vunpack.c.h.b16 %v735
        %v2622 = vunpack.c.l.b16 %v736
        %v2623 = vunpack.c.h.b16 %v736
        %v2624 = vunpack.c.l.b16 %v737
        %v2625 = vunpack.c.h.b16 %v737
        %v2626 = vunpack.c.l.b16 %v738
        %v2627 = vunpack.c.h.b16 %v738
        %v2628 = vunpack.c.l.b16 %v739
        %v2629 = vunpack.c.h.b16 %v739
        %v2630 = vunpack.c.l.b16 %v740
        %v2631 = vunpack.c.h.b16 %v740
        %v2632 = vunpack.c.l.b16 %v741
        %v2633 = vunpack.c.h.b16 %v741
        %v2634 = vunpack.c.l.b16 %v742
        %v2635 = vunpack.c.h.b16 %v742
        %v2636 = vunpack.c.l.b16 %v743
        %v2637 = vunpack.c.h.b16 %v743
        %v2638 = vunpack.c.l.b16 %v744
        %v2639 = vunpack.c.h.b16 %v744
        %v2640 = vunpack.c.l.b16 %v745
        %v2641 = vunpack.c.h.b16 %v745
        %v2642 = vunpack.c.l.b16 %v746
        %v2643 = vunpack.c.h.b16 %v746
        %v2644 = vunpack.c.l.b16 %v747
        %v2645 = vunpack.c.h.b16 %v747
        %v2646 = vunpack.c.l.b16 %v748
        %v2647 = vunpack.c.h.b16 %v748
        %v2648 = vunpack.c.l.b16 %v749
        %v2649 = vunpack.c.h.b16 %v749
        %v2650 = vunpack.c.l.b16 %v750
        %v2651 = vunpack.c.h.b16 %v750
        %v2652 = vunpack.c.l.b16 %v751
        %v2653 = vunpack.c.h.b16 %v751
        %v2654 = vunpack.c.l.b16 %v752
        %v2655 = vunpack.c.h.b16 %v752
        %v2656 = vunpack.c.l.b16 %v753
        %v2657 = vunpack.c.h.b16 %v753
        %v2658 = vunpack.c.l.b16 %v754
        %v2659 = vunpack.c.h.b16 %v754
        %v2660 = vunpack.c.l.b16 %v755
        %v2661 = vunpack.c.h.b16 %v755
        %v2662 = vunpack.c.l.b16 %v756
        %v2663 = vunpack.c.h.b16 %v756
        %v2664 = vunpack.c.l.b16 %v757
        %v2665 = vunpack.c.h.b16 %v757
        %v2666 = vunpack.c.l.b16 %v758
        %v2667 = vunpack.c.h.b16 %v758
        %v2668 = vunpack.c.l.b16 %v759
        %v2669 = vunpack.c.h.b16 %v759
        %v2670 = vunpack.c.l.b16 %v760
        %v2671 = vunpack.c.h.b16 %v760
        %v2672 = vunpack.c.l.b16 %v761
        %v2673 = vunpack.c.h.b16 %v761
        %v2674 = vunpack.c.l.b16 %v762
        %v2675 = vunpack.c.h.b16 %v762
        %v2676 = vunpack.c.l.b16 %v763
        %v2677 = vunpack.c.h.b16 %v763
        %v2678 = vunpack.c.l.b16 %v764
        %v2679 = vunpack.c.h.b16 %v764
        %v2680 = vunpack.c.l.b16 %v765
        %v2681 = vunpack.c.h.b16 %v765
        %v2682 = vunpack.c.l.b16 %v766
        %v2683 = vunpack.c.h.b16 %v766
        %v2684 = vunpack.c.l.b16 %v767
        %v2685 = vunpack.c.h.b16 %v767
        %v2686 = vunpack.c.l.b16 %v768
        %v2687 = vunpack.c.h.b16 %v768
        %v2688 = vunpack.c.l.b16 %v769
        %v2689 = vunpack.c.h.b16 %v769
        %v2690 = vunpack.c.l.b16 %v770
        %v2691 = vunpack.c.h.b16 %v770
        %v2692 = vunpack.c.l.b16 %v771
        %v2693 = vunpack.c.h.b16 %v771
        %v2694 = vpack.c.b16 %v1554, %v1542
        %v2695 = vpack.c.b16 %v1555, %v1543
        %v2696 = vpack.c.b16 %v1556, %v1544
        %v2697 = vpack.c.b16 %v1557, %v1545
        %v2698 = vpack.c.b16 %v1558, %v1546
        %v2699 = vpack.c.b16 %v1559, %v1547
        %v2700 = vpack.c.b16 %v1560, %v1548
        %v2701 = vpack.c.b16 %v1561, %v1549
        %v2702 = vpack.c.b16 %v1562, %v1550
        %v2703 = vpack.c.b16 %v1563, %v1551
        %v2704 = vpack.c.b16 %v1564, %v1552
        %v2705 = vpack.c.b16 %v1565, %v1553
        %v2706 = vpack.c.b16 %v1578, %v1566
        %v2707 = vpack.c.b16 %v1579, %v1567
        %v2708 = vpack.c.b16 %v1580, %v1568
        %v2709 = vpack.c.b16 %v1581, %v1569
        %v2710 = vpack.c.b16 %v1582, %v1570
        %v2711 = vpack.c.b16 %v1583, %v1571
        %v2712 = vpack.c.b16 %v1584, %v1572
        %v2713 = vpack.c.b16 %v1585, %v1573
        %v2714 = vpack.c.b16 %v1586, %v1574
        %v2715 = vpack.c.b16 %v1587, %v1575
        %v2716 = vpack.c.b16 %v1588, %v1576
        %v2717 = vpack.c.b16 %v1589, %v1577
        %v2718 = vpack.c.b16 %v1602, %v1590
        %v2719 = vpack.c.b16 %v1603, %v1591
        %v2720 = vpack.c.b16 %v1604, %v1592
        %v2721 = vpack.c.b16 %v1605, %v1593
        %v2722 = vpack.c.b16 %v1606, %v1594
        %v2723 = vpack.c.b16 %v1607, %v1595
        %v2724 = vpack.c.b16 %v1608, %v1596
        %v2725 = vpack.c.b16 %v1609, %v1597
        %v2726 = vpack.c.b16 %v1610, %v1598
        %v2727 = vpack.c.b16 %v1611, %v1599
        %v2728 = vpack.c.b16 %v1612, %v1600
        %v2729 = vpack.c.b16 %v1613, %v1601
        %v2730 = vpack.c.b16 %v1626, %v1614
        %v2731 = vpack.c.b16 %v1627, %v1615
        %v2732 = vpack.c.b16 %v1628, %v1616
        %v2733 = vpack.c.b16 %v1629, %v1617
        %v2734 = vpack.c.b16 %v1630, %v1618
        %v2735 = vpack.c.b16 %v1631, %v1619
        %v2736 = vpack.c.b16 %v1632, %v1620
        %v2737 = vpack.c.b16 %v1633, %v1621
        %v2738 = vpack.c.b16 %v1634, %v1622
        %v2739 = vpack.c.b16 %v1635, %v1623
        %v2740 = vpack.c.b16 %v1636, %v1624
        %v2741 = vpack.c.b16 %v1637, %v1625
        %v2742 = vpack.c.b16 %v1650, %v1638
        %v2743 = vpack.c.b16 %v1651, %v1639
        %v2744 = vpack.c.b16 %v1652, %v1640
        %v2745 = vpack.c.b16 %v1653, %v1641
        %v2746 = vpack.c.b16 %v1654, %v1642
        %v2747 = vpack.c.b16 %v1655, %v1643
        %v2748 = vpack.c.b16 %v1656, %v1644
        %v2749 = vpack.c.b16 %v1657, %v1645
        %v2750 = vpack.c.b16 %v1658, %v1646
        %v2751 = vpack.c.b16 %v1659, %v1647
        %v2752 = vpack.c.b16 %v1660, %v1648
        %v2753 = vpack.c.b16 %v1661, %v1649
        %v2754 = vpack.c.b16 %v1674, %v1662
        %v2755 = vpack.c.b16 %v1675, %v1663
        %v2756 = vpack.c.b16 %v1676, %v1664
        %v2757 = vpack.c.b16 %v1677, %v1665
        %v2758 = vpack.c.b16 %v1678, %v1666
        %v2759 = vpack.c.b16 %v1679, %v1667
        %v2760 = vpack.c.b16 %v1680, %v1668
        %v2761 = vpack.c.b16 %v1681, %v1669
        %v2762 = vpack.c.b16 %v1682, %v1670
        %v2763 = vpack.c.b16 %v1683, %v1671
        %v2764 = vpack.c.b16 %v1684, %v1672
        %v2765 = vpack.c.b16 %v1685, %v1673
        %v2766 = vpack.c.b16 %v1698, %v1686
        %v2767 = vpack.c.b16 %v1699, %v1687
        %v2768 = vpack.c.b16 %v1700, %v1688
        %v2769 = vpack.c.b16 %v1701, %v1689
        %v2770 = vpack.c.b16 %v1702, %v1690
        %v2771 = vpack.c.b16 %v1703, %v1691
        %v2772 = vpack.c.b16 %v1704, %v1692
        %v2773 = vpack.c.b16 %v1705, %v1693
        %v2774 = vpack.c.b16 %v1706, %v1694
        %v2775 = vpack.c.b16 %v1707, %v1695
        %v2776 = vpack.c.b16 %v1708, %v1696
        %v2777 = vpack.c.b16 %v1709, %v1697
        %v2778 = vpack.c.b16 %v1722, %v1710
        %v2779 = vpack.c.b16 %v1723, %v1711
        %v2780 = vpack.c.b16 %v1724, %v1712
        %v2781 = vpack.c.b16 %v1725, %v1713
        %v2782 = vpack.c.b16 %v1726, %v1714
        %v2783 = vpack.c.b16 %v1727, %v1715
        %v2784 = vpack.c.b16 %v1728, %v1716
        %v2785 = vpack.c.b16 %v1729, %v1717
        %v2786 = vpack.c.b16 %v1730, %v1718
        %v2787 = vpack.c.b16 %v1731, %v1719
        %v2788 = vpack.c.b16 %v1732, %v1720
        %v2789 = vpack.c.b16 %v1733, %v1721
        %v2790 = vpack.c.b16 %v1746, %v1734
        %v2791 = vpack.c.b16 %v1747, %v1735
        %v2792 = vpack.c.b16 %v1748, %v1736
        %v2793 = vpack.c.b16 %v1749, %v1737
        %v2794 = vpack.c.b16 %v1750, %v1738
        %v2795 = vpack.c.b16 %v1751, %v1739
        %v2796 = vpack.c.b16 %v1752, %v1740
        %v2797 = vpack.c.b16 %v1753, %v1741
        %v2798 = vpack.c.b16 %v1754, %v1742
        %v2799 = vpack.c.b16 %v1755, %v1743
        %v2800 = vpack.c.b16 %v1756, %v1744
        %v2801 = vpack.c.b16 %v1757, %v1745
        %v2802 = vpack.c.b16 %v1770, %v1758
        %v2803 = vpack.c.b16 %v1771, %v1759
        %v2804 = vpack.c.b16 %v1772, %v1760
        %v2805 = vpack.c.b16 %v1773, %v1761
        %v2806 = vpack.c.b16 %v1774, %v1762
        %v2807 = vpack.c.b16 %v1775, %v1763
        %v2808 = vpack.c.b16 %v1776, %v1764
        %v2809 = vpack.c.b16 %v1777, %v1765
        %v2810 = vpack.c.b16 %v1778, %v1766
        %v2811 = vpack.c.b16 %v1779, %v1767
        %v2812 = vpack.c.b16 %v1780, %v1768
        %v2813 = vpack.c.b16 %v1781, %v1769
        %v2814 = vpack.c.b16 %v1794, %v1782
        %v2815 = vpack.c.b16 %v1795, %v1783
        %v2816 = vpack.c.b16 %v1796, %v1784
        %v2817 = vpack.c.b16 %v1797, %v1785
        %v2818 = vpack.c.b16 %v1798, %v1786
        %v2819 = vpack.c.b16 %v1799, %v1787
        %v2820 = vpack.c.b16 %v1800, %v1788
        %v2821 = vpack.c.b16 %v1801, %v1789
        %v2822 = vpack.c.b16 %v1802, %v1790
        %v2823 = vpack.c.b16 %v1803, %v1791
        %v2824 = vpack.c.b16 %v1804, %v1792
        %v2825 = vpack.c.b16 %v1805, %v1793
        %v2826 = vpack.c.b16 %v1818, %v1806
        %v2827 = vpack.c.b16 %v1819, %v1807
        %v2828 = vpack.c.b16 %v1820, %v1808
        %v2829 = vpack.c.b16 %v1821, %v1809
        %v2830 = vpack.c.b16 %v1822, %v1810
        %v2831 = vpack.c.b16 %v1823, %v1811
        %v2832 = vpack.c.b16 %v1824, %v1812
        %v2833 = vpack.c.b16 %v1825, %v1813
        %v2834 = vpack.c.b16 %v1826, %v1814
        %v2835 = vpack.c.b16 %v1827, %v1815
        %v2836 = vpack.c.b16 %v1828, %v1816
        %v2837 = vpack.c.b16 %v1829, %v1817
        %v2838 = vpack.c.b16 %v1842, %v1830
        %v2839 = vpack.c.b16 %v1843, %v1831
        %v2840 = vpack.c.b16 %v1844, %v1832
        %v2841 = vpack.c.b16 %v1845, %v1833
        %v2842 = vpack.c.b16 %v1846, %v1834
        %v2843 = vpack.c.b16 %v1847, %v1835
        %v2844 = vpack.c.b16 %v1848, %v1836
        %v2845 = vpack.c.b16 %v1849, %v1837
        %v2846 = vpack.c.b16 %v1850, %v1838
        %v2847 = vpack.c.b16 %v1851, %v1839
        %v2848 = vpack.c.b16 %v1852, %v1840
        %v2849 = vpack.c.b16 %v1853, %v1841
        %v2850 = vpack.c.b16 %v1866, %v1854
        %v2851 = vpack.c.b16 %v1867, %v1855
        %v2852 = vpack.c.b16 %v1868, %v1856
        %v2853 = vpack.c.b16 %v1869, %v1857
        %v2854 = vpack.c.b16 %v1870, %v1858
        %v2855 = vpack.c.b16 %v1871, %v1859
        %v2856 = vpack.c.b16 %v1872, %v1860
        %v2857 = vpack.c.b16 %v1873, %v1861
        %v2858 = vpack.c.b16 %v1874, %v1862
        %v2859 = vpack.c.b16 %v1875, %v1863
        %v2860 = vpack.c.b16 %v1876, %v1864
        %v2861 = vpack.c.b16 %v1877, %v1865
        %v2862 = vpack.c.b16 %v1890, %v1878
        %v2863 = vpack.c.b16 %v1891, %v1879
        %v2864 = vpack.c.b16 %v1892, %v1880
        %v2865 = vpack.c.b16 %v1893, %v1881
        %v2866 = vpack.c.b16 %v1894, %v1882
        %v2867 = vpack.c.b16 %v1895, %v1883
        %v2868 = vpack.c.b16 %v1896, %v1884
        %v2869 = vpack.c.b16 %v1897, %v1885
        %v2870 = vpack.c.b16 %v1898, %v1886
        %v2871 = vpack.c.b16 %v1899, %v1887
        %v2872 = vpack.c.b16 %v1900, %v1888
        %v2873 = vpack.c.b16 %v1901, %v1889
        %v2874 = vpack.c.b16 %v1914, %v1902
        %v2875 = vpack.c.b16 %v1915, %v1903
        %v2876 = vpack.c.b16 %v1916, %v1904
        %v2877 = vpack.c.b16 %v1917, %v1905
        %v2878 = vpack.c.b16 %v1918, %v1906
        %v2879 = vpack.c.b16 %v1919, %v1907
        %v2880 = vpack.c.b16 %v1920, %v1908
        %v2881 = vpack.c.b16 %v1921, %v1909
        %v2882 = vpack.c.b16 %v1922, %v1910
        %v2883 = vpack.c.b16 %v1923, %v1911
        %v2884 = vpack.c.b16 %v1924, %v1912
        %v2885 = vpack.c.b16 %v1925, %v1913
        %v2886 = vpack.c.b16 %v1938, %v1926
        %v2887 = vpack.c.b16 %v1939, %v1927
        %v2888 = vpack.c.b16 %v1940, %v1928
        %v2889 = vpack.c.b16 %v1941, %v1929
        %v2890 = vpack.c.b16 %v1942, %v1930
        %v2891 = vpack.c.b16 %v1943, %v1931
        %v2892 = vpack.c.b16 %v1944, %v1932
        %v2893 = vpack.c.b16 %v1945, %v1933
        %v2894 = vpack.c.b16 %v1946, %v1934
        %v2895 = vpack.c.b16 %v1947, %v1935
        %v2896 = vpack.c.b16 %v1948, %v1936
        %v2897 = vpack.c.b16 %v1949, %v1937
        %v2898 = vpack.c.b16 %v1962, %v1950
        %v2899 = vpack.c.b16 %v1963, %v1951
        %v2900 = vpack.c.b16 %v1964, %v1952
        %v2901 = vpack.c.b16 %v1965, %v1953
        %v2902 = vpack.c.b16 %v1966, %v1954
        %v2903 = vpack.c.b16 %v1967, %v1955
        %v2904 = vpack.c.b16 %v1968, %v1956
        %v2905 = vpack.c.b16 %v1969, %v1957
        %v2906 = vpack.c.b16 %v1970, %v1958
        %v2907 = vpack.c.b16 %v1971, %v1959
        %v2908 = vpack.c.b16 %v1972, %v1960
        %v2909 = vpack.c.b16 %v1973, %v1961
        %v2910 = vpack.c.b16 %v1986, %v1974
        %v2911 = vpack.c.b16 %v1987, %v1975
        %v2912 = vpack.c.b16 %v1988, %v1976
        %v2913 = vpack.c.b16 %v1989, %v1977
        %v2914 = vpack.c.b16 %v1990, %v1978
        %v2915 = vpack.c.b16 %v1991, %v1979
        %v2916 = vpack.c.b16 %v1992, %v1980
        %v2917 = vpack.c.b16 %v1993, %v1981
        %v2918 = vpack.c.b16 %v1994, %v1982
        %v2919 = vpack.c.b16 %v1995, %v1983
        %v2920 = vpack.c.b16 %v1996, %v1984
        %v2921 = vpack.c.b16 %v1997, %v1985
        %v2922 = vpack.c.b16 %v2010, %v1998
        %v2923 = vpack.c.b16 %v2011, %v1999
        %v2924 = vpack.c.b16 %v2012, %v2000
        %v2925 = vpack.c.b16 %v2013, %v2001
        %v2926 = vpack.c.b16 %v2014, %v2002
        %v2927 = vpack.c.b16 %v2015, %v2003
        %v2928 = vpack.c.b16 %v2016, %v2004
        %v2929 = vpack.c.b16 %v2017, %v2005
        %v2930 = vpack.c.b16 %v2018, %v2006
        %v2931 = vpack.c.b16 %v2019, %v2007
        %v2932 = vpack.c.b16 %v2020, %v2008
        %v2933 = vpack.c.b16 %v2021, %v2009
        %v2934 = vpack.c.b16 %v2034, %v2022
        %v2935 = vpack.c.b16 %v2035, %v2023
        %v2936 = vpack.c.b16 %v2036, %v2024
        %v2937 = vpack.c.b16 %v2037, %v2025
        %v2938 = vpack.c.b16 %v2038, %v2026
        %v2939 = vpack.c.b16 %v2039, %v2027
        %v2940 = vpack.c.b16 %v2040, %v2028
        %v2941 = vpack.c.b16 %v2041, %v2029
        %v2942 = vpack.c.b16 %v2042, %v2030
        %v2943 = vpack.c.b16 %v2043, %v2031
        %v2944 = vpack.c.b16 %v2044, %v2032
        %v2945 = vpack.c.b16 %v2045, %v2033
        %v2946 = vpack.c.b16 %v2058, %v2046
        %v2947 = vpack.c.b16 %v2059, %v2047
        %v2948 = vpack.c.b16 %v2060, %v2048
        %v2949 = vpack.c.b16 %v2061, %v2049
        %v2950 = vpack.c.b16 %v2062, %v2050
        %v2951 = vpack.c.b16 %v2063, %v2051
        %v2952 = vpack.c.b16 %v2064, %v2052
        %v2953 = vpack.c.b16 %v2065, %v2053
        %v2954 = vpack.c.b16 %v2066, %v2054
        %v2955 = vpack.c.b16 %v2067, %v2055
        %v2956 = vpack.c.b16 %v2068, %v2056
        %v2957 = vpack.c.b16 %v2069, %v2057
        %v2958 = vpack.c.b16 %v2082, %v2070
        %v2959 = vpack.c.b16 %v2083, %v2071
        %v2960 = vpack.c.b16 %v2084, %v2072
        %v2961 = vpack.c.b16 %v2085, %v2073
        %v2962 = vpack.c.b16 %v2086, %v2074
        %v2963 = vpack.c.b16 %v2087, %v2075
        %v2964 = vpack.c.b16 %v2088, %v2076
        %v2965 = vpack.c.b16 %v2089, %v2077
        %v2966 = vpack.c.b16 %v2090, %v2078
        %v2967 = vpack.c.b16 %v2091, %v2079
        %v2968 = vpack.c.b16 %v2092, %v2080
        %v2969 = vpack.c.b16 %v2093, %v2081
        %v2970 = vpack.c.b16 %v2106, %v2094
        %v2971 = vpack.c.b16 %v2107, %v2095
        %v2972 = vpack.c.b16 %v2108, %v2096
        %v2973 = vpack.c.b16 %v2109, %v2097
        %v2974 = vpack.c.b16 %v2110, %v2098
        %v2975 = vpack.c.b16 %v2111, %v2099
        %v2976 = vpack.c.b16 %v2112, %v2100
        %v2977 = vpack.c.b16 %v2113, %v2101
        %v2978 = vpack.c.b16 %v2114, %v2102
        %v2979 = vpack.c.b16 %v2115, %v2103
        %v2980 = vpack.c.b16 %v2116, %v2104
        %v2981 = vpack.c.b16 %v2117, %v2105
        %v2982 = vpack.c.b16 %v2130, %v2118
        %v2983 = vpack.c.b16 %v2131, %v2119
        %v2984 = vpack.c.b16 %v2132, %v2120
        %v2985 = vpack.c.b16 %v2133, %v2121
        %v2986 = vpack.c.b16 %v2134, %v2122
        %v2987 = vpack.c.b16 %v2135, %v2123
        %v2988 = vpack.c.b16 %v2136, %v2124
        %v2989 = vpack.c.b16 %v2137, %v2125
        %v2990 = vpack.c.b16 %v2138, %v2126
        %v2991 = vpack.c.b16 %v2139, %v2127
        %v2992 = vpack.c.b16 %v2140, %v2128
        %v2993 = vpack.c.b16 %v2141, %v2129
        %v2994 = vpack.c.b16 %v2154, %v2142
        %v2995 = vpack.c.b16 %v2155, %v2143
        %v2996 = vpack.c.b16 %v2156, %v2144
        %v2997 = vpack.c.b16 %v2157, %v2145
        %v2998 = vpack.c.b16 %v2158, %v2146
        %v2999 = vpack.c.b16 %v2159, %v2147
        %v3000 = vpack.c.b16 %v2160, %v2148
        %v3001 = vpack.c.b16 %v2161, %v2149
        %v3002 = vpack.c.b16 %v2162, %v2150
        %v3003 = vpack.c.b16 %v2163, %v2151
        %v3004 = vpack.c.b16 %v2164, %v2152
        %v3005 = vpack.c.b16 %v2165, %v2153
        %v3006 = vpack.c.b16 %v2178, %v2166
        %v3007 = vpack.c.b16 %v2179, %v2167
        %v3008 = vpack.c.b16 %v2180, %v2168
        %v3009 = vpack.c.b16 %v2181, %v2169
        %v3010 = vpack.c.b16 %v2182, %v2170
        %v3011 = vpack.c.b16 %v2183, %v2171
        %v3012 = vpack.c.b16 %v2184, %v2172
        %v3013 = vpack.c.b16 %v2185, %v2173
        %v3014 = vpack.c.b16 %v2186, %v2174
        %v3015 = vpack.c.b16 %v2187, %v2175
        %v3016 = vpack.c.b16 %v2188, %v2176
        %v3017 = vpack.c.b16 %v2189, %v2177
        %v3018 = vpack.c.b16 %v2202, %v2190
        %v3019 = vpack.c.b16 %v2203, %v2191
        %v3020 = vpack.c.b16 %v2204, %v2192
        %v3021 = vpack.c.b16 %v2205, %v2193
        %v3022 = vpack.c.b16 %v2206, %v2194
        %v3023 = vpack.c.b16 %v2207, %v2195
        %v3024 = vpack.c.b16 %v2208, %v2196
        %v3025 = vpack.c.b16 %v2209, %v2197
        %v3026 = vpack.c.b16 %v2210, %v2198
        %v3027 = vpack.c.b16 %v2211, %v2199
        %v3028 = vpack.c.b16 %v2212, %v2200
        %v3029 = vpack.c.b16 %v2213, %v2201
        %v3030 = vpack.c.b16 %v2226, %v2214
        %v3031 = vpack.c.b16 %v2227, %v2215
        %v3032 = vpack.c.b16 %v2228, %v2216
        %v3033 = vpack.c.b16 %v2229, %v2217
        %v3034 = vpack.c.b16 %v2230, %v2218
        %v3035 = vpack.c.b16 %v2231, %v2219
        %v3036 = vpack.c.b16 %v2232, %v2220
        %v3037 = vpack.c.b16 %v2233, %v2221
        %v3038 = vpack.c.b16 %v2234, %v2222
        %v3039 = vpack.c.b16 %v2235, %v2223
        %v3040 = vpack.c.b16 %v2236, %v2224
        %v3041 = vpack.c.b16 %v2237, %v2225
        %v3042 = vpack.c.b16 %v2250, %v2238
        %v3043 = vpack.c.b16 %v2251, %v2239
        %v3044 = vpack.c.b16 %v2252, %v2240
        %v3045 = vpack.c.b16 %v2253, %v2241
        %v3046 = vpack.c.b16 %v2254, %v2242
        %v3047 = vpack.c.b16 %v2255, %v2243
        %v3048 = vpack.c.b16 %v2256, %v2244
        %v3049 = vpack.c.b16 %v2257, %v2245
        %v3050 = vpack.c.b16 %v2258, %v2246
        %v3051 = vpack.c.b16 %v2259, %v2247
        %v3052 = vpack.c.b16 %v2260, %v2248
        %v3053 = vpack.c.b16 %v2261, %v2249
        %v3054 = vpack.c.b16 %v2274, %v2262
        %v3055 = vpack.c.b16 %v2275, %v2263
        %v3056 = vpack.c.b16 %v2276, %v2264
        %v3057 = vpack.c.b16 %v2277, %v2265
        %v3058 = vpack.c.b16 %v2278, %v2266
        %v3059 = vpack.c.b16 %v2279, %v2267
        %v3060 = vpack.c.b16 %v2280, %v2268
        %v3061 = vpack.c.b16 %v2281, %v2269
        %v3062 = vpack.c.b16 %v2282, %v2270
        %v3063 = vpack.c.b16 %v2283, %v2271
        %v3064 = vpack.c.b16 %v2284, %v2272
        %v3065 = vpack.c.b16 %v2285, %v2273
        %v3066 = vpack.c.b16 %v2298, %v2286
        %v3067 = vpack.c.b16 %v2299, %v2287
        %v3068 = vpack.c.b16 %v2300, %v2288
        %v3069 = vpack.c.b16 %v2301, %v2289
        %v3070 = vpack.c.b16 %v2302, %v2290
        %v3071 = vpack.c.b16 %v2303, %v2291
        %v3072 = vpack.c.b16 %v2304, %v2292
        %v3073 = vpack.c.b16 %v2305, %v2293
        %v3074 = vpack.c.b16 %v2306, %v2294
        %v3075 = vpack.c.b16 %v2307, %v2295
        %v3076 = vpack.c.b16 %v2308, %v2296
        %v3077 = vpack.c.b16 %v2309, %v2297
        %v3078 = vpack.c.b16 %v2322, %v2310
        %v3079 = vpack.c.b16 %v2323, %v2311
        %v3080 = vpack.c.b16 %v2324, %v2312
        %v3081 = vpack.c.b16 %v2325, %v2313
        %v3082 = vpack.c.b16 %v2326, %v2314
        %v3083 = vpack.c.b16 %v2327, %v2315
        %v3084 = vpack.c.b16 %v2328, %v2316
        %v3085 = vpack.c.b16 %v2329, %v2317
        %v3086 = vpack.c.b16 %v2330, %v2318
        %v3087 = vpack.c.b16 %v2331, %v2319
        %v3088 = vpack.c.b16 %v2332, %v2320
        %v3089 = vpack.c.b16 %v2333, %v2321
        %v3090 = vpack.c.b16 %v2346, %v2334
        %v3091 = vpack.c.b16 %v2347, %v2335
        %v3092 = vpack.c.b16 %v2348, %v2336
        %v3093 = vpack.c.b16 %v2349, %v2337
        %v3094 = vpack.c.b16 %v2350, %v2338
        %v3095 = vpack.c.b16 %v2351, %v2339
        %v3096 = vpack.c.b16 %v2352, %v2340
        %v3097 = vpack.c.b16 %v2353, %v2341
        %v3098 = vpack.c.b16 %v2354, %v2342
        %v3099 = vpack.c.b16 %v2355, %v2343
        %v3100 = vpack.c.b16 %v2356, %v2344
        %v3101 = vpack.c.b16 %v2357, %v2345
        %v3102 = vpack.c.b16 %v2370, %v2358
        %v3103 = vpack.c.b16 %v2371, %v2359
        %v3104 = vpack.c.b16 %v2372, %v2360
        %v3105 = vpack.c.b16 %v2373, %v2361
        %v3106 = vpack.c.b16 %v2374, %v2362
        %v3107 = vpack.c.b16 %v2375, %v2363
        %v3108 = vpack.c.b16 %v2376, %v2364
        %v3109 = vpack.c.b16 %v2377, %v2365
        %v3110 = vpack.c.b16 %v2378, %v2366
        %v3111 = vpack.c.b16 %v2379, %v2367
        %v3112 = vpack.c.b16 %v2380, %v2368
        %v3113 = vpack.c.b16 %v2381, %v2369
        %v3114 = vpack.c.b16 %v2394, %v2382
        %v3115 = vpack.c.b16 %v2395, %v2383
        %v3116 = vpack.c.b16 %v2396, %v2384
        %v3117 = vpack.c.b16 %v2397, %v2385
        %v3118 = vpack.c.b16 %v2398, %v2386
        %v3119 = vpack.c.b16 %v2399, %v2387
        %v3120 = vpack.c.b16 %v2400, %v2388
        %v3121 = vpack.c.b16 %v2401, %v2389
        %v3122 = vpack.c.b16 %v2402, %v2390
        %v3123 = vpack.c.b16 %v2403, %v2391
        %v3124 = vpack.c.b16 %v2404, %v2392
        %v3125 = vpack.c.b16 %v2405, %v2393
        %v3126 = vpack.c.b16 %v2418, %v2406
        %v3127 = vpack.c.b16 %v2419, %v2407
        %v3128 = vpack.c.b16 %v2420, %v2408
        %v3129 = vpack.c.b16 %v2421, %v2409
        %v3130 = vpack.c.b16 %v2422, %v2410
        %v3131 = vpack.c.b16 %v2423, %v2411
        %v3132 = vpack.c.b16 %v2424, %v2412
        %v3133 = vpack.c.b16 %v2425, %v2413
        %v3134 = vpack.c.b16 %v2426, %v2414
        %v3135 = vpack.c.b16 %v2427, %v2415
        %v3136 = vpack.c.b16 %v2428, %v2416
        %v3137 = vpack.c.b16 %v2429, %v2417
        %v3138 = vpack.c.b16 %v2442, %v2430
        %v3139 = vpack.c.b16 %v2443, %v2431
        %v3140 = vpack.c.b16 %v2444, %v2432
        %v3141 = vpack.c.b16 %v2445, %v2433
        %v3142 = vpack.c.b16 %v2446, %v2434
        %v3143 = vpack.c.b16 %v2447, %v2435
        %v3144 = vpack.c.b16 %v2448, %v2436
        %v3145 = vpack.c.b16 %v2449, %v2437
        %v3146 = vpack.c.b16 %v2450, %v2438
        %v3147 = vpack.c.b16 %v2451, %v2439
        %v3148 = vpack.c.b16 %v2452, %v2440
        %v3149 = vpack.c.b16 %v2453, %v2441
        %v3150 = vpack.c.b16 %v2466, %v2454
        %v3151 = vpack.c.b16 %v2467, %v2455
        %v3152 = vpack.c.b16 %v2468, %v2456
        %v3153 = vpack.c.b16 %v2469, %v2457
        %v3154 = vpack.c.b16 %v2470, %v2458
        %v3155 = vpack.c.b16 %v2471, %v2459
        %v3156 = vpack.c.b16 %v2472, %v2460
        %v3157 = vpack.c.b16 %v2473, %v2461
        %v3158 = vpack.c.b16 %v2474, %v2462
        %v3159 = vpack.c.b16 %v2475, %v2463
        %v3160 = vpack.c.b16 %v2476, %v2464
        %v3161 = vpack.c.b16 %v2477, %v2465
        %v3162 = vpack.c.b16 %v2490, %v2478
        %v3163 = vpack.c.b16 %v2491, %v2479
        %v3164 = vpack.c.b16 %v2492, %v2480
        %v3165 = vpack.c.b16 %v2493, %v2481
        %v3166 = vpack.c.b16 %v2494, %v2482
        %v3167 = vpack.c.b16 %v2495, %v2483
        %v3168 = vpack.c.b16 %v2496, %v2484
        %v3169 = vpack.c.b16 %v2497, %v2485
        %v3170 = vpack.c.b16 %v2498, %v2486
        %v3171 = vpack.c.b16 %v2499, %v2487
        %v3172 = vpack.c.b16 %v2500, %v2488
        %v3173 = vpack.c.b16 %v2501, %v2489
        %v3174 = vpack.c.b16 %v2514, %v2502
        %v3175 = vpack.c.b16 %v2515, %v2503
        %v3176 = vpack.c.b16 %v2516, %v2504
        %v3177 = vpack.c.b16 %v2517, %v2505
        %v3178 = vpack.c.b16 %v2518, %v2506
        %v3179 = vpack.c.b16 %v2519, %v2507
        %v3180 = vpack.c.b16 %v2520, %v2508
        %v3181 = vpack.c.b16 %v2521, %v2509
        %v3182 = vpack.c.b16 %v2522, %v2510
        %v3183 = vpack.c.b16 %v2523, %v2511
        %v3184 = vpack.c.b16 %v2524, %v2512
        %v3185 = vpack.c.b16 %v2525, %v2513
        %v3186 = vpack.c.b16 %v2538, %v2526
        %v3187 = vpack.c.b16 %v2539, %v2527
        %v3188 = vpack.c.b16 %v2540, %v2528
        %v3189 = vpack.c.b16 %v2541, %v2529
        %v3190 = vpack.c.b16 %v2542, %v2530
        %v3191 = vpack.c.b16 %v2543, %v2531
        %v3192 = vpack.c.b16 %v2544, %v2532
        %v3193 = vpack.c.b16 %v2545, %v2533
        %v3194 = vpack.c.b16 %v2546, %v2534
        %v3195 = vpack.c.b16 %v2547, %v2535
        %v3196 = vpack.c.b16 %v2548, %v2536
        %v3197 = vpack.c.b16 %v2549, %v2537
        %v3198 = vpack.c.b16 %v2562, %v2550
        %v3199 = vpack.c.b16 %v2563, %v2551
        %v3200 = vpack.c.b16 %v2564, %v2552
        %v3201 = vpack.c.b16 %v2565, %v2553
        %v3202 = vpack.c.b16 %v2566, %v2554
        %v3203 = vpack.c.b16 %v2567, %v2555
        %v3204 = vpack.c.b16 %v2568, %v2556
        %v3205 = vpack.c.b16 %v2569, %v2557
        %v3206 = vpack.c.b16 %v2570, %v2558
        %v3207 = vpack.c.b16 %v2571, %v2559
        %v3208 = vpack.c.b16 %v2572, %v2560
        %v3209 = vpack.c.b16 %v2573, %v2561
        %v3210 = vpack.c.b16 %v2586, %v2574
        %v3211 = vpack.c.b16 %v2587, %v2575
        %v3212 = vpack.c.b16 %v2588, %v2576
        %v3213 = vpack.c.b16 %v2589, %v2577
        %v3214 = vpack.c.b16 %v2590, %v2578
        %v3215 = vpack.c.b16 %v2591, %v2579
        %v3216 = vpack.c.b16 %v2592, %v2580
        %v3217 = vpack.c.b16 %v2593, %v2581
        %v3218 = vpack.c.b16 %v2594, %v2582
        %v3219 = vpack.c.b16 %v2595, %v2583
        %v3220 = vpack.c.b16 %v2596, %v2584
        %v3221 = vpack.c.b16 %v2597, %v2585
        %v3222 = vpack.c.b16 %v2610, %v2598
        %v3223 = vpack.c.b16 %v2611, %v2599
        %v3224 = vpack.c.b16 %v2612, %v2600
        %v3225 = vpack.c.b16 %v2613, %v2601
        %v3226 = vpack.c.b16 %v2614, %v2602
        %v3227 = vpack.c.b16 %v2615, %v2603
        %v3228 = vpack.c.b16 %v2616, %v2604
        %v3229 = vpack.c.b16 %v2617, %v2605
        %v3230 = vpack.c.b16 %v2618, %v2606
        %v3231 = vpack.c.b16 %v2619, %v2607
        %v3232 = vpack.c.b16 %v2620, %v2608
        %v3233 = vpack.c.b16 %v2621, %v2609
        %v3234 = vpack.c.b16 %v2634, %v2622
        %v3235 = vpack.c.b16 %v2635, %v2623
        %v3236 = vpack.c.b16 %v2636, %v2624
        %v3237 = vpack.c.b16 %v2637, %v2625
        %v3238 = vpack.c.b16 %v2638, %v2626
        %v3239 = vpack.c.b16 %v2639, %v2627
        %v3240 = vpack.c.b16 %v2640, %v2628
        %v3241 = vpack.c.b16 %v2641, %v2629
        %v3242 = vpack.c.b16 %v2642, %v2630
        %v3243 = vpack.c.b16 %v2643, %v2631
        %v3244 = vpack.c.b16 %v2644, %v2632
        %v3245 = vpack.c.b16 %v2645, %v2633
        %v3246 = vpack.c.b16 %v2658, %v2646
        %v3247 = vpack.c.b16 %v2659, %v2647
        %v3248 = vpack.c.b16 %v2660, %v2648
        %v3249 = vpack.c.b16 %v2661, %v2649
        %v3250 = vpack.c.b16 %v2662, %v2650
        %v3251 = vpack.c.b16 %v2663, %v2651
        %v3252 = vpack.c.b16 %v2664, %v2652
        %v3253 = vpack.c.b16 %v2665, %v2653
        %v3254 = vpack.c.b16 %v2666, %v2654
        %v3255 = vpack.c.b16 %v2667, %v2655
        %v3256 = vpack.c.b16 %v2668, %v2656
        %v3257 = vpack.c.b16 %v2669, %v2657
        %v3258 = vpack.c.b16 %v2682, %v2670
        %v3259 = vpack.c.b16 %v2683, %v2671
        %v3260 = vpack.c.b16 %v2684, %v2672
        %v3261 = vpack.c.b16 %v2685, %v2673
        %v3262 = vpack.c.b16 %v2686, %v2674
        %v3263 = vpack.c.b16 %v2687, %v2675
        %v3264 = vpack.c.b16 %v2688, %v2676
        %v3265 = vpack.c.b16 %v2689, %v2677
        %v3266 = vpack.c.b16 %v2690, %v2678
        %v3267 = vpack.c.b16 %v2691, %v2679
        %v3268 = vpack.c.b16 %v2692, %v2680
        %v3269 = vpack.c.b16 %v2693, %v2681
        %v4038 = vunpack.c.l.b16 %v772
        %v4039 = vunpack.c.l.b16 %v773
        %v4040 = vunpack.c.l.b16 %v774
        %v4041 = vunpack.c.l.b16 %v775
        %v4042 = vunpack.c.l.b16 %v776
        %v4043 = vunpack.c.l.b16 %v777
        %v4044 = vunpack.c.l.b16 %v778
        %v4045 = vunpack.c.l.b16 %v779
        %v4046 = vunpack.c.l.b16 %v780
        %v4047 = vunpack.c.l.b16 %v781
        %v4048 = vunpack.c.l.b16 %v782
        %v4049 = vunpack.c.l.b16 %v783
        %v4050 = vunpack.c.l.b16 %v784
        %v4051 = vunpack.c.l.b16 %v785
        %v4052 = vunpack.c.l.b16 %v786
        %v4053 = vunpack.c.l.b16 %v787
        %v4054 = vunpack.c.l.b16 %v788
        %v4055 = vunpack.c.l.b16 %v789
        %v4056 = vunpack.c.l.b16 %v790
        %v4057 = vunpack.c.l.b16 %v791
        %v4058 = vunpack.c.l.b16 %v792
        %v4059 = vunpack.c.l.b16 %v793
        %v4060 = vunpack.c.l.b16 %v794
        %v4061 = vunpack.c.l.b16 %v795
        %v4062 = vunpack.c.l.b16 %v796
        %v4063 = vunpack.c.l.b16 %v797
        %v4064 = vunpack.c.l.b16 %v798
        %v4065 = vunpack.c.l.b16 %v799
        %v4066 = vunpack.c.l.b16 %v800
        %v4067 = vunpack.c.l.b16 %v801
        %v4068 = vunpack.c.l.b16 %v802
        %v4069 = vunpack.c.l.b16 %v803
        %v4070 = vunpack.c.l.b16 %v804
        %v4071 = vunpack.c.l.b16 %v805
        %v4072 = vunpack.c.l.b16 %v806
        %v4073 = vunpack.c.l.b16 %v807
        %v4074 = vunpack.c.l.b16 %v808
        %v4075 = vunpack.c.l.b16 %v809
        %v4076 = vunpack.c.l.b16 %v810
        %v4077 = vunpack.c.l.b16 %v811
        %v4078 = vunpack.c.l.b16 %v812
        %v4079 = vunpack.c.l.b16 %v813
        %v4080 = vunpack.c.l.b16 %v814
        %v4081 = vunpack.c.l.b16 %v815
        %v4082 = vunpack.c.l.b16 %v816
        %v4083 = vunpack.c.l.b16 %v817
        %v4084 = vunpack.c.l.b16 %v818
        %v4085 = vunpack.c.l.b16 %v819
        %v4086 = vunpack.c.l.b16 %v820
        %v4087 = vunpack.c.l.b16 %v821
        %v4088 = vunpack.c.l.b16 %v822
        %v4089 = vunpack.c.l.b16 %v823
        %v4090 = vunpack.c.l.b16 %v824
        %v4091 = vunpack.c.l.b16 %v825
        %v4092 = vunpack.c.l.b16 %v826
        %v4093 = vunpack.c.l.b16 %v827
        %v4094 = vunpack.c.l.b16 %v828
        %v4095 = vunpack.c.l.b16 %v829
        %v4096 = vunpack.c.l.b16 %v830
        %v4097 = vunpack.c.l.b16 %v831
        %v4098 = vunpack.c.l.b16 %v832
        %v4099 = vunpack.c.l.b16 %v833
        %v4100 = vunpack.c.l.b16 %v834
        %v4101 = vunpack.c.l.b16 %v835
        %v4102 = vunpack.c.l.b16 %v836
        %v4103 = vunpack.c.l.b16 %v837
        %v4104 = vunpack.c.l.b16 %v838
        %v4105 = vunpack.c.l.b16 %v839
        %v4106 = vunpack.c.l.b16 %v840
        %v4107 = vunpack.c.l.b16 %v841
        %v4108 = vunpack.c.l.b16 %v842
        %v4109 = vunpack.c.l.b16 %v843
        %v4110 = vunpack.c.l.b16 %v844
        %v4111 = vunpack.c.l.b16 %v845
        %v4112 = vunpack.c.l.b16 %v846
        %v4113 = vunpack.c.l.b16 %v847
        %v4114 = vunpack.c.l.b16 %v848
        %v4115 = vunpack.c.l.b16 %v849
        %v4116 = vunpack.c.l.b16 %v850
        %v4117 = vunpack.c.l.b16 %v851
        %v4118 = vunpack.c.l.b16 %v852
        %v4119 = vunpack.c.l.b16 %v853
        %v4120 = vunpack.c.l.b16 %v854
        %v4121 = vunpack.c.l.b16 %v855
        %v4122 = vunpack.c.l.b16 %v856
        %v4123 = vunpack.c.l.b16 %v857
        %v4124 = vunpack.c.l.b16 %v858
        %v4125 = vunpack.c.l.b16 %v859
        %v4126 = vunpack.c.l.b16 %v860
        %v4127 = vunpack.c.l.b16 %v861
        %v4128 = vunpack.c.l.b16 %v862
        %v4129 = vunpack.c.l.b16 %v863
        %v4130 = vunpack.c.l.b16 %v864
        %v4131 = vunpack.c.l.b16 %v865
        %v4132 = vunpack.c.l.b16 %v866
        %v4133 = vunpack.c.l.b16 %v867
        %v4134 = vunpack.c.l.b16 %v868
        %v4135 = vunpack.c.l.b16 %v869
        %v4136 = vunpack.c.l.b16 %v870
        %v4137 = vunpack.c.l.b16 %v871
        %v4138 = vunpack.c.l.b16 %v872
        %v4139 = vunpack.c.l.b16 %v873
        %v4140 = vunpack.c.l.b16 %v874
        %v4141 = vunpack.c.l.b16 %v875
        %v4142 = vunpack.c.l.b16 %v876
        %v4143 = vunpack.c.l.b16 %v877
        %v4144 = vunpack.c.l.b16 %v878
        %v4145 = vunpack.c.l.b16 %v879
        %v4146 = vunpack.c.l.b16 %v880
        %v4147 = vunpack.c.l.b16 %v881
        %v4148 = vunpack.c.l.b16 %v882
        %v4149 = vunpack.c.l.b16 %v883
        %v4150 = vunpack.c.l.b16 %v884
        %v4151 = vunpack.c.l.b16 %v885
        %v4152 = vunpack.c.l.b16 %v886
        %v4153 = vunpack.c.l.b16 %v887
        %v4154 = vunpack.c.l.b16 %v888
        %v4155 = vunpack.c.l.b16 %v889
        %v4156 = vunpack.c.l.b16 %v890
        %v4157 = vunpack.c.l.b16 %v891
        %v4158 = vunpack.c.l.b16 %v892
        %v4159 = vunpack.c.l.b16 %v893
        %v4160 = vunpack.c.l.b16 %v894
        %v4161 = vunpack.c.l.b16 %v895
        %v4162 = vunpack.c.l.b16 %v896
        %v4163 = vunpack.c.l.b16 %v897
        %v4164 = vunpack.c.l.b16 %v898
        %v4165 = vunpack.c.l.b16 %v899
        %v4166 = vunpack.c.l.b16 %v900
        %v4167 = vunpack.c.l.b16 %v901
        %v4168 = vunpack.c.l.b16 %v902
        %v4169 = vunpack.c.l.b16 %v903
        %v4170 = vunpack.c.l.b16 %v904
        %v4171 = vunpack.c.l.b16 %v905
        %v4172 = vunpack.c.l.b16 %v906
        %v4173 = vunpack.c.l.b16 %v907
        %v4174 = vunpack.c.l.b16 %v908
        %v4175 = vunpack.c.l.b16 %v909
        %v4176 = vunpack.c.l.b16 %v910
        %v4177 = vunpack.c.l.b16 %v911
        %v4178 = vunpack.c.l.b16 %v912
        %v4179 = vunpack.c.l.b16 %v913
        %v4180 = vunpack.c.l.b16 %v914
        %v4181 = vunpack.c.l.b16 %v915
        %v4182 = vunpack.c.l.b16 %v916
        %v4183 = vunpack.c.l.b16 %v917
        %v4184 = vunpack.c.l.b16 %v918
        %v4185 = vunpack.c.l.b16 %v919
        %v4186 = vunpack.c.l.b16 %v920
        %v4187 = vunpack.c.l.b16 %v921
        %v4188 = vunpack.c.l.b16 %v922
        %v4189 = vunpack.c.l.b16 %v923
        %v4190 = vunpack.c.l.b16 %v924
        %v4191 = vunpack.c.l.b16 %v925
        %v4192 = vunpack.c.l.b16 %v926
        %v4193 = vunpack.c.l.b16 %v927
        %v4194 = vunpack.c.l.b16 %v928
        %v4195 = vunpack.c.l.b16 %v929
        %v4196 = vunpack.c.l.b16 %v930
        %v4197 = vunpack.c.l.b16 %v931
        %v4198 = vunpack.c.l.b16 %v932
        %v4199 = vunpack.c.l.b16 %v933
        %v4200 = vunpack.c.l.b16 %v934
        %v4201 = vunpack.c.l.b16 %v935
        %v4202 = vunpack.c.l.b16 %v936
        %v4203 = vunpack.c.l.b16 %v937
        %v4204 = vunpack.c.l.b16 %v938
        %v4205 = vunpack.c.l.b16 %v939
        %v4206 = vunpack.c.l.b16 %v940
        %v4207 = vunpack.c.l.b16 %v941
        %v4208 = vunpack.c.l.b16 %v942
        %v4209 = vunpack.c.l.b16 %v943
        %v4210 = vunpack.c.l.b16 %v944
        %v4211 = vunpack.c.l.b16 %v945
        %v4212 = vunpack.c.l.b16 %v946
        %v4213 = vunpack.c.l.b16 %v947
        %v4214 = vunpack.c.l.b16 %v948
        %v4215 = vunpack.c.l.b16 %v949
        %v4216 = vunpack.c.l.b16 %v950
        %v4217 = vunpack.c.l.b16 %v951
        %v4218 = vunpack.c.l.b16 %v952
        %v4219 = vunpack.c.l.b16 %v953
        %v4220 = vunpack.c.l.b16 %v954
        %v4221 = vunpack.c.l.b16 %v955
        %v4222 = vunpack.c.l.b16 %v956
        %v4223 = vunpack.c.l.b16 %v957
        %v4224 = vunpack.c.l.b16 %v958
        %v4225 = vunpack.c.l.b16 %v959
        %v4226 = vunpack.c.l.b16 %v960
        %v4227 = vunpack.c.l.b16 %v961
        %v4228 = vunpack.c.l.b16 %v962
        %v4229 = vunpack.c.l.b16 %v963
        %v4230 = vpack.c.b16 %v4039, %v4038
        %v4231 = vpack.c.b16 %v4041, %v4040
        %v4232 = vpack.c.b16 %v4043, %v4042
        %v4233 = vpack.c.b16 %v4045, %v4044
        %v4234 = vpack.c.b16 %v4047, %v4046
        %v4235 = vpack.c.b16 %v4049, %v4048
        %v4236 = vpack.c.b16 %v4051, %v4050
        %v4237 = vpack.c.b16 %v4053, %v4052
        %v4238 = vpack.c.b16 %v4055, %v4054
        %v4239 = vpack.c.b16 %v4057, %v4056
        %v4240 = vpack.c.b16 %v4059, %v4058
        %v4241 = vpack.c.b16 %v4061, %v4060
        %v4242 = vpack.c.b16 %v4063, %v4062
        %v4243 = vpack.c.b16 %v4065, %v4064
        %v4244 = vpack.c.b16 %v4067, %v4066
        %v4245 = vpack.c.b16 %v4069, %v4068
        %v4246 = vpack.c.b16 %v4071, %v4070
        %v4247 = vpack.c.b16 %v4073, %v4072
        %v4248 = vpack.c.b16 %v4075, %v4074
        %v4249 = vpack.c.b16 %v4077, %v4076
        %v4250 = vpack.c.b16 %v4079, %v4078
        %v4251 = vpack.c.b16 %v4081, %v4080
        %v4252 = vpack.c.b16 %v4083, %v4082
        %v4253 = vpack.c.b16 %v4085, %v4084
        %v4254 = vpack.c.b16 %v4087, %v4086
        %v4255 = vpack.c.b16 %v4089, %v4088
        %v4256 = vpack.c.b16 %v4091, %v4090
        %v4257 = vpack.c.b16 %v4093, %v4092
        %v4258 = vpack.c.b16 %v4095, %v4094
        %v4259 = vpack.c.b16 %v4097, %v4096
        %v4260 = vpack.c.b16 %v4099, %v4098
        %v4261 = vpack.c.b16 %v4101, %v4100
        %v4262 = vpack.c.b16 %v4103, %v4102
        %v4263 = vpack.c.b16 %v4105, %v4104
        %v4264 = vpack.c.b16 %v4107, %v4106
        %v4265 = vpack.c.b16 %v4109, %v4108
        %v4266 = vpack.c.b16 %v4111, %v4110
        %v4267 = vpack.c.b16 %v4113, %v4112
        %v4268 = vpack.c.b16 %v4115, %v4114
        %v4269 = vpack.c.b16 %v4117, %v4116
        %v4270 = vpack.c.b16 %v4119, %v4118
        %v4271 = vpack.c.b16 %v4121, %v4120
        %v4272 = vpack.c.b16 %v4123, %v4122
        %v4273 = vpack.c.b16 %v4125, %v4124
        %v4274 = vpack.c.b16 %v4127, %v4126
        %v4275 = vpack.c.b16 %v4129, %v4128
        %v4276 = vpack.c.b16 %v4131, %v4130
        %v4277 = vpack.c.b16 %v4133, %v4132
        %v4278 = vpack.c.b16 %v4135, %v4134
        %v4279 = vpack.c.b16 %v4137, %v4136
        %v4280 = vpack.c.b16 %v4139, %v4138
        %v4281 = vpack.c.b16 %v4141, %v4140
        %v4282 = vpack.c.b16 %v4143, %v4142
        %v4283 = vpack.c.b16 %v4145, %v4144
        %v4284 = vpack.c.b16 %v4147, %v4146
        %v4285 = vpack.c.b16 %v4149, %v4148
        %v4286 = vpack.c.b16 %v4151, %v4150
        %v4287 = vpack.c.b16 %v4153, %v4152
        %v4288 = vpack.c.b16 %v4155, %v4154
        %v4289 = vpack.c.b16 %v4157, %v4156
        %v4290 = vpack.c.b16 %v4159, %v4158
        %v4291 = vpack.c.b16 %v4161, %v4160
        %v4292 = vpack.c.b16 %v4163, %v4162
        %v4293 = vpack.c.b16 %v4165, %v4164
        %v4294 = vpack.c.b16 %v4167, %v4166
        %v4295 = vpack.c.b16 %v4169, %v4168
        %v4296 = vpack.c.b16 %v4171, %v4170
        %v4297 = vpack.c.b16 %v4173, %v4172
        %v4298 = vpack.c.b16 %v4175, %v4174
        %v4299 = vpack.c.b16 %v4177, %v4176
        %v4300 = vpack.c.b16 %v4179, %v4178
        %v4301 = vpack.c.b16 %v4181, %v4180
        %v4302 = vpack.c.b16 %v4183, %v4182
        %v4303 = vpack.c.b16 %v4185, %v4184
        %v4304 = vpack.c.b16 %v4187, %v4186
        %v4305 = vpack.c.b16 %v4189, %v4188
        %v4306 = vpack.c.b16 %v4191, %v4190
        %v4307 = vpack.c.b16 %v4193, %v4192
        %v4308 = vpack.c.b16 %v4195, %v4194
        %v4309 = vpack.c.b16 %v4197, %v4196
        %v4310 = vpack.c.b16 %v4199, %v4198
        %v4311 = vpack.c.b16 %v4201, %v4200
        %v4312 = vpack.c.b16 %v4203, %v4202
        %v4313 = vpack.c.b16 %v4205, %v4204
        %v4314 = vpack.c.b16 %v4207, %v4206
        %v4315 = vpack.c.b16 %v4209, %v4208
        %v4316 = vpack.c.b16 %v4211, %v4210
        %v4317 = vpack.c.b16 %v4213, %v4212
        %v4318 = vpack.c.b16 %v4215, %v4214
        %v4319 = vpack.c.b16 %v4217, %v4216
        %v4320 = vpack.c.b16 %v4219, %v4218
        %v4321 = vpack.c.b16 %v4221, %v4220
        %v4322 = vpack.c.b16 %v4223, %v4222
        %v4323 = vpack.c.b16 %v4225, %v4224
        %v4324 = vpack.c.b16 %v4227, %v4226
        %v4325 = vpack.c.b16 %v4229, %v4228
        %4422 = vmatprep.subr.bf16.mxu0 0
        %4423 = vmatpush1.bf16.msra.mxu0 %v4230
        %4424 = vmatprep.subr.bf16.mxu0 0
        %4425 = vmatpush1.bf16.msra.mxu0 %v4231
        %4426 = vmatprep.subr.bf16.mxu0 0
        %4427 = vmatpush1.bf16.msra.mxu0 %v4232
        %4428 = vmatprep.subr.bf16.mxu0 0
        %4429 = vmatpush1.bf16.msra.mxu0 %v4233
        %4430 = vmatprep.subr.bf16.mxu0 0
        %4431 = vmatpush1.bf16.msra.mxu0 %v4234
        %4432 = vmatprep.subr.bf16.mxu0 0
        %4433 = vmatpush1.bf16.msra.mxu0 %v4235
        %4434 = vmatprep.subr.bf16.mxu0 0
        %4435 = vmatpush1.bf16.msra.mxu0 %v4236
        %4436 = vmatprep.subr.bf16.mxu0 0
        %4437 = vmatpush1.bf16.msra.mxu0 %v4237
        %4438 = vmatprep.subr.bf16.mxu0 0
        %4439 = vmatpush1.bf16.msra.mxu0 %v4238
        %4440 = vmatprep.subr.bf16.mxu0 0
        %4441 = vmatpush1.bf16.msra.mxu0 %v4239
        %4442 = vmatprep.subr.bf16.mxu0 0
        %4443 = vmatpush1.bf16.msra.mxu0 %v4240
        %4444 = vmatprep.subr.bf16.mxu0 0
        %4445 = vmatpush1.bf16.msra.mxu0 %v4241
        %4446 = vmatprep.subr.bf16.mxu0 0
        %4447 = vmatpush1.bf16.msra.mxu0 %v4242
        %4448 = vmatprep.subr.bf16.mxu0 0
        %4449 = vmatpush1.bf16.msra.mxu0 %v4243
        %4450 = vmatprep.subr.bf16.mxu0 0
        %4451 = vmatpush1.bf16.msra.mxu0 %v4244
        %4452 = vmatprep.subr.bf16.mxu0 0
        %4453 = vmatpush1.bf16.msra.mxu0 %v4245
        %4454 = vmatprep.mubr.bf16.mxu0 %v2695
        %4455 = vmatmul.mubr.bf16.gmra.mrb[0].mxu0 %v2694
        %v4456 = vpop.f32.mrb[0].mxu0
        %v4457 = vadd.f32 %v965, %v4456
        %v4458 = vpop.f32.mrb[0].mxu0
        %v4459 = vpop.f32.mrb[0].mxu0
        %v4460 = vadd.f32 %v965, %v4459
        %v4461 = vpop.f32.mrb[0].mxu0
        %4462 = vmatprep.mubr.bf16.mxu0 %v2707
        %4463 = vmatmul.mubr.bf16.gmra.mrb[0].mxu0 %v2706
        %v4464 = vpop.f32.mrb[0].mxu0
        %v4465 = vadd.f32 %v965, %v4464
        %v4466 = vpop.f32.mrb[0].mxu0
        %v4467 = vpop.f32.mrb[0].mxu0
        %v4468 = vadd.f32 %v965, %v4467
        %v4469 = vpop.f32.mrb[0].mxu0
        %4470 = vmatprep.mubr.bf16.mxu0 %v2719
        %4471 = vmatmul.mubr.bf16.gmra.mrb[0].mxu0 %v2718
        %v4472 = vpop.f32.mrb[0].mxu0
        %v4473 = vadd.f32 %v965, %v4472
        %v4474 = vpop.f32.mrb[0].mxu0
        %v4475 = vpop.f32.mrb[0].mxu0
        %v4476 = vadd.f32 %v965, %v4475
        %v4477 = vpop.f32.mrb[0].mxu0
        %4478 = vmatprep.mubr.bf16.mxu0 %v2731
        %4479 = vmatmul.mubr.bf16.gmra.mrb[0].mxu0 %v2730
        %v4480 = vpop.f32.mrb[0].mxu0
        %v4481 = vadd.f32 %v965, %v4480
        %v4482 = vpop.f32.mrb[0].mxu0
        %v4483 = vpop.f32.mrb[0].mxu0
        %v4484 = vadd.f32 %v965, %v4483
        %v4485 = vpop.f32.mrb[0].mxu0
        %4486 = vmatprep.mubr.bf16.mxu0 %v2743
        %4487 = vmatmul.mubr.bf16.gmra.mrb[0].mxu0 %v2742
        %v4488 = vpop.f32.mrb[0].mxu0
        %v4489 = vadd.f32 %v965, %v4488
        %v4490 = vpop.f32.mrb[0].mxu0
        %v4491 = vpop.f32.mrb[0].mxu0
        %v4492 = vadd.f32 %v965, %v4491
        %v4493 = vpop.f32.mrb[0].mxu0
        %4494 = vmatprep.mubr.bf16.mxu0 %v2755
        %4495 = vmatmul.mubr.bf16.gmra.mrb[0].mxu0 %v2754
        %v4496 = vpop.f32.mrb[0].mxu0
        %v4497 = vadd.f32 %v965, %v4496
        %v4498 = vpop.f32.mrb[0].mxu0
        %v4499 = vpop.f32.mrb[0].mxu0
        %v4500 = vadd.f32 %v965, %v4499
        %v4501 = vpop.f32.mrb[0].mxu0
        %4502 = vmatprep.mubr.bf16.mxu0 %v2767
        %4503 = vmatmul.mubr.bf16.gmra.mrb[0].mxu0 %v2766
        %v4504 = vpop.f32.mrb[0].mxu0
        %v4505 = vadd.f32 %v965, %v4504
        %v4506 = vpop.f32.mrb[0].mxu0
        %v4507 = vpop.f32.mrb[0].mxu0
        %v4508 = vadd.f32 %v965, %v4507
        %v4509 = vpop.f32.mrb[0].mxu0
        %4510 = vmatprep.mubr.bf16.mxu0 %v2779
        %4511 = vmatmul.mubr.bf16.gmra.mrb[0].mxu0 %v2778
        %v4512 = vpop.f32.mrb[0].mxu0
        %v4513 = vadd.f32 %v965, %v4512
        %v4514 = vpop.f32.mrb[0].mxu0
        %v4515 = vpop.f32.mrb[0].mxu0
        %v4516 = vadd.f32 %v965, %v4515
        %v4517 = vpop.f32.mrb[0].mxu0
        %4518 = vmatprep.mubr.bf16.mxu0 %v2791
        %4519 = vmatmul.mubr.bf16.gmra.mrb[0].mxu0 %v2790
        %v4520 = vpop.f32.mrb[0].mxu0
        %v4521 = vadd.f32 %v965, %v4520
        %v4522 = vpop.f32.mrb[0].mxu0
        %v4523 = vpop.f32.mrb[0].mxu0
        %v4524 = vadd.f32 %v965, %v4523
        %v4525 = vpop.f32.mrb[0].mxu0
        %4526 = vmatprep.mubr.bf16.mxu0 %v2803
        %4527 = vmatmul.mubr.bf16.gmra.mrb[0].mxu0 %v2802
        %v4528 = vpop.f32.mrb[0].mxu0
        %v4529 = vadd.f32 %v965, %v4528
        %v4530 = vpop.f32.mrb[0].mxu0
        %v4531 = vpop.f32.mrb[0].mxu0
        %v4532 = vadd.f32 %v965, %v4531
        %v4533 = vpop.f32.mrb[0].mxu0
        %4534 = vmatprep.mubr.bf16.mxu0 %v2815
        %4535 = vmatmul.mubr.bf16.gmra.mrb[0].mxu0 %v2814
        %v4536 = vpop.f32.mrb[0].mxu0
        %v4537 = vadd.f32 %v965, %v4536
        %v4538 = vpop.f32.mrb[0].mxu0
        %v4539 = vpop.f32.mrb[0].mxu0
        %v4540 = vadd.f32 %v965, %v4539
        %v4541 = vpop.f32.mrb[0].mxu0
        %4542 = vmatprep.mubr.bf16.mxu0 %v2827
        %4543 = vmatmul.mubr.bf16.gmra.mrb[0].mxu0 %v2826
        %v4544 = vpop.f32.mrb[0].mxu0
        %v4545 = vadd.f32 %v965, %v4544
        %v4546 = vpop.f32.mrb[0].mxu0
        %v4547 = vpop.f32.mrb[0].mxu0
        %v4548 = vadd.f32 %v965, %v4547
        %v4549 = vpop.f32.mrb[0].mxu0
        %4550 = vmatprep.mubr.bf16.mxu0 %v2839
        %4551 = vmatmul.mubr.bf16.gmra.mrb[0].mxu0 %v2838
        %v4552 = vpop.f32.mrb[0].mxu0
        %v4553 = vadd.f32 %v965, %v4552
        %v4554 = vpop.f32.mrb[0].mxu0
        %v4555 = vpop.f32.mrb[0].mxu0
        %v4556 = vadd.f32 %v965, %v4555
        %v4557 = vpop.f32.mrb[0].mxu0
        %4558 = vmatprep.mubr.bf16.mxu0 %v2851
        %4559 = vmatmul.mubr.bf16.gmra.mrb[0].mxu0 %v2850
        %v4560 = vpop.f32.mrb[0].mxu0
        %v4561 = vadd.f32 %v965, %v4560
        %v4562 = vpop.f32.mrb[0].mxu0
        %v4563 = vpop.f32.mrb[0].mxu0
        %v4564 = vadd.f32 %v965, %v4563
        %v4565 = vpop.f32.mrb[0].mxu0
        %4566 = vmatprep.mubr.bf16.mxu0 %v2863
        %4567 = vmatmul.mubr.bf16.gmra.mrb[0].mxu0 %v2862
        %v4568 = vpop.f32.mrb[0].mxu0
        %v4569 = vadd.f32 %v965, %v4568
        %v4570 = vpop.f32.mrb[0].mxu0
        %v4571 = vpop.f32.mrb[0].mxu0
        %v4572 = vadd.f32 %v965, %v4571
        %v4573 = vpop.f32.mrb[0].mxu0
        %4574 = vmatprep.mubr.bf16.mxu0 %v2875
        %4575 = vmatmul.mubr.bf16.gmra.mrb[0].mxu0 %v2874
        %v4576 = vpop.f32.mrb[0].mxu0
        %v4577 = vadd.f32 %v965, %v4576
        %v4578 = vpop.f32.mrb[0].mxu0
        %v4579 = vpop.f32.mrb[0].mxu0
        %v4580 = vadd.f32 %v965, %v4579
        %v4581 = vpop.f32.mrb[0].mxu0
        %4582 = vmatprep.mubr.bf16.mxu0 %v2887
        %4583 = vmatmul.mubr.bf16.gmra.mrb[0].mxu0 %v2886
        %v4584 = vpop.f32.mrb[0].mxu0
        %v4585 = vadd.f32 %v965, %v4584
        %v4586 = vpop.f32.mrb[0].mxu0
        %v4587 = vpop.f32.mrb[0].mxu0
        %v4588 = vadd.f32 %v965, %v4587
        %v4589 = vpop.f32.mrb[0].mxu0
        %4590 = vmatprep.mubr.bf16.mxu0 %v2899
        %4591 = vmatmul.mubr.bf16.gmra.mrb[0].mxu0 %v2898
        %v4592 = vpop.f32.mrb[0].mxu0
        %v4593 = vadd.f32 %v965, %v4592
        %v4594 = vpop.f32.mrb[0].mxu0
        %v4595 = vpop.f32.mrb[0].mxu0
        %v4596 = vadd.f32 %v965, %v4595
        %v4597 = vpop.f32.mrb[0].mxu0
        %4598 = vmatprep.mubr.bf16.mxu0 %v2911
        %4599 = vmatmul.mubr.bf16.gmra.mrb[0].mxu0 %v2910
        %v4600 = vpop.f32.mrb[0].mxu0
        %v4601 = vadd.f32 %v965, %v4600
        %v4602 = vpop.f32.mrb[0].mxu0
        %v4603 = vpop.f32.mrb[0].mxu0
        %v4604 = vadd.f32 %v965, %v4603
        %v4605 = vpop.f32.mrb[0].mxu0
        %4606 = vmatprep.mubr.bf16.mxu0 %v2923
        %4607 = vmatmul.mubr.bf16.gmra.mrb[0].mxu0 %v2922
        %v4608 = vpop.f32.mrb[0].mxu0
        %v4609 = vadd.f32 %v965, %v4608
        %v4610 = vpop.f32.mrb[0].mxu0
        %v4611 = vpop.f32.mrb[0].mxu0
        %v4612 = vadd.f32 %v965, %v4611
        %v4613 = vpop.f32.mrb[0].mxu0
        %4614 = vmatprep.mubr.bf16.mxu0 %v2935
        %4615 = vmatmul.mubr.bf16.gmra.mrb[0].mxu0 %v2934
        %v4616 = vpop.f32.mrb[0].mxu0
        %v4617 = vadd.f32 %v965, %v4616
        %v4618 = vpop.f32.mrb[0].mxu0
        %v4619 = vpop.f32.mrb[0].mxu0
        %v4620 = vadd.f32 %v965, %v4619
        %v4621 = vpop.f32.mrb[0].mxu0
        %4622 = vmatprep.mubr.bf16.mxu0 %v2947
        %4623 = vmatmul.mubr.bf16.gmra.mrb[0].mxu0 %v2946
        %v4624 = vpop.f32.mrb[0].mxu0
        %v4625 = vadd.f32 %v965, %v4624
        %v4626 = vpop.f32.mrb[0].mxu0
        %v4627 = vpop.f32.mrb[0].mxu0
        %v4628 = vadd.f32 %v965, %v4627
        %v4629 = vpop.f32.mrb[0].mxu0
        %4630 = vmatprep.mubr.bf16.mxu0 %v2959
        %4631 = vmatmul.mubr.bf16.gmra.mrb[0].mxu0 %v2958
        %v4632 = vpop.f32.mrb[0].mxu0
        %v4633 = vadd.f32 %v965, %v4632
        %v4634 = vpop.f32.mrb[0].mxu0
        %v4635 = vpop.f32.mrb[0].mxu0
        %v4636 = vadd.f32 %v965, %v4635
        %v4637 = vpop.f32.mrb[0].mxu0
        %4638 = vmatprep.mubr.bf16.mxu0 %v2971
        %4639 = vmatmul.mubr.bf16.gmra.mrb[0].mxu0 %v2970
        %v4640 = vpop.f32.mrb[0].mxu0
        %v4641 = vadd.f32 %v965, %v4640
        %v4642 = vpop.f32.mrb[0].mxu0
        %v4643 = vpop.f32.mrb[0].mxu0
        %v4644 = vadd.f32 %v965, %v4643
        %v4645 = vpop.f32.mrb[0].mxu0
        %4646 = vmatprep.mubr.bf16.mxu0 %v2983
        %4647 = vmatmul.mubr.bf16.gmra.mrb[0].mxu0 %v2982
        %v4648 = vpop.f32.mrb[0].mxu0
        %v4649 = vadd.f32 %v965, %v4648
        %v4650 = vpop.f32.mrb[0].mxu0
        %v4651 = vpop.f32.mrb[0].mxu0
        %v4652 = vadd.f32 %v965, %v4651
        %v4653 = vpop.f32.mrb[0].mxu0
        %4654 = vmatprep.mubr.bf16.mxu0 %v2995
        %4655 = vmatmul.mubr.bf16.gmra.mrb[0].mxu0 %v2994
        %v4656 = vpop.f32.mrb[0].mxu0
        %v4657 = vadd.f32 %v965, %v4656
        %v4658 = vpop.f32.mrb[0].mxu0
        %v4659 = vpop.f32.mrb[0].mxu0
        %v4660 = vadd.f32 %v965, %v4659
        %v4661 = vpop.f32.mrb[0].mxu0
        %4662 = vmatprep.mubr.bf16.mxu0 %v3007
        %4663 = vmatmul.mubr.bf16.gmra.mrb[0].mxu0 %v3006
        %v4664 = vpop.f32.mrb[0].mxu0
        %v4665 = vadd.f32 %v965, %v4664
        %v4666 = vpop.f32.mrb[0].mxu0
        %v4667 = vpop.f32.mrb[0].mxu0
        %v4668 = vadd.f32 %v965, %v4667
        %v4669 = vpop.f32.mrb[0].mxu0
        %4670 = vmatprep.mubr.bf16.mxu0 %v3019
        %4671 = vmatmul.mubr.bf16.gmra.mrb[0].mxu0 %v3018
        %v4672 = vpop.f32.mrb[0].mxu0
        %v4673 = vadd.f32 %v965, %v4672
        %v4674 = vpop.f32.mrb[0].mxu0
        %v4675 = vpop.f32.mrb[0].mxu0
        %v4676 = vadd.f32 %v965, %v4675
        %v4677 = vpop.f32.mrb[0].mxu0
        %4678 = vmatprep.mubr.bf16.mxu0 %v3031
        %4679 = vmatmul.mubr.bf16.gmra.mrb[0].mxu0 %v3030
        %v4680 = vpop.f32.mrb[0].mxu0
        %v4681 = vadd.f32 %v965, %v4680
        %v4682 = vpop.f32.mrb[0].mxu0
        %v4683 = vpop.f32.mrb[0].mxu0
        %v4684 = vadd.f32 %v965, %v4683
        %v4685 = vpop.f32.mrb[0].mxu0
        %4686 = vmatprep.mubr.bf16.mxu0 %v3043
        %4687 = vmatmul.mubr.bf16.gmra.mrb[0].mxu0 %v3042
        %v4688 = vpop.f32.mrb[0].mxu0
        %v4689 = vadd.f32 %v965, %v4688
        %v4690 = vpop.f32.mrb[0].mxu0
        %v4691 = vpop.f32.mrb[0].mxu0
        %v4692 = vadd.f32 %v965, %v4691
        %v4693 = vpop.f32.mrb[0].mxu0
        %4694 = vmatprep.mubr.bf16.mxu0 %v3055
        %4695 = vmatmul.mubr.bf16.gmra.mrb[0].mxu0 %v3054
        %v4696 = vpop.f32.mrb[0].mxu0
        %v4697 = vadd.f32 %v965, %v4696
        %v4698 = vpop.f32.mrb[0].mxu0
        %v4699 = vpop.f32.mrb[0].mxu0
        %v4700 = vadd.f32 %v965, %v4699
        %v4701 = vpop.f32.mrb[0].mxu0
        %4702 = vmatprep.mubr.bf16.mxu0 %v3067
        %4703 = vmatmul.mubr.bf16.gmra.mrb[0].mxu0 %v3066
        %v4704 = vpop.f32.mrb[0].mxu0
        %v4705 = vadd.f32 %v965, %v4704
        %v4706 = vpop.f32.mrb[0].mxu0
        %v4707 = vpop.f32.mrb[0].mxu0
        %v4708 = vadd.f32 %v965, %v4707
        %v4709 = vpop.f32.mrb[0].mxu0
        %4710 = vmatprep.mubr.bf16.mxu0 %v3079
        %4711 = vmatmul.mubr.bf16.gmra.mrb[0].mxu0 %v3078
        %v4712 = vpop.f32.mrb[0].mxu0
        %v4713 = vadd.f32 %v965, %v4712
        %v4714 = vpop.f32.mrb[0].mxu0
        %v4715 = vpop.f32.mrb[0].mxu0
        %v4716 = vadd.f32 %v965, %v4715
        %v4717 = vpop.f32.mrb[0].mxu0
        %4718 = vmatprep.mubr.bf16.mxu0 %v3091
        %4719 = vmatmul.mubr.bf16.gmra.mrb[0].mxu0 %v3090
        %v4720 = vpop.f32.mrb[0].mxu0
        %v4721 = vadd.f32 %v965, %v4720
        %v4722 = vpop.f32.mrb[0].mxu0
        %v4723 = vpop.f32.mrb[0].mxu0
        %v4724 = vadd.f32 %v965, %v4723
        %v4725 = vpop.f32.mrb[0].mxu0
        %4726 = vmatprep.mubr.bf16.mxu0 %v3103
        %4727 = vmatmul.mubr.bf16.gmra.mrb[0].mxu0 %v3102
        %v4728 = vpop.f32.mrb[0].mxu0
        %v4729 = vadd.f32 %v965, %v4728
        %v4730 = vpop.f32.mrb[0].mxu0
        %v4731 = vpop.f32.mrb[0].mxu0
        %v4732 = vadd.f32 %v965, %v4731
        %v4733 = vpop.f32.mrb[0].mxu0
        %4734 = vmatprep.mubr.bf16.mxu0 %v3115
        %4735 = vmatmul.mubr.bf16.gmra.mrb[0].mxu0 %v3114
        %v4736 = vpop.f32.mrb[0].mxu0
        %v4737 = vadd.f32 %v965, %v4736
        %v4738 = vpop.f32.mrb[0].mxu0
        %v4739 = vpop.f32.mrb[0].mxu0
        %v4740 = vadd.f32 %v965, %v4739
        %v4741 = vpop.f32.mrb[0].mxu0
        %4742 = vmatprep.mubr.bf16.mxu0 %v3127
        %4743 = vmatmul.mubr.bf16.gmra.mrb[0].mxu0 %v3126
        %v4744 = vpop.f32.mrb[0].mxu0
        %v4745 = vadd.f32 %v965, %v4744
        %v4746 = vpop.f32.mrb[0].mxu0
        %v4747 = vpop.f32.mrb[0].mxu0
        %v4748 = vadd.f32 %v965, %v4747
        %v4749 = vpop.f32.mrb[0].mxu0
        %4750 = vmatprep.mubr.bf16.mxu0 %v3139
        %4751 = vmatmul.mubr.bf16.gmra.mrb[0].mxu0 %v3138
        %v4752 = vpop.f32.mrb[0].mxu0
        %v4753 = vadd.f32 %v965, %v4752
        %v4754 = vpop.f32.mrb[0].mxu0
        %v4755 = vpop.f32.mrb[0].mxu0
        %v4756 = vadd.f32 %v965, %v4755
        %v4757 = vpop.f32.mrb[0].mxu0
        %4758 = vmatprep.mubr.bf16.mxu0 %v3151
        %4759 = vmatmul.mubr.bf16.gmra.mrb[0].mxu0 %v3150
        %v4760 = vpop.f32.mrb[0].mxu0
        %v4761 = vadd.f32 %v965, %v4760
        %v4762 = vpop.f32.mrb[0].mxu0
        %v4763 = vpop.f32.mrb[0].mxu0
        %v4764 = vadd.f32 %v965, %v4763
        %v4765 = vpop.f32.mrb[0].mxu0
        %4766 = vmatprep.mubr.bf16.mxu0 %v3163
        %4767 = vmatmul.mubr.bf16.gmra.mrb[0].mxu0 %v3162
        %v4768 = vpop.f32.mrb[0].mxu0
        %v4769 = vadd.f32 %v965, %v4768
        %v4770 = vpop.f32.mrb[0].mxu0
        %v4771 = vpop.f32.mrb[0].mxu0
        %v4772 = vadd.f32 %v965, %v4771
        %v4773 = vpop.f32.mrb[0].mxu0
        %4774 = vmatprep.mubr.bf16.mxu0 %v3175
        %4775 = vmatmul.mubr.bf16.gmra.mrb[0].mxu0 %v3174
        %v4776 = vpop.f32.mrb[0].mxu0
        %v4777 = vadd.f32 %v965, %v4776
        %v4778 = vpop.f32.mrb[0].mxu0
        %v4779 = vpop.f32.mrb[0].mxu0
        %v4780 = vadd.f32 %v965, %v4779
        %v4781 = vpop.f32.mrb[0].mxu0
        %4782 = vmatprep.mubr.bf16.mxu0 %v3187
        %4783 = vmatmul.mubr.bf16.gmra.mrb[0].mxu0 %v3186
        %v4784 = vpop.f32.mrb[0].mxu0
        %v4785 = vadd.f32 %v965, %v4784
        %v4786 = vpop.f32.mrb[0].mxu0
        %v4787 = vpop.f32.mrb[0].mxu0
        %v4788 = vadd.f32 %v965, %v4787
        %v4789 = vpop.f32.mrb[0].mxu0
        %4790 = vmatprep.mubr.bf16.mxu0 %v3199
        %4791 = vmatmul.mubr.bf16.gmra.mrb[0].mxu0 %v3198
        %v4792 = vpop.f32.mrb[0].mxu0
        %v4793 = vadd.f32 %v965, %v4792
        %v4794 = vpop.f32.mrb[0].mxu0
        %v4795 = vpop.f32.mrb[0].mxu0
        %v4796 = vadd.f32 %v965, %v4795
        %v4797 = vpop.f32.mrb[0].mxu0
        %4798 = vmatprep.mubr.bf16.mxu0 %v3211
        %4799 = vmatmul.mubr.bf16.gmra.mrb[0].mxu0 %v3210
        %v4800 = vpop.f32.mrb[0].mxu0
        %v4801 = vadd.f32 %v965, %v4800
        %v4802 = vpop.f32.mrb[0].mxu0
        %v4803 = vpop.f32.mrb[0].mxu0
        %v4804 = vadd.f32 %v965, %v4803
        %v4805 = vpop.f32.mrb[0].mxu0
        %4806 = vmatprep.mubr.bf16.mxu0 %v3223
        %4807 = vmatmul.mubr.bf16.gmra.mrb[0].mxu0 %v3222
        %v4808 = vpop.f32.mrb[0].mxu0
        %v4809 = vadd.f32 %v965, %v4808
        %v4810 = vpop.f32.mrb[0].mxu0
        %v4811 = vpop.f32.mrb[0].mxu0
        %v4812 = vadd.f32 %v965, %v4811
        %v4813 = vpop.f32.mrb[0].mxu0
        %4814 = vmatprep.mubr.bf16.mxu0 %v3235
        %4815 = vmatmul.mubr.bf16.gmra.mrb[0].mxu0 %v3234
        %v4816 = vpop.f32.mrb[0].mxu0
        %v4817 = vadd.f32 %v965, %v4816
        %v4818 = vpop.f32.mrb[0].mxu0
        %v4819 = vpop.f32.mrb[0].mxu0
        %v4820 = vadd.f32 %v965, %v4819
        %v4821 = vpop.f32.mrb[0].mxu0
        %4822 = vmatprep.mubr.bf16.mxu0 %v3247
        %4823 = vmatmul.mubr.bf16.gmra.mrb[0].mxu0 %v3246
        %v4824 = vpop.f32.mrb[0].mxu0
        %v4825 = vadd.f32 %v965, %v4824
        %v4826 = vpop.f32.mrb[0].mxu0
        %v4827 = vpop.f32.mrb[0].mxu0
        %v4828 = vadd.f32 %v965, %v4827
        %v4829 = vpop.f32.mrb[0].mxu0
        %4830 = vmatprep.mubr.bf16.mxu0 %v3259
        %4831 = vmatmul.mubr.bf16.gmra.mrb[0].mxu0 %v3258
        %v4832 = vpop.f32.mrb[0].mxu0
        %v4833 = vadd.f32 %v965, %v4832
        %v4834 = vpop.f32.mrb[0].mxu0
        %v4835 = vpop.f32.mrb[0].mxu0
        %v4836 = vadd.f32 %v965, %v4835
        %v4837 = vpop.f32.mrb[0].mxu0
        %4838 = vdwg.mxu0
        %4839 = vmatprep.subr.bf16.mxu0 0
        %4840 = vmatpush1.bf16.msra.mxu0 %v4246
        %4841 = vmatprep.subr.bf16.mxu0 0
        %4842 = vmatpush1.bf16.msra.mxu0 %v4247
        %4843 = vmatprep.subr.bf16.mxu0 0
        %4844 = vmatpush1.bf16.msra.mxu0 %v4248
        %4845 = vmatprep.subr.bf16.mxu0 0
        %4846 = vmatpush1.bf16.msra.mxu0 %v4249
        %4847 = vmatprep.subr.bf16.mxu0 0
        %4848 = vmatpush1.bf16.msra.mxu0 %v4250
        %4849 = vmatprep.subr.bf16.mxu0 0
        %4850 = vmatpush1.bf16.msra.mxu0 %v4251
        %4851 = vmatprep.subr.bf16.mxu0 0
        %4852 = vmatpush1.bf16.msra.mxu0 %v4252
        %4853 = vmatprep.subr.bf16.mxu0 0
        %4854 = vmatpush1.bf16.msra.mxu0 %v4253
        %4855 = vmatprep.subr.bf16.mxu0 0
        %4856 = vmatpush1.bf16.msra.mxu0 %v4254
        %4857 = vmatprep.subr.bf16.mxu0 0
        %4858 = vmatpush1.bf16.msra.mxu0 %v4255
        %4859 = vmatprep.subr.bf16.mxu0 0
        %4860 = vmatpush1.bf16.msra.mxu0 %v4256
        %4861 = vmatprep.subr.bf16.mxu0 0
        %4862 = vmatpush1.bf16.msra.mxu0 %v4257
        %4863 = vmatprep.subr.bf16.mxu0 0
        %4864 = vmatpush1.bf16.msra.mxu0 %v4258
        %4865 = vmatprep.subr.bf16.mxu0 0
        %4866 = vmatpush1.bf16.msra.mxu0 %v4259
        %4867 = vmatprep.subr.bf16.mxu0 0
        %4868 = vmatpush1.bf16.msra.mxu0 %v4260
        %4869 = vmatprep.subr.bf16.mxu0 0
        %4870 = vmatpush1.bf16.msra.mxu0 %v4261
        %4871 = vmatprep.mubr.bf16.mxu0 %v2697
        %4872 = vmatmul.mubr.bf16.gmra.mrb[0].mxu0 %v2696
        %v4873 = vpop.f32.mrb[0].mxu0
        %v4874 = vadd.f32 %v4457, %v4873
        %v4875 = vpop.f32.mrb[0].mxu0
        %v4876 = vpop.f32.mrb[0].mxu0
        %v4877 = vadd.f32 %v4460, %v4876
        %v4878 = vpop.f32.mrb[0].mxu0
        %4879 = vmatprep.mubr.bf16.mxu0 %v2709
        %4880 = vmatmul.mubr.bf16.gmra.mrb[0].mxu0 %v2708
        %v4881 = vpop.f32.mrb[0].mxu0
        %v4882 = vadd.f32 %v4465, %v4881
        %v4883 = vpop.f32.mrb[0].mxu0
        %v4884 = vpop.f32.mrb[0].mxu0
        %v4885 = vadd.f32 %v4468, %v4884
        %v4886 = vpop.f32.mrb[0].mxu0
        %4887 = vmatprep.mubr.bf16.mxu0 %v2721
        %4888 = vmatmul.mubr.bf16.gmra.mrb[0].mxu0 %v2720
        %v4889 = vpop.f32.mrb[0].mxu0
        %v4890 = vadd.f32 %v4473, %v4889
        %v4891 = vpop.f32.mrb[0].mxu0
        %v4892 = vpop.f32.mrb[0].mxu0
        %v4893 = vadd.f32 %v4476, %v4892
        %v4894 = vpop.f32.mrb[0].mxu0
        %4895 = vmatprep.mubr.bf16.mxu0 %v2733
        %4896 = vmatmul.mubr.bf16.gmra.mrb[0].mxu0 %v2732
        %v4897 = vpop.f32.mrb[0].mxu0
        %v4898 = vadd.f32 %v4481, %v4897
        %v4899 = vpop.f32.mrb[0].mxu0
        %v4900 = vpop.f32.mrb[0].mxu0
        %v4901 = vadd.f32 %v4484, %v4900
        %v4902 = vpop.f32.mrb[0].mxu0
        %4903 = vmatprep.mubr.bf16.mxu0 %v2745
        %4904 = vmatmul.mubr.bf16.gmra.mrb[0].mxu0 %v2744
        %v4905 = vpop.f32.mrb[0].mxu0
        %v4906 = vadd.f32 %v4489, %v4905
        %v4907 = vpop.f32.mrb[0].mxu0
        %v4908 = vpop.f32.mrb[0].mxu0
        %v4909 = vadd.f32 %v4492, %v4908
        %v4910 = vpop.f32.mrb[0].mxu0
        %4911 = vmatprep.mubr.bf16.mxu0 %v2757
        %4912 = vmatmul.mubr.bf16.gmra.mrb[0].mxu0 %v2756
        %v4913 = vpop.f32.mrb[0].mxu0
        %v4914 = vadd.f32 %v4497, %v4913
        %v4915 = vpop.f32.mrb[0].mxu0
        %v4916 = vpop.f32.mrb[0].mxu0
        %v4917 = vadd.f32 %v4500, %v4916
        %v4918 = vpop.f32.mrb[0].mxu0
        %4919 = vmatprep.mubr.bf16.mxu0 %v2769
        %4920 = vmatmul.mubr.bf16.gmra.mrb[0].mxu0 %v2768
        %v4921 = vpop.f32.mrb[0].mxu0
        %v4922 = vadd.f32 %v4505, %v4921
        %v4923 = vpop.f32.mrb[0].mxu0
        %v4924 = vpop.f32.mrb[0].mxu0
        %v4925 = vadd.f32 %v4508, %v4924
        %v4926 = vpop.f32.mrb[0].mxu0
        %4927 = vmatprep.mubr.bf16.mxu0 %v2781
        %4928 = vmatmul.mubr.bf16.gmra.mrb[0].mxu0 %v2780
        %v4929 = vpop.f32.mrb[0].mxu0
        %v4930 = vadd.f32 %v4513, %v4929
        %v4931 = vpop.f32.mrb[0].mxu0
        %v4932 = vpop.f32.mrb[0].mxu0
        %v4933 = vadd.f32 %v4516, %v4932
        %v4934 = vpop.f32.mrb[0].mxu0
        %4935 = vmatprep.mubr.bf16.mxu0 %v2793
        %4936 = vmatmul.mubr.bf16.gmra.mrb[0].mxu0 %v2792
        %v4937 = vpop.f32.mrb[0].mxu0
        %v4938 = vadd.f32 %v4521, %v4937
        %v4939 = vpop.f32.mrb[0].mxu0
        %v4940 = vpop.f32.mrb[0].mxu0
        %v4941 = vadd.f32 %v4524, %v4940
        %v4942 = vpop.f32.mrb[0].mxu0
        %4943 = vmatprep.mubr.bf16.mxu0 %v2805
        %4944 = vmatmul.mubr.bf16.gmra.mrb[0].mxu0 %v2804
        %v4945 = vpop.f32.mrb[0].mxu0
        %v4946 = vadd.f32 %v4529, %v4945
        %v4947 = vpop.f32.mrb[0].mxu0
        %v4948 = vpop.f32.mrb[0].mxu0
        %v4949 = vadd.f32 %v4532, %v4948
        %v4950 = vpop.f32.mrb[0].mxu0
        %4951 = vmatprep.mubr.bf16.mxu0 %v2817
        %4952 = vmatmul.mubr.bf16.gmra.mrb[0].mxu0 %v2816
        %v4953 = vpop.f32.mrb[0].mxu0
        %v4954 = vadd.f32 %v4537, %v4953
        %v4955 = vpop.f32.mrb[0].mxu0
        %v4956 = vpop.f32.mrb[0].mxu0
        %v4957 = vadd.f32 %v4540, %v4956
        %v4958 = vpop.f32.mrb[0].mxu0
        %4959 = vmatprep.mubr.bf16.mxu0 %v2829
        %4960 = vmatmul.mubr.bf16.gmra.mrb[0].mxu0 %v2828
        %v4961 = vpop.f32.mrb[0].mxu0
        %v4962 = vadd.f32 %v4545, %v4961
        %v4963 = vpop.f32.mrb[0].mxu0
        %v4964 = vpop.f32.mrb[0].mxu0
        %v4965 = vadd.f32 %v4548, %v4964
        %v4966 = vpop.f32.mrb[0].mxu0
        %4967 = vmatprep.mubr.bf16.mxu0 %v2841
        %4968 = vmatmul.mubr.bf16.gmra.mrb[0].mxu0 %v2840
        %v4969 = vpop.f32.mrb[0].mxu0
        %v4970 = vadd.f32 %v4553, %v4969
        %v4971 = vpop.f32.mrb[0].mxu0
        %v4972 = vpop.f32.mrb[0].mxu0
        %v4973 = vadd.f32 %v4556, %v4972
        %v4974 = vpop.f32.mrb[0].mxu0
        %4975 = vmatprep.mubr.bf16.mxu0 %v2853
        %4976 = vmatmul.mubr.bf16.gmra.mrb[0].mxu0 %v2852
        %v4977 = vpop.f32.mrb[0].mxu0
        %v4978 = vadd.f32 %v4561, %v4977
        %v4979 = vpop.f32.mrb[0].mxu0
        %v4980 = vpop.f32.mrb[0].mxu0
        %v4981 = vadd.f32 %v4564, %v4980
        %v4982 = vpop.f32.mrb[0].mxu0
        %4983 = vmatprep.mubr.bf16.mxu0 %v2865
        %4984 = vmatmul.mubr.bf16.gmra.mrb[0].mxu0 %v2864
        %v4985 = vpop.f32.mrb[0].mxu0
        %v4986 = vadd.f32 %v4569, %v4985
        %v4987 = vpop.f32.mrb[0].mxu0
        %v4988 = vpop.f32.mrb[0].mxu0
        %v4989 = vadd.f32 %v4572, %v4988
        %v4990 = vpop.f32.mrb[0].mxu0
        %4991 = vmatprep.mubr.bf16.mxu0 %v2877
        %4992 = vmatmul.mubr.bf16.gmra.mrb[0].mxu0 %v2876
        %v4993 = vpop.f32.mrb[0].mxu0
        %v4994 = vadd.f32 %v4577, %v4993
        %v4995 = vpop.f32.mrb[0].mxu0
        %v4996 = vpop.f32.mrb[0].mxu0
        %v4997 = vadd.f32 %v4580, %v4996
        %v4998 = vpop.f32.mrb[0].mxu0
        %4999 = vmatprep.mubr.bf16.mxu0 %v2889
        %5000 = vmatmul.mubr.bf16.gmra.mrb[0].mxu0 %v2888
        %v5001 = vpop.f32.mrb[0].mxu0
        %v5002 = vadd.f32 %v4585, %v5001
        %v5003 = vpop.f32.mrb[0].mxu0
        %v5004 = vpop.f32.mrb[0].mxu0
        %v5005 = vadd.f32 %v4588, %v5004
        %v5006 = vpop.f32.mrb[0].mxu0
        %5007 = vmatprep.mubr.bf16.mxu0 %v2901
        %5008 = vmatmul.mubr.bf16.gmra.mrb[0].mxu0 %v2900
        %v5009 = vpop.f32.mrb[0].mxu0
        %v5010 = vadd.f32 %v4593, %v5009
        %v5011 = vpop.f32.mrb[0].mxu0
        %v5012 = vpop.f32.mrb[0].mxu0
        %v5013 = vadd.f32 %v4596, %v5012
        %v5014 = vpop.f32.mrb[0].mxu0
        %5015 = vmatprep.mubr.bf16.mxu0 %v2913
        %5016 = vmatmul.mubr.bf16.gmra.mrb[0].mxu0 %v2912
        %v5017 = vpop.f32.mrb[0].mxu0
        %v5018 = vadd.f32 %v4601, %v5017
        %v5019 = vpop.f32.mrb[0].mxu0
        %v5020 = vpop.f32.mrb[0].mxu0
        %v5021 = vadd.f32 %v4604, %v5020
        %v5022 = vpop.f32.mrb[0].mxu0
        %5023 = vmatprep.mubr.bf16.mxu0 %v2925
        %5024 = vmatmul.mubr.bf16.gmra.mrb[0].mxu0 %v2924
        %v5025 = vpop.f32.mrb[0].mxu0
        %v5026 = vadd.f32 %v4609, %v5025
        %v5027 = vpop.f32.mrb[0].mxu0
        %v5028 = vpop.f32.mrb[0].mxu0
        %v5029 = vadd.f32 %v4612, %v5028
        %v5030 = vpop.f32.mrb[0].mxu0
        %5031 = vmatprep.mubr.bf16.mxu0 %v2937
        %5032 = vmatmul.mubr.bf16.gmra.mrb[0].mxu0 %v2936
        %v5033 = vpop.f32.mrb[0].mxu0
        %v5034 = vadd.f32 %v4617, %v5033
        %v5035 = vpop.f32.mrb[0].mxu0
        %v5036 = vpop.f32.mrb[0].mxu0
        %v5037 = vadd.f32 %v4620, %v5036
        %v5038 = vpop.f32.mrb[0].mxu0
        %5039 = vmatprep.mubr.bf16.mxu0 %v2949
        %5040 = vmatmul.mubr.bf16.gmra.mrb[0].mxu0 %v2948
        %v5041 = vpop.f32.mrb[0].mxu0
        %v5042 = vadd.f32 %v4625, %v5041
        %v5043 = vpop.f32.mrb[0].mxu0
        %v5044 = vpop.f32.mrb[0].mxu0
        %v5045 = vadd.f32 %v4628, %v5044
        %v5046 = vpop.f32.mrb[0].mxu0
        %5047 = vmatprep.mubr.bf16.mxu0 %v2961
        %5048 = vmatmul.mubr.bf16.gmra.mrb[0].mxu0 %v2960
        %v5049 = vpop.f32.mrb[0].mxu0
        %v5050 = vadd.f32 %v4633, %v5049
        %v5051 = vpop.f32.mrb[0].mxu0
        %v5052 = vpop.f32.mrb[0].mxu0
        %v5053 = vadd.f32 %v4636, %v5052
        %v5054 = vpop.f32.mrb[0].mxu0
        %5055 = vmatprep.mubr.bf16.mxu0 %v2973
        %5056 = vmatmul.mubr.bf16.gmra.mrb[0].mxu0 %v2972
        %v5057 = vpop.f32.mrb[0].mxu0
        %v5058 = vadd.f32 %v4641, %v5057
        %v5059 = vpop.f32.mrb[0].mxu0
        %v5060 = vpop.f32.mrb[0].mxu0
        %v5061 = vadd.f32 %v4644, %v5060
        %v5062 = vpop.f32.mrb[0].mxu0
        %5063 = vmatprep.mubr.bf16.mxu0 %v2985
        %5064 = vmatmul.mubr.bf16.gmra.mrb[0].mxu0 %v2984
        %v5065 = vpop.f32.mrb[0].mxu0
        %v5066 = vadd.f32 %v4649, %v5065
        %v5067 = vpop.f32.mrb[0].mxu0
        %v5068 = vpop.f32.mrb[0].mxu0
        %v5069 = vadd.f32 %v4652, %v5068
        %v5070 = vpop.f32.mrb[0].mxu0
        %5071 = vmatprep.mubr.bf16.mxu0 %v2997
        %5072 = vmatmul.mubr.bf16.gmra.mrb[0].mxu0 %v2996
        %v5073 = vpop.f32.mrb[0].mxu0
        %v5074 = vadd.f32 %v4657, %v5073
        %v5075 = vpop.f32.mrb[0].mxu0
        %v5076 = vpop.f32.mrb[0].mxu0
        %v5077 = vadd.f32 %v4660, %v5076
        %v5078 = vpop.f32.mrb[0].mxu0
        %5079 = vmatprep.mubr.bf16.mxu0 %v3009
        %5080 = vmatmul.mubr.bf16.gmra.mrb[0].mxu0 %v3008
        %v5081 = vpop.f32.mrb[0].mxu0
        %v5082 = vadd.f32 %v4665, %v5081
        %v5083 = vpop.f32.mrb[0].mxu0
        %v5084 = vpop.f32.mrb[0].mxu0
        %v5085 = vadd.f32 %v4668, %v5084
        %v5086 = vpop.f32.mrb[0].mxu0
        %5087 = vmatprep.mubr.bf16.mxu0 %v3021
        %5088 = vmatmul.mubr.bf16.gmra.mrb[0].mxu0 %v3020
        %v5089 = vpop.f32.mrb[0].mxu0
        %v5090 = vadd.f32 %v4673, %v5089
        %v5091 = vpop.f32.mrb[0].mxu0
        %v5092 = vpop.f32.mrb[0].mxu0
        %v5093 = vadd.f32 %v4676, %v5092
        %v5094 = vpop.f32.mrb[0].mxu0
        %5095 = vmatprep.mubr.bf16.mxu0 %v3033
        %5096 = vmatmul.mubr.bf16.gmra.mrb[0].mxu0 %v3032
        %v5097 = vpop.f32.mrb[0].mxu0
        %v5098 = vadd.f32 %v4681, %v5097
        %v5099 = vpop.f32.mrb[0].mxu0
        %v5100 = vpop.f32.mrb[0].mxu0
        %v5101 = vadd.f32 %v4684, %v5100
        %v5102 = vpop.f32.mrb[0].mxu0
        %5103 = vmatprep.mubr.bf16.mxu0 %v3045
        %5104 = vmatmul.mubr.bf16.gmra.mrb[0].mxu0 %v3044
        %v5105 = vpop.f32.mrb[0].mxu0
        %v5106 = vadd.f32 %v4689, %v5105
        %v5107 = vpop.f32.mrb[0].mxu0
        %v5108 = vpop.f32.mrb[0].mxu0
        %v5109 = vadd.f32 %v4692, %v5108
        %v5110 = vpop.f32.mrb[0].mxu0
        %5111 = vmatprep.mubr.bf16.mxu0 %v3057
        %5112 = vmatmul.mubr.bf16.gmra.mrb[0].mxu0 %v3056
        %v5113 = vpop.f32.mrb[0].mxu0
        %v5114 = vadd.f32 %v4697, %v5113
        %v5115 = vpop.f32.mrb[0].mxu0
        %v5116 = vpop.f32.mrb[0].mxu0
        %v5117 = vadd.f32 %v4700, %v5116
        %v5118 = vpop.f32.mrb[0].mxu0
        %5119 = vmatprep.mubr.bf16.mxu0 %v3069
        %5120 = vmatmul.mubr.bf16.gmra.mrb[0].mxu0 %v3068
        %v5121 = vpop.f32.mrb[0].mxu0
        %v5122 = vadd.f32 %v4705, %v5121
        %v5123 = vpop.f32.mrb[0].mxu0
        %v5124 = vpop.f32.mrb[0].mxu0
        %v5125 = vadd.f32 %v4708, %v5124
        %v5126 = vpop.f32.mrb[0].mxu0
        %5127 = vmatprep.mubr.bf16.mxu0 %v3081
        %5128 = vmatmul.mubr.bf16.gmra.mrb[0].mxu0 %v3080
        %v5129 = vpop.f32.mrb[0].mxu0
        %v5130 = vadd.f32 %v4713, %v5129
        %v5131 = vpop.f32.mrb[0].mxu0
        %v5132 = vpop.f32.mrb[0].mxu0
        %v5133 = vadd.f32 %v4716, %v5132
        %v5134 = vpop.f32.mrb[0].mxu0
        %5135 = vmatprep.mubr.bf16.mxu0 %v3093
        %5136 = vmatmul.mubr.bf16.gmra.mrb[0].mxu0 %v3092
        %v5137 = vpop.f32.mrb[0].mxu0
        %v5138 = vadd.f32 %v4721, %v5137
        %v5139 = vpop.f32.mrb[0].mxu0
        %v5140 = vpop.f32.mrb[0].mxu0
        %v5141 = vadd.f32 %v4724, %v5140
        %v5142 = vpop.f32.mrb[0].mxu0
        %5143 = vmatprep.mubr.bf16.mxu0 %v3105
        %5144 = vmatmul.mubr.bf16.gmra.mrb[0].mxu0 %v3104
        %v5145 = vpop.f32.mrb[0].mxu0
        %v5146 = vadd.f32 %v4729, %v5145
        %v5147 = vpop.f32.mrb[0].mxu0
        %v5148 = vpop.f32.mrb[0].mxu0
        %v5149 = vadd.f32 %v4732, %v5148
        %v5150 = vpop.f32.mrb[0].mxu0
        %5151 = vmatprep.mubr.bf16.mxu0 %v3117
        %5152 = vmatmul.mubr.bf16.gmra.mrb[0].mxu0 %v3116
        %v5153 = vpop.f32.mrb[0].mxu0
        %v5154 = vadd.f32 %v4737, %v5153
        %v5155 = vpop.f32.mrb[0].mxu0
        %v5156 = vpop.f32.mrb[0].mxu0
        %v5157 = vadd.f32 %v4740, %v5156
        %v5158 = vpop.f32.mrb[0].mxu0
        %5159 = vmatprep.mubr.bf16.mxu0 %v3129
        %5160 = vmatmul.mubr.bf16.gmra.mrb[0].mxu0 %v3128
        %v5161 = vpop.f32.mrb[0].mxu0
        %v5162 = vadd.f32 %v4745, %v5161
        %v5163 = vpop.f32.mrb[0].mxu0
        %v5164 = vpop.f32.mrb[0].mxu0
        %v5165 = vadd.f32 %v4748, %v5164
        %v5166 = vpop.f32.mrb[0].mxu0
        %5167 = vmatprep.mubr.bf16.mxu0 %v3141
        %5168 = vmatmul.mubr.bf16.gmra.mrb[0].mxu0 %v3140
        %v5169 = vpop.f32.mrb[0].mxu0
        %v5170 = vadd.f32 %v4753, %v5169
        %v5171 = vpop.f32.mrb[0].mxu0
        %v5172 = vpop.f32.mrb[0].mxu0
        %v5173 = vadd.f32 %v4756, %v5172
        %v5174 = vpop.f32.mrb[0].mxu0
        %5175 = vmatprep.mubr.bf16.mxu0 %v3153
        %5176 = vmatmul.mubr.bf16.gmra.mrb[0].mxu0 %v3152
        %v5177 = vpop.f32.mrb[0].mxu0
        %v5178 = vadd.f32 %v4761, %v5177
        %v5179 = vpop.f32.mrb[0].mxu0
        %v5180 = vpop.f32.mrb[0].mxu0
        %v5181 = vadd.f32 %v4764, %v5180
        %v5182 = vpop.f32.mrb[0].mxu0
        %5183 = vmatprep.mubr.bf16.mxu0 %v3165
        %5184 = vmatmul.mubr.bf16.gmra.mrb[0].mxu0 %v3164
        %v5185 = vpop.f32.mrb[0].mxu0
        %v5186 = vadd.f32 %v4769, %v5185
        %v5187 = vpop.f32.mrb[0].mxu0
        %v5188 = vpop.f32.mrb[0].mxu0
        %v5189 = vadd.f32 %v4772, %v5188
        %v5190 = vpop.f32.mrb[0].mxu0
        %5191 = vmatprep.mubr.bf16.mxu0 %v3177
        %5192 = vmatmul.mubr.bf16.gmra.mrb[0].mxu0 %v3176
        %v5193 = vpop.f32.mrb[0].mxu0
        %v5194 = vadd.f32 %v4777, %v5193
        %v5195 = vpop.f32.mrb[0].mxu0
        %v5196 = vpop.f32.mrb[0].mxu0
        %v5197 = vadd.f32 %v4780, %v5196
        %v5198 = vpop.f32.mrb[0].mxu0
        %5199 = vmatprep.mubr.bf16.mxu0 %v3189
        %5200 = vmatmul.mubr.bf16.gmra.mrb[0].mxu0 %v3188
        %v5201 = vpop.f32.mrb[0].mxu0
        %v5202 = vadd.f32 %v4785, %v5201
        %v5203 = vpop.f32.mrb[0].mxu0
        %v5204 = vpop.f32.mrb[0].mxu0
        %v5205 = vadd.f32 %v4788, %v5204
        %v5206 = vpop.f32.mrb[0].mxu0
        %5207 = vmatprep.mubr.bf16.mxu0 %v3201
        %5208 = vmatmul.mubr.bf16.gmra.mrb[0].mxu0 %v3200
        %v5209 = vpop.f32.mrb[0].mxu0
        %v5210 = vadd.f32 %v4793, %v5209
        %v5211 = vpop.f32.mrb[0].mxu0
        %v5212 = vpop.f32.mrb[0].mxu0
        %v5213 = vadd.f32 %v4796, %v5212
        %v5214 = vpop.f32.mrb[0].mxu0
        %5215 = vmatprep.mubr.bf16.mxu0 %v3213
        %5216 = vmatmul.mubr.bf16.gmra.mrb[0].mxu0 %v3212
        %v5217 = vpop.f32.mrb[0].mxu0
        %v5218 = vadd.f32 %v4801, %v5217
        %v5219 = vpop.f32.mrb[0].mxu0
        %v5220 = vpop.f32.mrb[0].mxu0
        %v5221 = vadd.f32 %v4804, %v5220
        %v5222 = vpop.f32.mrb[0].mxu0
        %5223 = vmatprep.mubr.bf16.mxu0 %v3225
        %5224 = vmatmul.mubr.bf16.gmra.mrb[0].mxu0 %v3224
        %v5225 = vpop.f32.mrb[0].mxu0
        %v5226 = vadd.f32 %v4809, %v5225
        %v5227 = vpop.f32.mrb[0].mxu0
        %v5228 = vpop.f32.mrb[0].mxu0
        %v5229 = vadd.f32 %v4812, %v5228
        %v5230 = vpop.f32.mrb[0].mxu0
        %5231 = vmatprep.mubr.bf16.mxu0 %v3237
        %5232 = vmatmul.mubr.bf16.gmra.mrb[0].mxu0 %v3236
        %v5233 = vpop.f32.mrb[0].mxu0
        %v5234 = vadd.f32 %v4817, %v5233
        %v5235 = vpop.f32.mrb[0].mxu0
        %v5236 = vpop.f32.mrb[0].mxu0
        %v5237 = vadd.f32 %v4820, %v5236
        %v5238 = vpop.f32.mrb[0].mxu0
        %5239 = vmatprep.mubr.bf16.mxu0 %v3249
        %5240 = vmatmul.mubr.bf16.gmra.mrb[0].mxu0 %v3248
        %v5241 = vpop.f32.mrb[0].mxu0
        %v5242 = vadd.f32 %v4825, %v5241
        %v5243 = vpop.f32.mrb[0].mxu0
        %v5244 = vpop.f32.mrb[0].mxu0
        %v5245 = vadd.f32 %v4828, %v5244
        %v5246 = vpop.f32.mrb[0].mxu0
        %5247 = vmatprep.mubr.bf16.mxu0 %v3261
        %5248 = vmatmul.mubr.bf16.gmra.mrb[0].mxu0 %v3260
        %v5249 = vpop.f32.mrb[0].mxu0
        %v5250 = vadd.f32 %v4833, %v5249
        %v5251 = vpop.f32.mrb[0].mxu0
        %v5252 = vpop.f32.mrb[0].mxu0
        %v5253 = vadd.f32 %v4836, %v5252
        %v5254 = vpop.f32.mrb[0].mxu0
        %5255 = vdwg.mxu0
        %5256 = vmatprep.subr.bf16.mxu0 0
        %5257 = vmatpush1.bf16.msra.mxu0 %v4262
        %5258 = vmatprep.subr.bf16.mxu0 0
        %5259 = vmatpush1.bf16.msra.mxu0 %v4263
        %5260 = vmatprep.subr.bf16.mxu0 0
        %5261 = vmatpush1.bf16.msra.mxu0 %v4264
        %5262 = vmatprep.subr.bf16.mxu0 0
        %5263 = vmatpush1.bf16.msra.mxu0 %v4265
        %5264 = vmatprep.subr.bf16.mxu0 0
        %5265 = vmatpush1.bf16.msra.mxu0 %v4266
        %5266 = vmatprep.subr.bf16.mxu0 0
        %5267 = vmatpush1.bf16.msra.mxu0 %v4267
        %5268 = vmatprep.subr.bf16.mxu0 0
        %5269 = vmatpush1.bf16.msra.mxu0 %v4268
        %5270 = vmatprep.subr.bf16.mxu0 0
        %5271 = vmatpush1.bf16.msra.mxu0 %v4269
        %5272 = vmatprep.subr.bf16.mxu0 0
        %5273 = vmatpush1.bf16.msra.mxu0 %v4270
        %5274 = vmatprep.subr.bf16.mxu0 0
        %5275 = vmatpush1.bf16.msra.mxu0 %v4271
        %5276 = vmatprep.subr.bf16.mxu0 0
        %5277 = vmatpush1.bf16.msra.mxu0 %v4272
        %5278 = vmatprep.subr.bf16.mxu0 0
        %5279 = vmatpush1.bf16.msra.mxu0 %v4273
        %5280 = vmatprep.subr.bf16.mxu0 0
        %5281 = vmatpush1.bf16.msra.mxu0 %v4274
        %5282 = vmatprep.subr.bf16.mxu0 0
        %5283 = vmatpush1.bf16.msra.mxu0 %v4275
        %5284 = vmatprep.subr.bf16.mxu0 0
        %5285 = vmatpush1.bf16.msra.mxu0 %v4276
        %5286 = vmatprep.subr.bf16.mxu0 0
        %5287 = vmatpush1.bf16.msra.mxu0 %v4277
        %5288 = vmatprep.mubr.bf16.mxu0 %v2699
        %5289 = vmatmul.mubr.bf16.gmra.mrb[0].mxu0 %v2698
        %v5290 = vpop.f32.mrb[0].mxu0
        %v5291 = vadd.f32 %v4874, %v5290
        %v5292 = vpop.f32.mrb[0].mxu0
        %v5293 = vpop.f32.mrb[0].mxu0
        %v5294 = vadd.f32 %v4877, %v5293
        %v5295 = vpop.f32.mrb[0].mxu0
        %5296 = vmatprep.mubr.bf16.mxu0 %v2711
        %5297 = vmatmul.mubr.bf16.gmra.mrb[0].mxu0 %v2710
        %v5298 = vpop.f32.mrb[0].mxu0
        %v5299 = vadd.f32 %v4882, %v5298
        %v5300 = vpop.f32.mrb[0].mxu0
        %v5301 = vpop.f32.mrb[0].mxu0
        %v5302 = vadd.f32 %v4885, %v5301
        %v5303 = vpop.f32.mrb[0].mxu0
        %5304 = vmatprep.mubr.bf16.mxu0 %v2723
        %5305 = vmatmul.mubr.bf16.gmra.mrb[0].mxu0 %v2722
        %v5306 = vpop.f32.mrb[0].mxu0
        %v5307 = vadd.f32 %v4890, %v5306
        %v5308 = vpop.f32.mrb[0].mxu0
        %v5309 = vpop.f32.mrb[0].mxu0
        %v5310 = vadd.f32 %v4893, %v5309
        %v5311 = vpop.f32.mrb[0].mxu0
        %5312 = vmatprep.mubr.bf16.mxu0 %v2735
        %5313 = vmatmul.mubr.bf16.gmra.mrb[0].mxu0 %v2734
        %v5314 = vpop.f32.mrb[0].mxu0
        %v5315 = vadd.f32 %v4898, %v5314
        %v5316 = vpop.f32.mrb[0].mxu0
        %v5317 = vpop.f32.mrb[0].mxu0
        %v5318 = vadd.f32 %v4901, %v5317
        %v5319 = vpop.f32.mrb[0].mxu0
        %5320 = vmatprep.mubr.bf16.mxu0 %v2747
        %5321 = vmatmul.mubr.bf16.gmra.mrb[0].mxu0 %v2746
        %v5322 = vpop.f32.mrb[0].mxu0
        %v5323 = vadd.f32 %v4906, %v5322
        %v5324 = vpop.f32.mrb[0].mxu0
        %v5325 = vpop.f32.mrb[0].mxu0
        %v5326 = vadd.f32 %v4909, %v5325
        %v5327 = vpop.f32.mrb[0].mxu0
        %5328 = vmatprep.mubr.bf16.mxu0 %v2759
        %5329 = vmatmul.mubr.bf16.gmra.mrb[0].mxu0 %v2758
        %v5330 = vpop.f32.mrb[0].mxu0
        %v5331 = vadd.f32 %v4914, %v5330
        %v5332 = vpop.f32.mrb[0].mxu0
        %v5333 = vpop.f32.mrb[0].mxu0
        %v5334 = vadd.f32 %v4917, %v5333
        %v5335 = vpop.f32.mrb[0].mxu0
        %5336 = vmatprep.mubr.bf16.mxu0 %v2771
        %5337 = vmatmul.mubr.bf16.gmra.mrb[0].mxu0 %v2770
        %v5338 = vpop.f32.mrb[0].mxu0
        %v5339 = vadd.f32 %v4922, %v5338
        %v5340 = vpop.f32.mrb[0].mxu0
        %v5341 = vpop.f32.mrb[0].mxu0
        %v5342 = vadd.f32 %v4925, %v5341
        %v5343 = vpop.f32.mrb[0].mxu0
        %5344 = vmatprep.mubr.bf16.mxu0 %v2783
        %5345 = vmatmul.mubr.bf16.gmra.mrb[0].mxu0 %v2782
        %v5346 = vpop.f32.mrb[0].mxu0
        %v5347 = vadd.f32 %v4930, %v5346
        %v5348 = vpop.f32.mrb[0].mxu0
        %v5349 = vpop.f32.mrb[0].mxu0
        %v5350 = vadd.f32 %v4933, %v5349
        %v5351 = vpop.f32.mrb[0].mxu0
        %5352 = vmatprep.mubr.bf16.mxu0 %v2795
        %5353 = vmatmul.mubr.bf16.gmra.mrb[0].mxu0 %v2794
        %v5354 = vpop.f32.mrb[0].mxu0
        %v5355 = vadd.f32 %v4938, %v5354
        %v5356 = vpop.f32.mrb[0].mxu0
        %v5357 = vpop.f32.mrb[0].mxu0
        %v5358 = vadd.f32 %v4941, %v5357
        %v5359 = vpop.f32.mrb[0].mxu0
        %5360 = vmatprep.mubr.bf16.mxu0 %v2807
        %5361 = vmatmul.mubr.bf16.gmra.mrb[0].mxu0 %v2806
        %v5362 = vpop.f32.mrb[0].mxu0
        %v5363 = vadd.f32 %v4946, %v5362
        %v5364 = vpop.f32.mrb[0].mxu0
        %v5365 = vpop.f32.mrb[0].mxu0
        %v5366 = vadd.f32 %v4949, %v5365
        %v5367 = vpop.f32.mrb[0].mxu0
        %5368 = vmatprep.mubr.bf16.mxu0 %v2819
        %5369 = vmatmul.mubr.bf16.gmra.mrb[0].mxu0 %v2818
        %v5370 = vpop.f32.mrb[0].mxu0
        %v5371 = vadd.f32 %v4954, %v5370
        %v5372 = vpop.f32.mrb[0].mxu0
        %v5373 = vpop.f32.mrb[0].mxu0
        %v5374 = vadd.f32 %v4957, %v5373
        %v5375 = vpop.f32.mrb[0].mxu0
        %5376 = vmatprep.mubr.bf16.mxu0 %v2831
        %5377 = vmatmul.mubr.bf16.gmra.mrb[0].mxu0 %v2830
        %v5378 = vpop.f32.mrb[0].mxu0
        %v5379 = vadd.f32 %v4962, %v5378
        %v5380 = vpop.f32.mrb[0].mxu0
        %v5381 = vpop.f32.mrb[0].mxu0
        %v5382 = vadd.f32 %v4965, %v5381
        %v5383 = vpop.f32.mrb[0].mxu0
        %5384 = vmatprep.mubr.bf16.mxu0 %v2843
        %5385 = vmatmul.mubr.bf16.gmra.mrb[0].mxu0 %v2842
        %v5386 = vpop.f32.mrb[0].mxu0
        %v5387 = vadd.f32 %v4970, %v5386
        %v5388 = vpop.f32.mrb[0].mxu0
        %v5389 = vpop.f32.mrb[0].mxu0
        %v5390 = vadd.f32 %v4973, %v5389
        %v5391 = vpop.f32.mrb[0].mxu0
        %5392 = vmatprep.mubr.bf16.mxu0 %v2855
        %5393 = vmatmul.mubr.bf16.gmra.mrb[0].mxu0 %v2854
        %v5394 = vpop.f32.mrb[0].mxu0
        %v5395 = vadd.f32 %v4978, %v5394
        %v5396 = vpop.f32.mrb[0].mxu0
        %v5397 = vpop.f32.mrb[0].mxu0
        %v5398 = vadd.f32 %v4981, %v5397
        %v5399 = vpop.f32.mrb[0].mxu0
        %5400 = vmatprep.mubr.bf16.mxu0 %v2867
        %5401 = vmatmul.mubr.bf16.gmra.mrb[0].mxu0 %v2866
        %v5402 = vpop.f32.mrb[0].mxu0
        %v5403 = vadd.f32 %v4986, %v5402
        %v5404 = vpop.f32.mrb[0].mxu0
        %v5405 = vpop.f32.mrb[0].mxu0
        %v5406 = vadd.f32 %v4989, %v5405
        %v5407 = vpop.f32.mrb[0].mxu0
        %5408 = vmatprep.mubr.bf16.mxu0 %v2879
        %5409 = vmatmul.mubr.bf16.gmra.mrb[0].mxu0 %v2878
        %v5410 = vpop.f32.mrb[0].mxu0
        %v5411 = vadd.f32 %v4994, %v5410
        %v5412 = vpop.f32.mrb[0].mxu0
        %v5413 = vpop.f32.mrb[0].mxu0
        %v5414 = vadd.f32 %v4997, %v5413
        %v5415 = vpop.f32.mrb[0].mxu0
        %5416 = vmatprep.mubr.bf16.mxu0 %v2891
        %5417 = vmatmul.mubr.bf16.gmra.mrb[0].mxu0 %v2890
        %v5418 = vpop.f32.mrb[0].mxu0
        %v5419 = vadd.f32 %v5002, %v5418
        %v5420 = vpop.f32.mrb[0].mxu0
        %v5421 = vpop.f32.mrb[0].mxu0
        %v5422 = vadd.f32 %v5005, %v5421
        %v5423 = vpop.f32.mrb[0].mxu0
        %5424 = vmatprep.mubr.bf16.mxu0 %v2903
        %5425 = vmatmul.mubr.bf16.gmra.mrb[0].mxu0 %v2902
        %v5426 = vpop.f32.mrb[0].mxu0
        %v5427 = vadd.f32 %v5010, %v5426
        %v5428 = vpop.f32.mrb[0].mxu0
        %v5429 = vpop.f32.mrb[0].mxu0
        %v5430 = vadd.f32 %v5013, %v5429
        %v5431 = vpop.f32.mrb[0].mxu0
        %5432 = vmatprep.mubr.bf16.mxu0 %v2915
        %5433 = vmatmul.mubr.bf16.gmra.mrb[0].mxu0 %v2914
        %v5434 = vpop.f32.mrb[0].mxu0
        %v5435 = vadd.f32 %v5018, %v5434
        %v5436 = vpop.f32.mrb[0].mxu0
        %v5437 = vpop.f32.mrb[0].mxu0
        %v5438 = vadd.f32 %v5021, %v5437
        %v5439 = vpop.f32.mrb[0].mxu0
        %5440 = vmatprep.mubr.bf16.mxu0 %v2927
        %5441 = vmatmul.mubr.bf16.gmra.mrb[0].mxu0 %v2926
        %v5442 = vpop.f32.mrb[0].mxu0
        %v5443 = vadd.f32 %v5026, %v5442
        %v5444 = vpop.f32.mrb[0].mxu0
        %v5445 = vpop.f32.mrb[0].mxu0
        %v5446 = vadd.f32 %v5029, %v5445
        %v5447 = vpop.f32.mrb[0].mxu0
        %5448 = vmatprep.mubr.bf16.mxu0 %v2939
        %5449 = vmatmul.mubr.bf16.gmra.mrb[0].mxu0 %v2938
        %v5450 = vpop.f32.mrb[0].mxu0
        %v5451 = vadd.f32 %v5034, %v5450
        %v5452 = vpop.f32.mrb[0].mxu0
        %v5453 = vpop.f32.mrb[0].mxu0
        %v5454 = vadd.f32 %v5037, %v5453
        %v5455 = vpop.f32.mrb[0].mxu0
        %5456 = vmatprep.mubr.bf16.mxu0 %v2951
        %5457 = vmatmul.mubr.bf16.gmra.mrb[0].mxu0 %v2950
        %v5458 = vpop.f32.mrb[0].mxu0
        %v5459 = vadd.f32 %v5042, %v5458
        %v5460 = vpop.f32.mrb[0].mxu0
        %v5461 = vpop.f32.mrb[0].mxu0
        %v5462 = vadd.f32 %v5045, %v5461
        %v5463 = vpop.f32.mrb[0].mxu0
        %5464 = vmatprep.mubr.bf16.mxu0 %v2963
        %5465 = vmatmul.mubr.bf16.gmra.mrb[0].mxu0 %v2962
        %v5466 = vpop.f32.mrb[0].mxu0
        %v5467 = vadd.f32 %v5050, %v5466
        %v5468 = vpop.f32.mrb[0].mxu0
        %v5469 = vpop.f32.mrb[0].mxu0
        %v5470 = vadd.f32 %v5053, %v5469
        %v5471 = vpop.f32.mrb[0].mxu0
        %5472 = vmatprep.mubr.bf16.mxu0 %v2975
        %5473 = vmatmul.mubr.bf16.gmra.mrb[0].mxu0 %v2974
        %v5474 = vpop.f32.mrb[0].mxu0
        %v5475 = vadd.f32 %v5058, %v5474
        %v5476 = vpop.f32.mrb[0].mxu0
        %v5477 = vpop.f32.mrb[0].mxu0
        %v5478 = vadd.f32 %v5061, %v5477
        %v5479 = vpop.f32.mrb[0].mxu0
        %5480 = vmatprep.mubr.bf16.mxu0 %v2987
        %5481 = vmatmul.mubr.bf16.gmra.mrb[0].mxu0 %v2986
        %v5482 = vpop.f32.mrb[0].mxu0
        %v5483 = vadd.f32 %v5066, %v5482
        %v5484 = vpop.f32.mrb[0].mxu0
        %v5485 = vpop.f32.mrb[0].mxu0
        %v5486 = vadd.f32 %v5069, %v5485
        %v5487 = vpop.f32.mrb[0].mxu0
        %5488 = vmatprep.mubr.bf16.mxu0 %v2999
        %5489 = vmatmul.mubr.bf16.gmra.mrb[0].mxu0 %v2998
        %v5490 = vpop.f32.mrb[0].mxu0
        %v5491 = vadd.f32 %v5074, %v5490
        %v5492 = vpop.f32.mrb[0].mxu0
        %v5493 = vpop.f32.mrb[0].mxu0
        %v5494 = vadd.f32 %v5077, %v5493
        %v5495 = vpop.f32.mrb[0].mxu0
        %5496 = vmatprep.mubr.bf16.mxu0 %v3011
        %5497 = vmatmul.mubr.bf16.gmra.mrb[0].mxu0 %v3010
        %v5498 = vpop.f32.mrb[0].mxu0
        %v5499 = vadd.f32 %v5082, %v5498
        %v5500 = vpop.f32.mrb[0].mxu0
        %v5501 = vpop.f32.mrb[0].mxu0
        %v5502 = vadd.f32 %v5085, %v5501
        %v5503 = vpop.f32.mrb[0].mxu0
        %5504 = vmatprep.mubr.bf16.mxu0 %v3023
        %5505 = vmatmul.mubr.bf16.gmra.mrb[0].mxu0 %v3022
        %v5506 = vpop.f32.mrb[0].mxu0
        %v5507 = vadd.f32 %v5090, %v5506
        %v5508 = vpop.f32.mrb[0].mxu0
        %v5509 = vpop.f32.mrb[0].mxu0
        %v5510 = vadd.f32 %v5093, %v5509
        %v5511 = vpop.f32.mrb[0].mxu0
        %5512 = vmatprep.mubr.bf16.mxu0 %v3035
        %5513 = vmatmul.mubr.bf16.gmra.mrb[0].mxu0 %v3034
        %v5514 = vpop.f32.mrb[0].mxu0
        %v5515 = vadd.f32 %v5098, %v5514
        %v5516 = vpop.f32.mrb[0].mxu0
        %v5517 = vpop.f32.mrb[0].mxu0
        %v5518 = vadd.f32 %v5101, %v5517
        %v5519 = vpop.f32.mrb[0].mxu0
        %5520 = vmatprep.mubr.bf16.mxu0 %v3047
        %5521 = vmatmul.mubr.bf16.gmra.mrb[0].mxu0 %v3046
        %v5522 = vpop.f32.mrb[0].mxu0
        %v5523 = vadd.f32 %v5106, %v5522
        %v5524 = vpop.f32.mrb[0].mxu0
        %v5525 = vpop.f32.mrb[0].mxu0
        %v5526 = vadd.f32 %v5109, %v5525
        %v5527 = vpop.f32.mrb[0].mxu0
        %5528 = vmatprep.mubr.bf16.mxu0 %v3059
        %5529 = vmatmul.mubr.bf16.gmra.mrb[0].mxu0 %v3058
        %v5530 = vpop.f32.mrb[0].mxu0
        %v5531 = vadd.f32 %v5114, %v5530
        %v5532 = vpop.f32.mrb[0].mxu0
        %v5533 = vpop.f32.mrb[0].mxu0
        %v5534 = vadd.f32 %v5117, %v5533
        %v5535 = vpop.f32.mrb[0].mxu0
        %5536 = vmatprep.mubr.bf16.mxu0 %v3071
        %5537 = vmatmul.mubr.bf16.gmra.mrb[0].mxu0 %v3070
        %v5538 = vpop.f32.mrb[0].mxu0
        %v5539 = vadd.f32 %v5122, %v5538
        %v5540 = vpop.f32.mrb[0].mxu0
        %v5541 = vpop.f32.mrb[0].mxu0
        %v5542 = vadd.f32 %v5125, %v5541
        %v5543 = vpop.f32.mrb[0].mxu0
        %5544 = vmatprep.mubr.bf16.mxu0 %v3083
        %5545 = vmatmul.mubr.bf16.gmra.mrb[0].mxu0 %v3082
        %v5546 = vpop.f32.mrb[0].mxu0
        %v5547 = vadd.f32 %v5130, %v5546
        %v5548 = vpop.f32.mrb[0].mxu0
        %v5549 = vpop.f32.mrb[0].mxu0
        %v5550 = vadd.f32 %v5133, %v5549
        %v5551 = vpop.f32.mrb[0].mxu0
        %5552 = vmatprep.mubr.bf16.mxu0 %v3095
        %5553 = vmatmul.mubr.bf16.gmra.mrb[0].mxu0 %v3094
        %v5554 = vpop.f32.mrb[0].mxu0
        %v5555 = vadd.f32 %v5138, %v5554
        %v5556 = vpop.f32.mrb[0].mxu0
        %v5557 = vpop.f32.mrb[0].mxu0
        %v5558 = vadd.f32 %v5141, %v5557
        %v5559 = vpop.f32.mrb[0].mxu0
        %5560 = vmatprep.mubr.bf16.mxu0 %v3107
        %5561 = vmatmul.mubr.bf16.gmra.mrb[0].mxu0 %v3106
        %v5562 = vpop.f32.mrb[0].mxu0
        %v5563 = vadd.f32 %v5146, %v5562
        %v5564 = vpop.f32.mrb[0].mxu0
        %v5565 = vpop.f32.mrb[0].mxu0
        %v5566 = vadd.f32 %v5149, %v5565
        %v5567 = vpop.f32.mrb[0].mxu0
        %5568 = vmatprep.mubr.bf16.mxu0 %v3119
        %5569 = vmatmul.mubr.bf16.gmra.mrb[0].mxu0 %v3118
        %v5570 = vpop.f32.mrb[0].mxu0
        %v5571 = vadd.f32 %v5154, %v5570
        %v5572 = vpop.f32.mrb[0].mxu0
        %v5573 = vpop.f32.mrb[0].mxu0
        %v5574 = vadd.f32 %v5157, %v5573
        %v5575 = vpop.f32.mrb[0].mxu0
        %5576 = vmatprep.mubr.bf16.mxu0 %v3131
        %5577 = vmatmul.mubr.bf16.gmra.mrb[0].mxu0 %v3130
        %v5578 = vpop.f32.mrb[0].mxu0
        %v5579 = vadd.f32 %v5162, %v5578
        %v5580 = vpop.f32.mrb[0].mxu0
        %v5581 = vpop.f32.mrb[0].mxu0
        %v5582 = vadd.f32 %v5165, %v5581
        %v5583 = vpop.f32.mrb[0].mxu0
        %5584 = vmatprep.mubr.bf16.mxu0 %v3143
        %5585 = vmatmul.mubr.bf16.gmra.mrb[0].mxu0 %v3142
        %v5586 = vpop.f32.mrb[0].mxu0
        %v5587 = vadd.f32 %v5170, %v5586
        %v5588 = vpop.f32.mrb[0].mxu0
        %v5589 = vpop.f32.mrb[0].mxu0
        %v5590 = vadd.f32 %v5173, %v5589
        %v5591 = vpop.f32.mrb[0].mxu0
        %5592 = vmatprep.mubr.bf16.mxu0 %v3155
        %5593 = vmatmul.mubr.bf16.gmra.mrb[0].mxu0 %v3154
        %v5594 = vpop.f32.mrb[0].mxu0
        %v5595 = vadd.f32 %v5178, %v5594
        %v5596 = vpop.f32.mrb[0].mxu0
        %v5597 = vpop.f32.mrb[0].mxu0
        %v5598 = vadd.f32 %v5181, %v5597
        %v5599 = vpop.f32.mrb[0].mxu0
        %5600 = vmatprep.mubr.bf16.mxu0 %v3167
        %5601 = vmatmul.mubr.bf16.gmra.mrb[0].mxu0 %v3166
        %v5602 = vpop.f32.mrb[0].mxu0
        %v5603 = vadd.f32 %v5186, %v5602
        %v5604 = vpop.f32.mrb[0].mxu0
        %v5605 = vpop.f32.mrb[0].mxu0
        %v5606 = vadd.f32 %v5189, %v5605
        %v5607 = vpop.f32.mrb[0].mxu0
        %5608 = vmatprep.mubr.bf16.mxu0 %v3179
        %5609 = vmatmul.mubr.bf16.gmra.mrb[0].mxu0 %v3178
        %v5610 = vpop.f32.mrb[0].mxu0
        %v5611 = vadd.f32 %v5194, %v5610
        %v5612 = vpop.f32.mrb[0].mxu0
        %v5613 = vpop.f32.mrb[0].mxu0
        %v5614 = vadd.f32 %v5197, %v5613
        %v5615 = vpop.f32.mrb[0].mxu0
        %5616 = vmatprep.mubr.bf16.mxu0 %v3191
        %5617 = vmatmul.mubr.bf16.gmra.mrb[0].mxu0 %v3190
        %v5618 = vpop.f32.mrb[0].mxu0
        %v5619 = vadd.f32 %v5202, %v5618
        %v5620 = vpop.f32.mrb[0].mxu0
        %v5621 = vpop.f32.mrb[0].mxu0
        %v5622 = vadd.f32 %v5205, %v5621
        %v5623 = vpop.f32.mrb[0].mxu0
        %5624 = vmatprep.mubr.bf16.mxu0 %v3203
        %5625 = vmatmul.mubr.bf16.gmra.mrb[0].mxu0 %v3202
        %v5626 = vpop.f32.mrb[0].mxu0
        %v5627 = vadd.f32 %v5210, %v5626
        %v5628 = vpop.f32.mrb[0].mxu0
        %v5629 = vpop.f32.mrb[0].mxu0
        %v5630 = vadd.f32 %v5213, %v5629
        %v5631 = vpop.f32.mrb[0].mxu0
        %5632 = vmatprep.mubr.bf16.mxu0 %v3215
        %5633 = vmatmul.mubr.bf16.gmra.mrb[0].mxu0 %v3214
        %v5634 = vpop.f32.mrb[0].mxu0
        %v5635 = vadd.f32 %v5218, %v5634
        %v5636 = vpop.f32.mrb[0].mxu0
        %v5637 = vpop.f32.mrb[0].mxu0
        %v5638 = vadd.f32 %v5221, %v5637
        %v5639 = vpop.f32.mrb[0].mxu0
        %5640 = vmatprep.mubr.bf16.mxu0 %v3227
        %5641 = vmatmul.mubr.bf16.gmra.mrb[0].mxu0 %v3226
        %v5642 = vpop.f32.mrb[0].mxu0
        %v5643 = vadd.f32 %v5226, %v5642
        %v5644 = vpop.f32.mrb[0].mxu0
        %v5645 = vpop.f32.mrb[0].mxu0
        %v5646 = vadd.f32 %v5229, %v5645
        %v5647 = vpop.f32.mrb[0].mxu0
        %5648 = vmatprep.mubr.bf16.mxu0 %v3239
        %5649 = vmatmul.mubr.bf16.gmra.mrb[0].mxu0 %v3238
        %v5650 = vpop.f32.mrb[0].mxu0
        %v5651 = vadd.f32 %v5234, %v5650
        %v5652 = vpop.f32.mrb[0].mxu0
        %v5653 = vpop.f32.mrb[0].mxu0
        %v5654 = vadd.f32 %v5237, %v5653
        %v5655 = vpop.f32.mrb[0].mxu0
        %5656 = vmatprep.mubr.bf16.mxu0 %v3251
        %5657 = vmatmul.mubr.bf16.gmra.mrb[0].mxu0 %v3250
        %v5658 = vpop.f32.mrb[0].mxu0
        %v5659 = vadd.f32 %v5242, %v5658
        %v5660 = vpop.f32.mrb[0].mxu0
        %v5661 = vpop.f32.mrb[0].mxu0
        %v5662 = vadd.f32 %v5245, %v5661
        %v5663 = vpop.f32.mrb[0].mxu0
        %5664 = vmatprep.mubr.bf16.mxu0 %v3263
        %5665 = vmatmul.mubr.bf16.gmra.mrb[0].mxu0 %v3262
        %v5666 = vpop.f32.mrb[0].mxu0
        %v5667 = vadd.f32 %v5250, %v5666
        %v5668 = vpop.f32.mrb[0].mxu0
        %v5669 = vpop.f32.mrb[0].mxu0
        %v5670 = vadd.f32 %v5253, %v5669
        %v5671 = vpop.f32.mrb[0].mxu0
        %5672 = vdwg.mxu0
        %5673 = vmatprep.subr.bf16.mxu0 0
        %5674 = vmatpush1.bf16.msra.mxu0 %v4278
        %5675 = vmatprep.subr.bf16.mxu0 0
        %5676 = vmatpush1.bf16.msra.mxu0 %v4279
        %5677 = vmatprep.subr.bf16.mxu0 0
        %5678 = vmatpush1.bf16.msra.mxu0 %v4280
        %5679 = vmatprep.subr.bf16.mxu0 0
        %5680 = vmatpush1.bf16.msra.mxu0 %v4281
        %5681 = vmatprep.subr.bf16.mxu0 0
        %5682 = vmatpush1.bf16.msra.mxu0 %v4282
        %5683 = vmatprep.subr.bf16.mxu0 0
        %5684 = vmatpush1.bf16.msra.mxu0 %v4283
        %5685 = vmatprep.subr.bf16.mxu0 0
        %5686 = vmatpush1.bf16.msra.mxu0 %v4284
        %5687 = vmatprep.subr.bf16.mxu0 0
        %5688 = vmatpush1.bf16.msra.mxu0 %v4285
        %5689 = vmatprep.subr.bf16.mxu0 0
        %5690 = vmatpush1.bf16.msra.mxu0 %v4286
        %5691 = vmatprep.subr.bf16.mxu0 0
        %5692 = vmatpush1.bf16.msra.mxu0 %v4287
        %5693 = vmatprep.subr.bf16.mxu0 0
        %5694 = vmatpush1.bf16.msra.mxu0 %v4288
        %5695 = vmatprep.subr.bf16.mxu0 0
        %5696 = vmatpush1.bf16.msra.mxu0 %v4289
        %5697 = vmatprep.subr.bf16.mxu0 0
        %5698 = vmatpush1.bf16.msra.mxu0 %v4290
        %5699 = vmatprep.subr.bf16.mxu0 0
        %5700 = vmatpush1.bf16.msra.mxu0 %v4291
        %5701 = vmatprep.subr.bf16.mxu0 0
        %5702 = vmatpush1.bf16.msra.mxu0 %v4292
        %5703 = vmatprep.subr.bf16.mxu0 0
        %5704 = vmatpush1.bf16.msra.mxu0 %v4293
        %5705 = vmatprep.mubr.bf16.mxu0 %v2701
        %5706 = vmatmul.mubr.bf16.gmra.mrb[0].mxu0 %v2700
        %v5707 = vpop.f32.mrb[0].mxu0
        %v5708 = vadd.f32 %v5291, %v5707
        %v5709 = vpop.f32.mrb[0].mxu0
        %v5710 = vpop.f32.mrb[0].mxu0
        %v5711 = vadd.f32 %v5294, %v5710
        %v5712 = vpop.f32.mrb[0].mxu0
        %5713 = vmatprep.mubr.bf16.mxu0 %v2713
        %5714 = vmatmul.mubr.bf16.gmra.mrb[0].mxu0 %v2712
        %v5715 = vpop.f32.mrb[0].mxu0
        %v5716 = vadd.f32 %v5299, %v5715
        %v5717 = vpop.f32.mrb[0].mxu0
        %v5718 = vpop.f32.mrb[0].mxu0
        %v5719 = vadd.f32 %v5302, %v5718
        %v5720 = vpop.f32.mrb[0].mxu0
        %5721 = vmatprep.mubr.bf16.mxu0 %v2725
        %5722 = vmatmul.mubr.bf16.gmra.mrb[0].mxu0 %v2724
        %v5723 = vpop.f32.mrb[0].mxu0
        %v5724 = vadd.f32 %v5307, %v5723
        %v5725 = vpop.f32.mrb[0].mxu0
        %v5726 = vpop.f32.mrb[0].mxu0
        %v5727 = vadd.f32 %v5310, %v5726
        %v5728 = vpop.f32.mrb[0].mxu0
        %5729 = vmatprep.mubr.bf16.mxu0 %v2737
        %5730 = vmatmul.mubr.bf16.gmra.mrb[0].mxu0 %v2736
        %v5731 = vpop.f32.mrb[0].mxu0
        %v5732 = vadd.f32 %v5315, %v5731
        %v5733 = vpop.f32.mrb[0].mxu0
        %v5734 = vpop.f32.mrb[0].mxu0
        %v5735 = vadd.f32 %v5318, %v5734
        %v5736 = vpop.f32.mrb[0].mxu0
        %5737 = vmatprep.mubr.bf16.mxu0 %v2749
        %5738 = vmatmul.mubr.bf16.gmra.mrb[0].mxu0 %v2748
        %v5739 = vpop.f32.mrb[0].mxu0
        %v5740 = vadd.f32 %v5323, %v5739
        %v5741 = vpop.f32.mrb[0].mxu0
        %v5742 = vpop.f32.mrb[0].mxu0
        %v5743 = vadd.f32 %v5326, %v5742
        %v5744 = vpop.f32.mrb[0].mxu0
        %5745 = vmatprep.mubr.bf16.mxu0 %v2761
        %5746 = vmatmul.mubr.bf16.gmra.mrb[0].mxu0 %v2760
        %v5747 = vpop.f32.mrb[0].mxu0
        %v5748 = vadd.f32 %v5331, %v5747
        %v5749 = vpop.f32.mrb[0].mxu0
        %v5750 = vpop.f32.mrb[0].mxu0
        %v5751 = vadd.f32 %v5334, %v5750
        %v5752 = vpop.f32.mrb[0].mxu0
        %5753 = vmatprep.mubr.bf16.mxu0 %v2773
        %5754 = vmatmul.mubr.bf16.gmra.mrb[0].mxu0 %v2772
        %v5755 = vpop.f32.mrb[0].mxu0
        %v5756 = vadd.f32 %v5339, %v5755
        %v5757 = vpop.f32.mrb[0].mxu0
        %v5758 = vpop.f32.mrb[0].mxu0
        %v5759 = vadd.f32 %v5342, %v5758
        %v5760 = vpop.f32.mrb[0].mxu0
        %5761 = vmatprep.mubr.bf16.mxu0 %v2785
        %5762 = vmatmul.mubr.bf16.gmra.mrb[0].mxu0 %v2784
        %v5763 = vpop.f32.mrb[0].mxu0
        %v5764 = vadd.f32 %v5347, %v5763
        %v5765 = vpop.f32.mrb[0].mxu0
        %v5766 = vpop.f32.mrb[0].mxu0
        %v5767 = vadd.f32 %v5350, %v5766
        %v5768 = vpop.f32.mrb[0].mxu0
        %5769 = vmatprep.mubr.bf16.mxu0 %v2797
        %5770 = vmatmul.mubr.bf16.gmra.mrb[0].mxu0 %v2796
        %v5771 = vpop.f32.mrb[0].mxu0
        %v5772 = vadd.f32 %v5355, %v5771
        %v5773 = vpop.f32.mrb[0].mxu0
        %v5774 = vpop.f32.mrb[0].mxu0
        %v5775 = vadd.f32 %v5358, %v5774
        %v5776 = vpop.f32.mrb[0].mxu0
        %5777 = vmatprep.mubr.bf16.mxu0 %v2809
        %5778 = vmatmul.mubr.bf16.gmra.mrb[0].mxu0 %v2808
        %v5779 = vpop.f32.mrb[0].mxu0
        %v5780 = vadd.f32 %v5363, %v5779
        %v5781 = vpop.f32.mrb[0].mxu0
        %v5782 = vpop.f32.mrb[0].mxu0
        %v5783 = vadd.f32 %v5366, %v5782
        %v5784 = vpop.f32.mrb[0].mxu0
        %5785 = vmatprep.mubr.bf16.mxu0 %v2821
        %5786 = vmatmul.mubr.bf16.gmra.mrb[0].mxu0 %v2820
        %v5787 = vpop.f32.mrb[0].mxu0
        %v5788 = vadd.f32 %v5371, %v5787
        %v5789 = vpop.f32.mrb[0].mxu0
        %v5790 = vpop.f32.mrb[0].mxu0
        %v5791 = vadd.f32 %v5374, %v5790
        %v5792 = vpop.f32.mrb[0].mxu0
        %5793 = vmatprep.mubr.bf16.mxu0 %v2833
        %5794 = vmatmul.mubr.bf16.gmra.mrb[0].mxu0 %v2832
        %v5795 = vpop.f32.mrb[0].mxu0
        %v5796 = vadd.f32 %v5379, %v5795
        %v5797 = vpop.f32.mrb[0].mxu0
        %v5798 = vpop.f32.mrb[0].mxu0
        %v5799 = vadd.f32 %v5382, %v5798
        %v5800 = vpop.f32.mrb[0].mxu0
        %5801 = vmatprep.mubr.bf16.mxu0 %v2845
        %5802 = vmatmul.mubr.bf16.gmra.mrb[0].mxu0 %v2844
        %v5803 = vpop.f32.mrb[0].mxu0
        %v5804 = vadd.f32 %v5387, %v5803
        %v5805 = vpop.f32.mrb[0].mxu0
        %v5806 = vpop.f32.mrb[0].mxu0
        %v5807 = vadd.f32 %v5390, %v5806
        %v5808 = vpop.f32.mrb[0].mxu0
        %5809 = vmatprep.mubr.bf16.mxu0 %v2857
        %5810 = vmatmul.mubr.bf16.gmra.mrb[0].mxu0 %v2856
        %v5811 = vpop.f32.mrb[0].mxu0
        %v5812 = vadd.f32 %v5395, %v5811
        %v5813 = vpop.f32.mrb[0].mxu0
        %v5814 = vpop.f32.mrb[0].mxu0
        %v5815 = vadd.f32 %v5398, %v5814
        %v5816 = vpop.f32.mrb[0].mxu0
        %5817 = vmatprep.mubr.bf16.mxu0 %v2869
        %5818 = vmatmul.mubr.bf16.gmra.mrb[0].mxu0 %v2868
        %v5819 = vpop.f32.mrb[0].mxu0
        %v5820 = vadd.f32 %v5403, %v5819
        %v5821 = vpop.f32.mrb[0].mxu0
        %v5822 = vpop.f32.mrb[0].mxu0
        %v5823 = vadd.f32 %v5406, %v5822
        %v5824 = vpop.f32.mrb[0].mxu0
        %5825 = vmatprep.mubr.bf16.mxu0 %v2881
        %5826 = vmatmul.mubr.bf16.gmra.mrb[0].mxu0 %v2880
        %v5827 = vpop.f32.mrb[0].mxu0
        %v5828 = vadd.f32 %v5411, %v5827
        %v5829 = vpop.f32.mrb[0].mxu0
        %v5830 = vpop.f32.mrb[0].mxu0
        %v5831 = vadd.f32 %v5414, %v5830
        %v5832 = vpop.f32.mrb[0].mxu0
        %5833 = vmatprep.mubr.bf16.mxu0 %v2893
        %5834 = vmatmul.mubr.bf16.gmra.mrb[0].mxu0 %v2892
        %v5835 = vpop.f32.mrb[0].mxu0
        %v5836 = vadd.f32 %v5419, %v5835
        %v5837 = vpop.f32.mrb[0].mxu0
        %v5838 = vpop.f32.mrb[0].mxu0
        %v5839 = vadd.f32 %v5422, %v5838
        %v5840 = vpop.f32.mrb[0].mxu0
        %5841 = vmatprep.mubr.bf16.mxu0 %v2905
        %5842 = vmatmul.mubr.bf16.gmra.mrb[0].mxu0 %v2904
        %v5843 = vpop.f32.mrb[0].mxu0
        %v5844 = vadd.f32 %v5427, %v5843
        %v5845 = vpop.f32.mrb[0].mxu0
        %v5846 = vpop.f32.mrb[0].mxu0
        %v5847 = vadd.f32 %v5430, %v5846
        %v5848 = vpop.f32.mrb[0].mxu0
        %5849 = vmatprep.mubr.bf16.mxu0 %v2917
        %5850 = vmatmul.mubr.bf16.gmra.mrb[0].mxu0 %v2916
        %v5851 = vpop.f32.mrb[0].mxu0
        %v5852 = vadd.f32 %v5435, %v5851
        %v5853 = vpop.f32.mrb[0].mxu0
        %v5854 = vpop.f32.mrb[0].mxu0
        %v5855 = vadd.f32 %v5438, %v5854
        %v5856 = vpop.f32.mrb[0].mxu0
        %5857 = vmatprep.mubr.bf16.mxu0 %v2929
        %5858 = vmatmul.mubr.bf16.gmra.mrb[0].mxu0 %v2928
        %v5859 = vpop.f32.mrb[0].mxu0
        %v5860 = vadd.f32 %v5443, %v5859
        %v5861 = vpop.f32.mrb[0].mxu0
        %v5862 = vpop.f32.mrb[0].mxu0
        %v5863 = vadd.f32 %v5446, %v5862
        %v5864 = vpop.f32.mrb[0].mxu0
        %5865 = vmatprep.mubr.bf16.mxu0 %v2941
        %5866 = vmatmul.mubr.bf16.gmra.mrb[0].mxu0 %v2940
        %v5867 = vpop.f32.mrb[0].mxu0
        %v5868 = vadd.f32 %v5451, %v5867
        %v5869 = vpop.f32.mrb[0].mxu0
        %v5870 = vpop.f32.mrb[0].mxu0
        %v5871 = vadd.f32 %v5454, %v5870
        %v5872 = vpop.f32.mrb[0].mxu0
        %5873 = vmatprep.mubr.bf16.mxu0 %v2953
        %5874 = vmatmul.mubr.bf16.gmra.mrb[0].mxu0 %v2952
        %v5875 = vpop.f32.mrb[0].mxu0
        %v5876 = vadd.f32 %v5459, %v5875
        %v5877 = vpop.f32.mrb[0].mxu0
        %v5878 = vpop.f32.mrb[0].mxu0
        %v5879 = vadd.f32 %v5462, %v5878
        %v5880 = vpop.f32.mrb[0].mxu0
        %5881 = vmatprep.mubr.bf16.mxu0 %v2965
        %5882 = vmatmul.mubr.bf16.gmra.mrb[0].mxu0 %v2964
        %v5883 = vpop.f32.mrb[0].mxu0
        %v5884 = vadd.f32 %v5467, %v5883
        %v5885 = vpop.f32.mrb[0].mxu0
        %v5886 = vpop.f32.mrb[0].mxu0
        %v5887 = vadd.f32 %v5470, %v5886
        %v5888 = vpop.f32.mrb[0].mxu0
        %5889 = vmatprep.mubr.bf16.mxu0 %v2977
        %5890 = vmatmul.mubr.bf16.gmra.mrb[0].mxu0 %v2976
        %v5891 = vpop.f32.mrb[0].mxu0
        %v5892 = vadd.f32 %v5475, %v5891
        %v5893 = vpop.f32.mrb[0].mxu0
        %v5894 = vpop.f32.mrb[0].mxu0
        %v5895 = vadd.f32 %v5478, %v5894
        %v5896 = vpop.f32.mrb[0].mxu0
        %5897 = vmatprep.mubr.bf16.mxu0 %v2989
        %5898 = vmatmul.mubr.bf16.gmra.mrb[0].mxu0 %v2988
        %v5899 = vpop.f32.mrb[0].mxu0
        %v5900 = vadd.f32 %v5483, %v5899
        %v5901 = vpop.f32.mrb[0].mxu0
        %v5902 = vpop.f32.mrb[0].mxu0
        %v5903 = vadd.f32 %v5486, %v5902
        %v5904 = vpop.f32.mrb[0].mxu0
        %5905 = vmatprep.mubr.bf16.mxu0 %v3001
        %5906 = vmatmul.mubr.bf16.gmra.mrb[0].mxu0 %v3000
        %v5907 = vpop.f32.mrb[0].mxu0
        %v5908 = vadd.f32 %v5491, %v5907
        %v5909 = vpop.f32.mrb[0].mxu0
        %v5910 = vpop.f32.mrb[0].mxu0
        %v5911 = vadd.f32 %v5494, %v5910
        %v5912 = vpop.f32.mrb[0].mxu0
        %5913 = vmatprep.mubr.bf16.mxu0 %v3013
        %5914 = vmatmul.mubr.bf16.gmra.mrb[0].mxu0 %v3012
        %v5915 = vpop.f32.mrb[0].mxu0
        %v5916 = vadd.f32 %v5499, %v5915
        %v5917 = vpop.f32.mrb[0].mxu0
        %v5918 = vpop.f32.mrb[0].mxu0
        %v5919 = vadd.f32 %v5502, %v5918
        %v5920 = vpop.f32.mrb[0].mxu0
        %5921 = vmatprep.mubr.bf16.mxu0 %v3025
        %5922 = vmatmul.mubr.bf16.gmra.mrb[0].mxu0 %v3024
        %v5923 = vpop.f32.mrb[0].mxu0
        %v5924 = vadd.f32 %v5507, %v5923
        %v5925 = vpop.f32.mrb[0].mxu0
        %v5926 = vpop.f32.mrb[0].mxu0
        %v5927 = vadd.f32 %v5510, %v5926
        %v5928 = vpop.f32.mrb[0].mxu0
        %5929 = vmatprep.mubr.bf16.mxu0 %v3037
        %5930 = vmatmul.mubr.bf16.gmra.mrb[0].mxu0 %v3036
        %v5931 = vpop.f32.mrb[0].mxu0
        %v5932 = vadd.f32 %v5515, %v5931
        %v5933 = vpop.f32.mrb[0].mxu0
        %v5934 = vpop.f32.mrb[0].mxu0
        %v5935 = vadd.f32 %v5518, %v5934
        %v5936 = vpop.f32.mrb[0].mxu0
        %5937 = vmatprep.mubr.bf16.mxu0 %v3049
        %5938 = vmatmul.mubr.bf16.gmra.mrb[0].mxu0 %v3048
        %v5939 = vpop.f32.mrb[0].mxu0
        %v5940 = vadd.f32 %v5523, %v5939
        %v5941 = vpop.f32.mrb[0].mxu0
        %v5942 = vpop.f32.mrb[0].mxu0
        %v5943 = vadd.f32 %v5526, %v5942
        %v5944 = vpop.f32.mrb[0].mxu0
        %5945 = vmatprep.mubr.bf16.mxu0 %v3061
        %5946 = vmatmul.mubr.bf16.gmra.mrb[0].mxu0 %v3060
        %v5947 = vpop.f32.mrb[0].mxu0
        %v5948 = vadd.f32 %v5531, %v5947
        %v5949 = vpop.f32.mrb[0].mxu0
        %v5950 = vpop.f32.mrb[0].mxu0
        %v5951 = vadd.f32 %v5534, %v5950
        %v5952 = vpop.f32.mrb[0].mxu0
        %5953 = vmatprep.mubr.bf16.mxu0 %v3073
        %5954 = vmatmul.mubr.bf16.gmra.mrb[0].mxu0 %v3072
        %v5955 = vpop.f32.mrb[0].mxu0
        %v5956 = vadd.f32 %v5539, %v5955
        %v5957 = vpop.f32.mrb[0].mxu0
        %v5958 = vpop.f32.mrb[0].mxu0
        %v5959 = vadd.f32 %v5542, %v5958
        %v5960 = vpop.f32.mrb[0].mxu0
        %5961 = vmatprep.mubr.bf16.mxu0 %v3085
        %5962 = vmatmul.mubr.bf16.gmra.mrb[0].mxu0 %v3084
        %v5963 = vpop.f32.mrb[0].mxu0
        %v5964 = vadd.f32 %v5547, %v5963
        %v5965 = vpop.f32.mrb[0].mxu0
        %v5966 = vpop.f32.mrb[0].mxu0
        %v5967 = vadd.f32 %v5550, %v5966
        %v5968 = vpop.f32.mrb[0].mxu0
        %5969 = vmatprep.mubr.bf16.mxu0 %v3097
        %5970 = vmatmul.mubr.bf16.gmra.mrb[0].mxu0 %v3096
        %v5971 = vpop.f32.mrb[0].mxu0
        %v5972 = vadd.f32 %v5555, %v5971
        %v5973 = vpop.f32.mrb[0].mxu0
        %v5974 = vpop.f32.mrb[0].mxu0
        %v5975 = vadd.f32 %v5558, %v5974
        %v5976 = vpop.f32.mrb[0].mxu0
        %5977 = vmatprep.mubr.bf16.mxu0 %v3109
        %5978 = vmatmul.mubr.bf16.gmra.mrb[0].mxu0 %v3108
        %v5979 = vpop.f32.mrb[0].mxu0
        %v5980 = vadd.f32 %v5563, %v5979
        %v5981 = vpop.f32.mrb[0].mxu0
        %v5982 = vpop.f32.mrb[0].mxu0
        %v5983 = vadd.f32 %v5566, %v5982
        %v5984 = vpop.f32.mrb[0].mxu0
        %5985 = vmatprep.mubr.bf16.mxu0 %v3121
        %5986 = vmatmul.mubr.bf16.gmra.mrb[0].mxu0 %v3120
        %v5987 = vpop.f32.mrb[0].mxu0
        %v5988 = vadd.f32 %v5571, %v5987
        %v5989 = vpop.f32.mrb[0].mxu0
        %v5990 = vpop.f32.mrb[0].mxu0
        %v5991 = vadd.f32 %v5574, %v5990
        %v5992 = vpop.f32.mrb[0].mxu0
        %5993 = vmatprep.mubr.bf16.mxu0 %v3133
        %5994 = vmatmul.mubr.bf16.gmra.mrb[0].mxu0 %v3132
        %v5995 = vpop.f32.mrb[0].mxu0
        %v5996 = vadd.f32 %v5579, %v5995
        %v5997 = vpop.f32.mrb[0].mxu0
        %v5998 = vpop.f32.mrb[0].mxu0
        %v5999 = vadd.f32 %v5582, %v5998
        %v6000 = vpop.f32.mrb[0].mxu0
        %6001 = vmatprep.mubr.bf16.mxu0 %v3145
        %6002 = vmatmul.mubr.bf16.gmra.mrb[0].mxu0 %v3144
        %v6003 = vpop.f32.mrb[0].mxu0
        %v6004 = vadd.f32 %v5587, %v6003
        %v6005 = vpop.f32.mrb[0].mxu0
        %v6006 = vpop.f32.mrb[0].mxu0
        %v6007 = vadd.f32 %v5590, %v6006
        %v6008 = vpop.f32.mrb[0].mxu0
        %6009 = vmatprep.mubr.bf16.mxu0 %v3157
        %6010 = vmatmul.mubr.bf16.gmra.mrb[0].mxu0 %v3156
        %v6011 = vpop.f32.mrb[0].mxu0
        %v6012 = vadd.f32 %v5595, %v6011
        %v6013 = vpop.f32.mrb[0].mxu0
        %v6014 = vpop.f32.mrb[0].mxu0
        %v6015 = vadd.f32 %v5598, %v6014
        %v6016 = vpop.f32.mrb[0].mxu0
        %6017 = vmatprep.mubr.bf16.mxu0 %v3169
        %6018 = vmatmul.mubr.bf16.gmra.mrb[0].mxu0 %v3168
        %v6019 = vpop.f32.mrb[0].mxu0
        %v6020 = vadd.f32 %v5603, %v6019
        %v6021 = vpop.f32.mrb[0].mxu0
        %v6022 = vpop.f32.mrb[0].mxu0
        %v6023 = vadd.f32 %v5606, %v6022
        %v6024 = vpop.f32.mrb[0].mxu0
        %6025 = vmatprep.mubr.bf16.mxu0 %v3181
        %6026 = vmatmul.mubr.bf16.gmra.mrb[0].mxu0 %v3180
        %v6027 = vpop.f32.mrb[0].mxu0
        %v6028 = vadd.f32 %v5611, %v6027
        %v6029 = vpop.f32.mrb[0].mxu0
        %v6030 = vpop.f32.mrb[0].mxu0
        %v6031 = vadd.f32 %v5614, %v6030
        %v6032 = vpop.f32.mrb[0].mxu0
        %6033 = vmatprep.mubr.bf16.mxu0 %v3193
        %6034 = vmatmul.mubr.bf16.gmra.mrb[0].mxu0 %v3192
        %v6035 = vpop.f32.mrb[0].mxu0
        %v6036 = vadd.f32 %v5619, %v6035
        %v6037 = vpop.f32.mrb[0].mxu0
        %v6038 = vpop.f32.mrb[0].mxu0
        %v6039 = vadd.f32 %v5622, %v6038
        %v6040 = vpop.f32.mrb[0].mxu0
        %6041 = vmatprep.mubr.bf16.mxu0 %v3205
        %6042 = vmatmul.mubr.bf16.gmra.mrb[0].mxu0 %v3204
        %v6043 = vpop.f32.mrb[0].mxu0
        %v6044 = vadd.f32 %v5627, %v6043
        %v6045 = vpop.f32.mrb[0].mxu0
        %v6046 = vpop.f32.mrb[0].mxu0
        %v6047 = vadd.f32 %v5630, %v6046
        %v6048 = vpop.f32.mrb[0].mxu0
        %6049 = vmatprep.mubr.bf16.mxu0 %v3217
        %6050 = vmatmul.mubr.bf16.gmra.mrb[0].mxu0 %v3216
        %v6051 = vpop.f32.mrb[0].mxu0
        %v6052 = vadd.f32 %v5635, %v6051
        %v6053 = vpop.f32.mrb[0].mxu0
        %v6054 = vpop.f32.mrb[0].mxu0
        %v6055 = vadd.f32 %v5638, %v6054
        %v6056 = vpop.f32.mrb[0].mxu0
        %6057 = vmatprep.mubr.bf16.mxu0 %v3229
        %6058 = vmatmul.mubr.bf16.gmra.mrb[0].mxu0 %v3228
        %v6059 = vpop.f32.mrb[0].mxu0
        %v6060 = vadd.f32 %v5643, %v6059
        %v6061 = vpop.f32.mrb[0].mxu0
        %v6062 = vpop.f32.mrb[0].mxu0
        %v6063 = vadd.f32 %v5646, %v6062
        %v6064 = vpop.f32.mrb[0].mxu0
        %6065 = vmatprep.mubr.bf16.mxu0 %v3241
        %6066 = vmatmul.mubr.bf16.gmra.mrb[0].mxu0 %v3240
        %v6067 = vpop.f32.mrb[0].mxu0
        %v6068 = vadd.f32 %v5651, %v6067
        %v6069 = vpop.f32.mrb[0].mxu0
        %v6070 = vpop.f32.mrb[0].mxu0
        %v6071 = vadd.f32 %v5654, %v6070
        %v6072 = vpop.f32.mrb[0].mxu0
        %6073 = vmatprep.mubr.bf16.mxu0 %v3253
        %6074 = vmatmul.mubr.bf16.gmra.mrb[0].mxu0 %v3252
        %v6075 = vpop.f32.mrb[0].mxu0
        %v6076 = vadd.f32 %v5659, %v6075
        %v6077 = vpop.f32.mrb[0].mxu0
        %v6078 = vpop.f32.mrb[0].mxu0
        %v6079 = vadd.f32 %v5662, %v6078
        %v6080 = vpop.f32.mrb[0].mxu0
        %6081 = vmatprep.mubr.bf16.mxu0 %v3265
        %6082 = vmatmul.mubr.bf16.gmra.mrb[0].mxu0 %v3264
        %v6083 = vpop.f32.mrb[0].mxu0
        %v6084 = vadd.f32 %v5667, %v6083
        %v6085 = vpop.f32.mrb[0].mxu0
        %v6086 = vpop.f32.mrb[0].mxu0
        %v6087 = vadd.f32 %v5670, %v6086
        %v6088 = vpop.f32.mrb[0].mxu0
        %6089 = vdwg.mxu0
        %6090 = vmatprep.subr.bf16.mxu0 0
        %6091 = vmatpush1.bf16.msra.mxu0 %v4294
        %6092 = vmatprep.subr.bf16.mxu0 0
        %6093 = vmatpush1.bf16.msra.mxu0 %v4295
        %6094 = vmatprep.subr.bf16.mxu0 0
        %6095 = vmatpush1.bf16.msra.mxu0 %v4296
        %6096 = vmatprep.subr.bf16.mxu0 0
        %6097 = vmatpush1.bf16.msra.mxu0 %v4297
        %6098 = vmatprep.subr.bf16.mxu0 0
        %6099 = vmatpush1.bf16.msra.mxu0 %v4298
        %6100 = vmatprep.subr.bf16.mxu0 0
        %6101 = vmatpush1.bf16.msra.mxu0 %v4299
        %6102 = vmatprep.subr.bf16.mxu0 0
        %6103 = vmatpush1.bf16.msra.mxu0 %v4300
        %6104 = vmatprep.subr.bf16.mxu0 0
        %6105 = vmatpush1.bf16.msra.mxu0 %v4301
        %6106 = vmatprep.subr.bf16.mxu0 0
        %6107 = vmatpush1.bf16.msra.mxu0 %v4302
        %6108 = vmatprep.subr.bf16.mxu0 0
        %6109 = vmatpush1.bf16.msra.mxu0 %v4303
        %6110 = vmatprep.subr.bf16.mxu0 0
        %6111 = vmatpush1.bf16.msra.mxu0 %v4304
        %6112 = vmatprep.subr.bf16.mxu0 0
        %6113 = vmatpush1.bf16.msra.mxu0 %v4305
        %6114 = vmatprep.subr.bf16.mxu0 0
        %6115 = vmatpush1.bf16.msra.mxu0 %v4306
        %6116 = vmatprep.subr.bf16.mxu0 0
        %6117 = vmatpush1.bf16.msra.mxu0 %v4307
        %6118 = vmatprep.subr.bf16.mxu0 0
        %6119 = vmatpush1.bf16.msra.mxu0 %v4308
        %6120 = vmatprep.subr.bf16.mxu0 0
        %6121 = vmatpush1.bf16.msra.mxu0 %v4309
        %6122 = vmatprep.mubr.bf16.mxu0 %v2703
        %6123 = vmatmul.mubr.bf16.gmra.mrb[0].mxu0 %v2702
        %v6124 = vpop.f32.mrb[0].mxu0
        %v6125 = vadd.f32 %v5708, %v6124
        %v6126 = vpop.f32.mrb[0].mxu0
        %v6127 = vpop.f32.mrb[0].mxu0
        %v6128 = vadd.f32 %v5711, %v6127
        %v6129 = vpop.f32.mrb[0].mxu0
        %6130 = vmatprep.mubr.bf16.mxu0 %v2715
        %6131 = vmatmul.mubr.bf16.gmra.mrb[0].mxu0 %v2714
        %v6132 = vpop.f32.mrb[0].mxu0
        %v6133 = vadd.f32 %v5716, %v6132
        %v6134 = vpop.f32.mrb[0].mxu0
        %v6135 = vpop.f32.mrb[0].mxu0
        %v6136 = vadd.f32 %v5719, %v6135
        %v6137 = vpop.f32.mrb[0].mxu0
        %6138 = vmatprep.mubr.bf16.mxu0 %v2727
        %6139 = vmatmul.mubr.bf16.gmra.mrb[0].mxu0 %v2726
        %v6140 = vpop.f32.mrb[0].mxu0
        %v6141 = vadd.f32 %v5724, %v6140
        %v6142 = vpop.f32.mrb[0].mxu0
        %v6143 = vpop.f32.mrb[0].mxu0
        %v6144 = vadd.f32 %v5727, %v6143
        %v6145 = vpop.f32.mrb[0].mxu0
        %6146 = vmatprep.mubr.bf16.mxu0 %v2739
        %6147 = vmatmul.mubr.bf16.gmra.mrb[0].mxu0 %v2738
        %v6148 = vpop.f32.mrb[0].mxu0
        %v6149 = vadd.f32 %v5732, %v6148
        %v6150 = vpop.f32.mrb[0].mxu0
        %v6151 = vpop.f32.mrb[0].mxu0
        %v6152 = vadd.f32 %v5735, %v6151
        %v6153 = vpop.f32.mrb[0].mxu0
        %6154 = vmatprep.mubr.bf16.mxu0 %v2751
        %6155 = vmatmul.mubr.bf16.gmra.mrb[0].mxu0 %v2750
        %v6156 = vpop.f32.mrb[0].mxu0
        %v6157 = vadd.f32 %v5740, %v6156
        %v6158 = vpop.f32.mrb[0].mxu0
        %v6159 = vpop.f32.mrb[0].mxu0
        %v6160 = vadd.f32 %v5743, %v6159
        %v6161 = vpop.f32.mrb[0].mxu0
        %6162 = vmatprep.mubr.bf16.mxu0 %v2763
        %6163 = vmatmul.mubr.bf16.gmra.mrb[0].mxu0 %v2762
        %v6164 = vpop.f32.mrb[0].mxu0
        %v6165 = vadd.f32 %v5748, %v6164
        %v6166 = vpop.f32.mrb[0].mxu0
        %v6167 = vpop.f32.mrb[0].mxu0
        %v6168 = vadd.f32 %v5751, %v6167
        %v6169 = vpop.f32.mrb[0].mxu0
        %6170 = vmatprep.mubr.bf16.mxu0 %v2775
        %6171 = vmatmul.mubr.bf16.gmra.mrb[0].mxu0 %v2774
        %v6172 = vpop.f32.mrb[0].mxu0
        %v6173 = vadd.f32 %v5756, %v6172
        %v6174 = vpop.f32.mrb[0].mxu0
        %v6175 = vpop.f32.mrb[0].mxu0
        %v6176 = vadd.f32 %v5759, %v6175
        %v6177 = vpop.f32.mrb[0].mxu0
        %6178 = vmatprep.mubr.bf16.mxu0 %v2787
        %6179 = vmatmul.mubr.bf16.gmra.mrb[0].mxu0 %v2786
        %v6180 = vpop.f32.mrb[0].mxu0
        %v6181 = vadd.f32 %v5764, %v6180
        %v6182 = vpop.f32.mrb[0].mxu0
        %v6183 = vpop.f32.mrb[0].mxu0
        %v6184 = vadd.f32 %v5767, %v6183
        %v6185 = vpop.f32.mrb[0].mxu0
        %6186 = vmatprep.mubr.bf16.mxu0 %v2799
        %6187 = vmatmul.mubr.bf16.gmra.mrb[0].mxu0 %v2798
        %v6188 = vpop.f32.mrb[0].mxu0
        %v6189 = vadd.f32 %v5772, %v6188
        %v6190 = vpop.f32.mrb[0].mxu0
        %v6191 = vpop.f32.mrb[0].mxu0
        %v6192 = vadd.f32 %v5775, %v6191
        %v6193 = vpop.f32.mrb[0].mxu0
        %6194 = vmatprep.mubr.bf16.mxu0 %v2811
        %6195 = vmatmul.mubr.bf16.gmra.mrb[0].mxu0 %v2810
        %v6196 = vpop.f32.mrb[0].mxu0
        %v6197 = vadd.f32 %v5780, %v6196
        %v6198 = vpop.f32.mrb[0].mxu0
        %v6199 = vpop.f32.mrb[0].mxu0
        %v6200 = vadd.f32 %v5783, %v6199
        %v6201 = vpop.f32.mrb[0].mxu0
        %6202 = vmatprep.mubr.bf16.mxu0 %v2823
        %6203 = vmatmul.mubr.bf16.gmra.mrb[0].mxu0 %v2822
        %v6204 = vpop.f32.mrb[0].mxu0
        %v6205 = vadd.f32 %v5788, %v6204
        %v6206 = vpop.f32.mrb[0].mxu0
        %v6207 = vpop.f32.mrb[0].mxu0
        %v6208 = vadd.f32 %v5791, %v6207
        %v6209 = vpop.f32.mrb[0].mxu0
        %6210 = vmatprep.mubr.bf16.mxu0 %v2835
        %6211 = vmatmul.mubr.bf16.gmra.mrb[0].mxu0 %v2834
        %v6212 = vpop.f32.mrb[0].mxu0
        %v6213 = vadd.f32 %v5796, %v6212
        %v6214 = vpop.f32.mrb[0].mxu0
        %v6215 = vpop.f32.mrb[0].mxu0
        %v6216 = vadd.f32 %v5799, %v6215
        %v6217 = vpop.f32.mrb[0].mxu0
        %6218 = vmatprep.mubr.bf16.mxu0 %v2847
        %6219 = vmatmul.mubr.bf16.gmra.mrb[0].mxu0 %v2846
        %v6220 = vpop.f32.mrb[0].mxu0
        %v6221 = vadd.f32 %v5804, %v6220
        %v6222 = vpop.f32.mrb[0].mxu0
        %v6223 = vpop.f32.mrb[0].mxu0
        %v6224 = vadd.f32 %v5807, %v6223
        %v6225 = vpop.f32.mrb[0].mxu0
        %6226 = vmatprep.mubr.bf16.mxu0 %v2859
        %6227 = vmatmul.mubr.bf16.gmra.mrb[0].mxu0 %v2858
        %v6228 = vpop.f32.mrb[0].mxu0
        %v6229 = vadd.f32 %v5812, %v6228
        %v6230 = vpop.f32.mrb[0].mxu0
        %v6231 = vpop.f32.mrb[0].mxu0
        %v6232 = vadd.f32 %v5815, %v6231
        %v6233 = vpop.f32.mrb[0].mxu0
        %6234 = vmatprep.mubr.bf16.mxu0 %v2871
        %6235 = vmatmul.mubr.bf16.gmra.mrb[0].mxu0 %v2870
        %v6236 = vpop.f32.mrb[0].mxu0
        %v6237 = vadd.f32 %v5820, %v6236
        %v6238 = vpop.f32.mrb[0].mxu0
        %v6239 = vpop.f32.mrb[0].mxu0
        %v6240 = vadd.f32 %v5823, %v6239
        %v6241 = vpop.f32.mrb[0].mxu0
        %6242 = vmatprep.mubr.bf16.mxu0 %v2883
        %6243 = vmatmul.mubr.bf16.gmra.mrb[0].mxu0 %v2882
        %v6244 = vpop.f32.mrb[0].mxu0
        %v6245 = vadd.f32 %v5828, %v6244
        %v6246 = vpop.f32.mrb[0].mxu0
        %v6247 = vpop.f32.mrb[0].mxu0
        %v6248 = vadd.f32 %v5831, %v6247
        %v6249 = vpop.f32.mrb[0].mxu0
        %6250 = vmatprep.mubr.bf16.mxu0 %v2895
        %6251 = vmatmul.mubr.bf16.gmra.mrb[0].mxu0 %v2894
        %v6252 = vpop.f32.mrb[0].mxu0
        %v6253 = vadd.f32 %v5836, %v6252
        %v6254 = vpop.f32.mrb[0].mxu0
        %v6255 = vpop.f32.mrb[0].mxu0
        %v6256 = vadd.f32 %v5839, %v6255
        %v6257 = vpop.f32.mrb[0].mxu0
        %6258 = vmatprep.mubr.bf16.mxu0 %v2907
        %6259 = vmatmul.mubr.bf16.gmra.mrb[0].mxu0 %v2906
        %v6260 = vpop.f32.mrb[0].mxu0
        %v6261 = vadd.f32 %v5844, %v6260
        %v6262 = vpop.f32.mrb[0].mxu0
        %v6263 = vpop.f32.mrb[0].mxu0
        %v6264 = vadd.f32 %v5847, %v6263
        %v6265 = vpop.f32.mrb[0].mxu0
        %6266 = vmatprep.mubr.bf16.mxu0 %v2919
        %6267 = vmatmul.mubr.bf16.gmra.mrb[0].mxu0 %v2918
        %v6268 = vpop.f32.mrb[0].mxu0
        %v6269 = vadd.f32 %v5852, %v6268
        %v6270 = vpop.f32.mrb[0].mxu0
        %v6271 = vpop.f32.mrb[0].mxu0
        %v6272 = vadd.f32 %v5855, %v6271
        %v6273 = vpop.f32.mrb[0].mxu0
        %6274 = vmatprep.mubr.bf16.mxu0 %v2931
        %6275 = vmatmul.mubr.bf16.gmra.mrb[0].mxu0 %v2930
        %v6276 = vpop.f32.mrb[0].mxu0
        %v6277 = vadd.f32 %v5860, %v6276
        %v6278 = vpop.f32.mrb[0].mxu0
        %v6279 = vpop.f32.mrb[0].mxu0
        %v6280 = vadd.f32 %v5863, %v6279
        %v6281 = vpop.f32.mrb[0].mxu0
        %6282 = vmatprep.mubr.bf16.mxu0 %v2943
        %6283 = vmatmul.mubr.bf16.gmra.mrb[0].mxu0 %v2942
        %v6284 = vpop.f32.mrb[0].mxu0
        %v6285 = vadd.f32 %v5868, %v6284
        %v6286 = vpop.f32.mrb[0].mxu0
        %v6287 = vpop.f32.mrb[0].mxu0
        %v6288 = vadd.f32 %v5871, %v6287
        %v6289 = vpop.f32.mrb[0].mxu0
        %6290 = vmatprep.mubr.bf16.mxu0 %v2955
        %6291 = vmatmul.mubr.bf16.gmra.mrb[0].mxu0 %v2954
        %v6292 = vpop.f32.mrb[0].mxu0
        %v6293 = vadd.f32 %v5876, %v6292
        %v6294 = vpop.f32.mrb[0].mxu0
        %v6295 = vpop.f32.mrb[0].mxu0
        %v6296 = vadd.f32 %v5879, %v6295
        %v6297 = vpop.f32.mrb[0].mxu0
        %6298 = vmatprep.mubr.bf16.mxu0 %v2967
        %6299 = vmatmul.mubr.bf16.gmra.mrb[0].mxu0 %v2966
        %v6300 = vpop.f32.mrb[0].mxu0
        %v6301 = vadd.f32 %v5884, %v6300
        %v6302 = vpop.f32.mrb[0].mxu0
        %v6303 = vpop.f32.mrb[0].mxu0
        %v6304 = vadd.f32 %v5887, %v6303
        %v6305 = vpop.f32.mrb[0].mxu0
        %6306 = vmatprep.mubr.bf16.mxu0 %v2979
        %6307 = vmatmul.mubr.bf16.gmra.mrb[0].mxu0 %v2978
        %v6308 = vpop.f32.mrb[0].mxu0
        %v6309 = vadd.f32 %v5892, %v6308
        %v6310 = vpop.f32.mrb[0].mxu0
        %v6311 = vpop.f32.mrb[0].mxu0
        %v6312 = vadd.f32 %v5895, %v6311
        %v6313 = vpop.f32.mrb[0].mxu0
        %6314 = vmatprep.mubr.bf16.mxu0 %v2991
        %6315 = vmatmul.mubr.bf16.gmra.mrb[0].mxu0 %v2990
        %v6316 = vpop.f32.mrb[0].mxu0
        %v6317 = vadd.f32 %v5900, %v6316
        %v6318 = vpop.f32.mrb[0].mxu0
        %v6319 = vpop.f32.mrb[0].mxu0
        %v6320 = vadd.f32 %v5903, %v6319
        %v6321 = vpop.f32.mrb[0].mxu0
        %6322 = vmatprep.mubr.bf16.mxu0 %v3003
        %6323 = vmatmul.mubr.bf16.gmra.mrb[0].mxu0 %v3002
        %v6324 = vpop.f32.mrb[0].mxu0
        %v6325 = vadd.f32 %v5908, %v6324
        %v6326 = vpop.f32.mrb[0].mxu0
        %v6327 = vpop.f32.mrb[0].mxu0
        %v6328 = vadd.f32 %v5911, %v6327
        %v6329 = vpop.f32.mrb[0].mxu0
        %6330 = vmatprep.mubr.bf16.mxu0 %v3015
        %6331 = vmatmul.mubr.bf16.gmra.mrb[0].mxu0 %v3014
        %v6332 = vpop.f32.mrb[0].mxu0
        %v6333 = vadd.f32 %v5916, %v6332
        %v6334 = vpop.f32.mrb[0].mxu0
        %v6335 = vpop.f32.mrb[0].mxu0
        %v6336 = vadd.f32 %v5919, %v6335
        %v6337 = vpop.f32.mrb[0].mxu0
        %6338 = vmatprep.mubr.bf16.mxu0 %v3027
        %6339 = vmatmul.mubr.bf16.gmra.mrb[0].mxu0 %v3026
        %v6340 = vpop.f32.mrb[0].mxu0
        %v6341 = vadd.f32 %v5924, %v6340
        %v6342 = vpop.f32.mrb[0].mxu0
        %v6343 = vpop.f32.mrb[0].mxu0
        %v6344 = vadd.f32 %v5927, %v6343
        %v6345 = vpop.f32.mrb[0].mxu0
        %6346 = vmatprep.mubr.bf16.mxu0 %v3039
        %6347 = vmatmul.mubr.bf16.gmra.mrb[0].mxu0 %v3038
        %v6348 = vpop.f32.mrb[0].mxu0
        %v6349 = vadd.f32 %v5932, %v6348
        %v6350 = vpop.f32.mrb[0].mxu0
        %v6351 = vpop.f32.mrb[0].mxu0
        %v6352 = vadd.f32 %v5935, %v6351
        %v6353 = vpop.f32.mrb[0].mxu0
        %6354 = vmatprep.mubr.bf16.mxu0 %v3051
        %6355 = vmatmul.mubr.bf16.gmra.mrb[0].mxu0 %v3050
        %v6356 = vpop.f32.mrb[0].mxu0
        %v6357 = vadd.f32 %v5940, %v6356
        %v6358 = vpop.f32.mrb[0].mxu0
        %v6359 = vpop.f32.mrb[0].mxu0
        %v6360 = vadd.f32 %v5943, %v6359
        %v6361 = vpop.f32.mrb[0].mxu0
        %6362 = vmatprep.mubr.bf16.mxu0 %v3063
        %6363 = vmatmul.mubr.bf16.gmra.mrb[0].mxu0 %v3062
        %v6364 = vpop.f32.mrb[0].mxu0
        %v6365 = vadd.f32 %v5948, %v6364
        %v6366 = vpop.f32.mrb[0].mxu0
        %v6367 = vpop.f32.mrb[0].mxu0
        %v6368 = vadd.f32 %v5951, %v6367
        %v6369 = vpop.f32.mrb[0].mxu0
        %6370 = vmatprep.mubr.bf16.mxu0 %v3075
        %6371 = vmatmul.mubr.bf16.gmra.mrb[0].mxu0 %v3074
        %v6372 = vpop.f32.mrb[0].mxu0
        %v6373 = vadd.f32 %v5956, %v6372
        %v6374 = vpop.f32.mrb[0].mxu0
        %v6375 = vpop.f32.mrb[0].mxu0
        %v6376 = vadd.f32 %v5959, %v6375
        %v6377 = vpop.f32.mrb[0].mxu0
        %6378 = vmatprep.mubr.bf16.mxu0 %v3087
        %6379 = vmatmul.mubr.bf16.gmra.mrb[0].mxu0 %v3086
        %v6380 = vpop.f32.mrb[0].mxu0
        %v6381 = vadd.f32 %v5964, %v6380
        %v6382 = vpop.f32.mrb[0].mxu0
        %v6383 = vpop.f32.mrb[0].mxu0
        %v6384 = vadd.f32 %v5967, %v6383
        %v6385 = vpop.f32.mrb[0].mxu0
        %6386 = vmatprep.mubr.bf16.mxu0 %v3099
        %6387 = vmatmul.mubr.bf16.gmra.mrb[0].mxu0 %v3098
        %v6388 = vpop.f32.mrb[0].mxu0
        %v6389 = vadd.f32 %v5972, %v6388
        %v6390 = vpop.f32.mrb[0].mxu0
        %v6391 = vpop.f32.mrb[0].mxu0
        %v6392 = vadd.f32 %v5975, %v6391
        %v6393 = vpop.f32.mrb[0].mxu0
        %6394 = vmatprep.mubr.bf16.mxu0 %v3111
        %6395 = vmatmul.mubr.bf16.gmra.mrb[0].mxu0 %v3110
        %v6396 = vpop.f32.mrb[0].mxu0
        %v6397 = vadd.f32 %v5980, %v6396
        %v6398 = vpop.f32.mrb[0].mxu0
        %v6399 = vpop.f32.mrb[0].mxu0
        %v6400 = vadd.f32 %v5983, %v6399
        %v6401 = vpop.f32.mrb[0].mxu0
        %6402 = vmatprep.mubr.bf16.mxu0 %v3123
        %6403 = vmatmul.mubr.bf16.gmra.mrb[0].mxu0 %v3122
        %v6404 = vpop.f32.mrb[0].mxu0
        %v6405 = vadd.f32 %v5988, %v6404
        %v6406 = vpop.f32.mrb[0].mxu0
        %v6407 = vpop.f32.mrb[0].mxu0
        %v6408 = vadd.f32 %v5991, %v6407
        %v6409 = vpop.f32.mrb[0].mxu0
        %6410 = vmatprep.mubr.bf16.mxu0 %v3135
        %6411 = vmatmul.mubr.bf16.gmra.mrb[0].mxu0 %v3134
        %v6412 = vpop.f32.mrb[0].mxu0
        %v6413 = vadd.f32 %v5996, %v6412
        %v6414 = vpop.f32.mrb[0].mxu0
        %v6415 = vpop.f32.mrb[0].mxu0
        %v6416 = vadd.f32 %v5999, %v6415
        %v6417 = vpop.f32.mrb[0].mxu0
        %6418 = vmatprep.mubr.bf16.mxu0 %v3147
        %6419 = vmatmul.mubr.bf16.gmra.mrb[0].mxu0 %v3146
        %v6420 = vpop.f32.mrb[0].mxu0
        %v6421 = vadd.f32 %v6004, %v6420
        %v6422 = vpop.f32.mrb[0].mxu0
        %v6423 = vpop.f32.mrb[0].mxu0
        %v6424 = vadd.f32 %v6007, %v6423
        %v6425 = vpop.f32.mrb[0].mxu0
        %6426 = vmatprep.mubr.bf16.mxu0 %v3159
        %6427 = vmatmul.mubr.bf16.gmra.mrb[0].mxu0 %v3158
        %v6428 = vpop.f32.mrb[0].mxu0
        %v6429 = vadd.f32 %v6012, %v6428
        %v6430 = vpop.f32.mrb[0].mxu0
        %v6431 = vpop.f32.mrb[0].mxu0
        %v6432 = vadd.f32 %v6015, %v6431
        %v6433 = vpop.f32.mrb[0].mxu0
        %6434 = vmatprep.mubr.bf16.mxu0 %v3171
        %6435 = vmatmul.mubr.bf16.gmra.mrb[0].mxu0 %v3170
        %v6436 = vpop.f32.mrb[0].mxu0
        %v6437 = vadd.f32 %v6020, %v6436
        %v6438 = vpop.f32.mrb[0].mxu0
        %v6439 = vpop.f32.mrb[0].mxu0
        %v6440 = vadd.f32 %v6023, %v6439
        %v6441 = vpop.f32.mrb[0].mxu0
        %6442 = vmatprep.mubr.bf16.mxu0 %v3183
        %6443 = vmatmul.mubr.bf16.gmra.mrb[0].mxu0 %v3182
        %v6444 = vpop.f32.mrb[0].mxu0
        %v6445 = vadd.f32 %v6028, %v6444
        %v6446 = vpop.f32.mrb[0].mxu0
        %v6447 = vpop.f32.mrb[0].mxu0
        %v6448 = vadd.f32 %v6031, %v6447
        %v6449 = vpop.f32.mrb[0].mxu0
        %6450 = vmatprep.mubr.bf16.mxu0 %v3195
        %6451 = vmatmul.mubr.bf16.gmra.mrb[0].mxu0 %v3194
        %v6452 = vpop.f32.mrb[0].mxu0
        %v6453 = vadd.f32 %v6036, %v6452
        %v6454 = vpop.f32.mrb[0].mxu0
        %v6455 = vpop.f32.mrb[0].mxu0
        %v6456 = vadd.f32 %v6039, %v6455
        %v6457 = vpop.f32.mrb[0].mxu0
        %6458 = vmatprep.mubr.bf16.mxu0 %v3207
        %6459 = vmatmul.mubr.bf16.gmra.mrb[0].mxu0 %v3206
        %v6460 = vpop.f32.mrb[0].mxu0
        %v6461 = vadd.f32 %v6044, %v6460
        %v6462 = vpop.f32.mrb[0].mxu0
        %v6463 = vpop.f32.mrb[0].mxu0
        %v6464 = vadd.f32 %v6047, %v6463
        %v6465 = vpop.f32.mrb[0].mxu0
        %6466 = vmatprep.mubr.bf16.mxu0 %v3219
        %6467 = vmatmul.mubr.bf16.gmra.mrb[0].mxu0 %v3218
        %v6468 = vpop.f32.mrb[0].mxu0
        %v6469 = vadd.f32 %v6052, %v6468
        %v6470 = vpop.f32.mrb[0].mxu0
        %v6471 = vpop.f32.mrb[0].mxu0
        %v6472 = vadd.f32 %v6055, %v6471
        %v6473 = vpop.f32.mrb[0].mxu0
        %6474 = vmatprep.mubr.bf16.mxu0 %v3231
        %6475 = vmatmul.mubr.bf16.gmra.mrb[0].mxu0 %v3230
        %v6476 = vpop.f32.mrb[0].mxu0
        %v6477 = vadd.f32 %v6060, %v6476
        %v6478 = vpop.f32.mrb[0].mxu0
        %v6479 = vpop.f32.mrb[0].mxu0
        %v6480 = vadd.f32 %v6063, %v6479
        %v6481 = vpop.f32.mrb[0].mxu0
        %6482 = vmatprep.mubr.bf16.mxu0 %v3243
        %6483 = vmatmul.mubr.bf16.gmra.mrb[0].mxu0 %v3242
        %v6484 = vpop.f32.mrb[0].mxu0
        %v6485 = vadd.f32 %v6068, %v6484
        %v6486 = vpop.f32.mrb[0].mxu0
        %v6487 = vpop.f32.mrb[0].mxu0
        %v6488 = vadd.f32 %v6071, %v6487
        %v6489 = vpop.f32.mrb[0].mxu0
        %6490 = vmatprep.mubr.bf16.mxu0 %v3255
        %6491 = vmatmul.mubr.bf16.gmra.mrb[0].mxu0 %v3254
        %v6492 = vpop.f32.mrb[0].mxu0
        %v6493 = vadd.f32 %v6076, %v6492
        %v6494 = vpop.f32.mrb[0].mxu0
        %v6495 = vpop.f32.mrb[0].mxu0
        %v6496 = vadd.f32 %v6079, %v6495
        %v6497 = vpop.f32.mrb[0].mxu0
        %6498 = vmatprep.mubr.bf16.mxu0 %v3267
        %6499 = vmatmul.mubr.bf16.gmra.mrb[0].mxu0 %v3266
        %v6500 = vpop.f32.mrb[0].mxu0
        %v6501 = vadd.f32 %v6084, %v6500
        %v6502 = vpop.f32.mrb[0].mxu0
        %v6503 = vpop.f32.mrb[0].mxu0
        %v6504 = vadd.f32 %v6087, %v6503
        %v6505 = vpop.f32.mrb[0].mxu0
        %6506 = vdwg.mxu0
        %6507 = vmatprep.subr.bf16.mxu0 0
        %6508 = vmatpush1.bf16.msra.mxu0 %v4310
        %6509 = vmatprep.subr.bf16.mxu0 0
        %6510 = vmatpush1.bf16.msra.mxu0 %v4311
        %6511 = vmatprep.subr.bf16.mxu0 0
        %6512 = vmatpush1.bf16.msra.mxu0 %v4312
        %6513 = vmatprep.subr.bf16.mxu0 0
        %6514 = vmatpush1.bf16.msra.mxu0 %v4313
        %6515 = vmatprep.subr.bf16.mxu0 0
        %6516 = vmatpush1.bf16.msra.mxu0 %v4314
        %6517 = vmatprep.subr.bf16.mxu0 0
        %6518 = vmatpush1.bf16.msra.mxu0 %v4315
        %6519 = vmatprep.subr.bf16.mxu0 0
        %6520 = vmatpush1.bf16.msra.mxu0 %v4316
        %6521 = vmatprep.subr.bf16.mxu0 0
        %6522 = vmatpush1.bf16.msra.mxu0 %v4317
        %6523 = vmatprep.subr.bf16.mxu0 0
        %6524 = vmatpush1.bf16.msra.mxu0 %v4318
        %6525 = vmatprep.subr.bf16.mxu0 0
        %6526 = vmatpush1.bf16.msra.mxu0 %v4319
        %6527 = vmatprep.subr.bf16.mxu0 0
        %6528 = vmatpush1.bf16.msra.mxu0 %v4320
        %6529 = vmatprep.subr.bf16.mxu0 0
        %6530 = vmatpush1.bf16.msra.mxu0 %v4321
        %6531 = vmatprep.subr.bf16.mxu0 0
        %6532 = vmatpush1.bf16.msra.mxu0 %v4322
        %6533 = vmatprep.subr.bf16.mxu0 0
        %6534 = vmatpush1.bf16.msra.mxu0 %v4323
        %6535 = vmatprep.subr.bf16.mxu0 0
        %6536 = vmatpush1.bf16.msra.mxu0 %v4324
        %6537 = vmatprep.subr.bf16.mxu0 0
        %6538 = vmatpush1.bf16.msra.mxu0 %v4325
        %6539 = vmatprep.mubr.bf16.mxu0 %v2705
        %6540 = vmatmul.mubr.bf16.gmra.mrb[0].mxu0 %v2704
        %v6541 = vpop.f32.mrb[0].mxu0
        %v6542 = vadd.f32 %v6125, %v6541
        %v6543 = vpop.f32.mrb[0].mxu0
        %v6544 = vpop.f32.mrb[0].mxu0
        %v6545 = vadd.f32 %v6128, %v6544
        %v6546 = vpop.f32.mrb[0].mxu0
        %6547 = vmatprep.mubr.bf16.mxu0 %v2717
        %6548 = vmatmul.mubr.bf16.gmra.mrb[0].mxu0 %v2716
        %v6549 = vpop.f32.mrb[0].mxu0
        %v6550 = vadd.f32 %v6133, %v6549
        %v6551 = vpop.f32.mrb[0].mxu0
        %v6552 = vpop.f32.mrb[0].mxu0
        %v6553 = vadd.f32 %v6136, %v6552
        %v6554 = vpop.f32.mrb[0].mxu0
        %6555 = vmatprep.mubr.bf16.mxu0 %v2729
        %6556 = vmatmul.mubr.bf16.gmra.mrb[0].mxu0 %v2728
        %v6557 = vpop.f32.mrb[0].mxu0
        %v6558 = vadd.f32 %v6141, %v6557
        %v6559 = vpop.f32.mrb[0].mxu0
        %v6560 = vpop.f32.mrb[0].mxu0
        %v6561 = vadd.f32 %v6144, %v6560
        %v6562 = vpop.f32.mrb[0].mxu0
        %6563 = vmatprep.mubr.bf16.mxu0 %v2741
        %6564 = vmatmul.mubr.bf16.gmra.mrb[0].mxu0 %v2740
        %v6565 = vpop.f32.mrb[0].mxu0
        %v6566 = vadd.f32 %v6149, %v6565
        %v6567 = vpop.f32.mrb[0].mxu0
        %v6568 = vpop.f32.mrb[0].mxu0
        %v6569 = vadd.f32 %v6152, %v6568
        %v6570 = vpop.f32.mrb[0].mxu0
        %6571 = vmatprep.mubr.bf16.mxu0 %v2753
        %6572 = vmatmul.mubr.bf16.gmra.mrb[0].mxu0 %v2752
        %v6573 = vpop.f32.mrb[0].mxu0
        %v6574 = vadd.f32 %v6157, %v6573
        %v6575 = vpop.f32.mrb[0].mxu0
        %v6576 = vpop.f32.mrb[0].mxu0
        %v6577 = vadd.f32 %v6160, %v6576
        %v6578 = vpop.f32.mrb[0].mxu0
        %6579 = vmatprep.mubr.bf16.mxu0 %v2765
        %6580 = vmatmul.mubr.bf16.gmra.mrb[0].mxu0 %v2764
        %v6581 = vpop.f32.mrb[0].mxu0
        %v6582 = vadd.f32 %v6165, %v6581
        %v6583 = vpop.f32.mrb[0].mxu0
        %v6584 = vpop.f32.mrb[0].mxu0
        %v6585 = vadd.f32 %v6168, %v6584
        %v6586 = vpop.f32.mrb[0].mxu0
        %6587 = vmatprep.mubr.bf16.mxu0 %v2777
        %6588 = vmatmul.mubr.bf16.gmra.mrb[0].mxu0 %v2776
        %v6589 = vpop.f32.mrb[0].mxu0
        %v6590 = vadd.f32 %v6173, %v6589
        %v6591 = vpop.f32.mrb[0].mxu0
        %v6592 = vpop.f32.mrb[0].mxu0
        %v6593 = vadd.f32 %v6176, %v6592
        %v6594 = vpop.f32.mrb[0].mxu0
        %6595 = vmatprep.mubr.bf16.mxu0 %v2789
        %6596 = vmatmul.mubr.bf16.gmra.mrb[0].mxu0 %v2788
        %v6597 = vpop.f32.mrb[0].mxu0
        %v6598 = vadd.f32 %v6181, %v6597
        %v6599 = vpop.f32.mrb[0].mxu0
        %v6600 = vpop.f32.mrb[0].mxu0
        %v6601 = vadd.f32 %v6184, %v6600
        %v6602 = vpop.f32.mrb[0].mxu0
        %6603 = vmatprep.mubr.bf16.mxu0 %v2801
        %6604 = vmatmul.mubr.bf16.gmra.mrb[0].mxu0 %v2800
        %v6605 = vpop.f32.mrb[0].mxu0
        %v6606 = vadd.f32 %v6189, %v6605
        %v6607 = vpop.f32.mrb[0].mxu0
        %v6608 = vpop.f32.mrb[0].mxu0
        %v6609 = vadd.f32 %v6192, %v6608
        %v6610 = vpop.f32.mrb[0].mxu0
        %6611 = vmatprep.mubr.bf16.mxu0 %v2813
        %6612 = vmatmul.mubr.bf16.gmra.mrb[0].mxu0 %v2812
        %v6613 = vpop.f32.mrb[0].mxu0
        %v6614 = vadd.f32 %v6197, %v6613
        %v6615 = vpop.f32.mrb[0].mxu0
        %v6616 = vpop.f32.mrb[0].mxu0
        %v6617 = vadd.f32 %v6200, %v6616
        %v6618 = vpop.f32.mrb[0].mxu0
        %6619 = vmatprep.mubr.bf16.mxu0 %v2825
        %6620 = vmatmul.mubr.bf16.gmra.mrb[0].mxu0 %v2824
        %v6621 = vpop.f32.mrb[0].mxu0
        %v6622 = vadd.f32 %v6205, %v6621
        %v6623 = vpop.f32.mrb[0].mxu0
        %v6624 = vpop.f32.mrb[0].mxu0
        %v6625 = vadd.f32 %v6208, %v6624
        %v6626 = vpop.f32.mrb[0].mxu0
        %6627 = vmatprep.mubr.bf16.mxu0 %v2837
        %6628 = vmatmul.mubr.bf16.gmra.mrb[0].mxu0 %v2836
        %v6629 = vpop.f32.mrb[0].mxu0
        %v6630 = vadd.f32 %v6213, %v6629
        %v6631 = vpop.f32.mrb[0].mxu0
        %v6632 = vpop.f32.mrb[0].mxu0
        %v6633 = vadd.f32 %v6216, %v6632
        %v6634 = vpop.f32.mrb[0].mxu0
        %6635 = vmatprep.mubr.bf16.mxu0 %v2849
        %6636 = vmatmul.mubr.bf16.gmra.mrb[0].mxu0 %v2848
        %v6637 = vpop.f32.mrb[0].mxu0
        %v6638 = vadd.f32 %v6221, %v6637
        %v6639 = vpop.f32.mrb[0].mxu0
        %v6640 = vpop.f32.mrb[0].mxu0
        %v6641 = vadd.f32 %v6224, %v6640
        %v6642 = vpop.f32.mrb[0].mxu0
        %6643 = vmatprep.mubr.bf16.mxu0 %v2861
        %6644 = vmatmul.mubr.bf16.gmra.mrb[0].mxu0 %v2860
        %v6645 = vpop.f32.mrb[0].mxu0
        %v6646 = vadd.f32 %v6229, %v6645
        %v6647 = vpop.f32.mrb[0].mxu0
        %v6648 = vpop.f32.mrb[0].mxu0
        %v6649 = vadd.f32 %v6232, %v6648
        %v6650 = vpop.f32.mrb[0].mxu0
        %6651 = vmatprep.mubr.bf16.mxu0 %v2873
        %6652 = vmatmul.mubr.bf16.gmra.mrb[0].mxu0 %v2872
        %v6653 = vpop.f32.mrb[0].mxu0
        %v6654 = vadd.f32 %v6237, %v6653
        %v6655 = vpop.f32.mrb[0].mxu0
        %v6656 = vpop.f32.mrb[0].mxu0
        %v6657 = vadd.f32 %v6240, %v6656
        %v6658 = vpop.f32.mrb[0].mxu0
        %6659 = vmatprep.mubr.bf16.mxu0 %v2885
        %6660 = vmatmul.mubr.bf16.gmra.mrb[0].mxu0 %v2884
        %v6661 = vpop.f32.mrb[0].mxu0
        %v6662 = vadd.f32 %v6245, %v6661
        %v6663 = vpop.f32.mrb[0].mxu0
        %v6664 = vpop.f32.mrb[0].mxu0
        %v6665 = vadd.f32 %v6248, %v6664
        %v6666 = vpop.f32.mrb[0].mxu0
        %6667 = vmatprep.mubr.bf16.mxu0 %v2897
        %6668 = vmatmul.mubr.bf16.gmra.mrb[0].mxu0 %v2896
        %v6669 = vpop.f32.mrb[0].mxu0
        %v6670 = vadd.f32 %v6253, %v6669
        %v6671 = vpop.f32.mrb[0].mxu0
        %v6672 = vpop.f32.mrb[0].mxu0
        %v6673 = vadd.f32 %v6256, %v6672
        %v6674 = vpop.f32.mrb[0].mxu0
        %6675 = vmatprep.mubr.bf16.mxu0 %v2909
        %6676 = vmatmul.mubr.bf16.gmra.mrb[0].mxu0 %v2908
        %v6677 = vpop.f32.mrb[0].mxu0
        %v6678 = vadd.f32 %v6261, %v6677
        %v6679 = vpop.f32.mrb[0].mxu0
        %v6680 = vpop.f32.mrb[0].mxu0
        %v6681 = vadd.f32 %v6264, %v6680
        %v6682 = vpop.f32.mrb[0].mxu0
        %6683 = vmatprep.mubr.bf16.mxu0 %v2921
        %6684 = vmatmul.mubr.bf16.gmra.mrb[0].mxu0 %v2920
        %v6685 = vpop.f32.mrb[0].mxu0
        %v6686 = vadd.f32 %v6269, %v6685
        %v6687 = vpop.f32.mrb[0].mxu0
        %v6688 = vpop.f32.mrb[0].mxu0
        %v6689 = vadd.f32 %v6272, %v6688
        %v6690 = vpop.f32.mrb[0].mxu0
        %6691 = vmatprep.mubr.bf16.mxu0 %v2933
        %6692 = vmatmul.mubr.bf16.gmra.mrb[0].mxu0 %v2932
        %v6693 = vpop.f32.mrb[0].mxu0
        %v6694 = vadd.f32 %v6277, %v6693
        %v6695 = vpop.f32.mrb[0].mxu0
        %v6696 = vpop.f32.mrb[0].mxu0
        %v6697 = vadd.f32 %v6280, %v6696
        %v6698 = vpop.f32.mrb[0].mxu0
        %6699 = vmatprep.mubr.bf16.mxu0 %v2945
        %6700 = vmatmul.mubr.bf16.gmra.mrb[0].mxu0 %v2944
        %v6701 = vpop.f32.mrb[0].mxu0
        %v6702 = vadd.f32 %v6285, %v6701
        %v6703 = vpop.f32.mrb[0].mxu0
        %v6704 = vpop.f32.mrb[0].mxu0
        %v6705 = vadd.f32 %v6288, %v6704
        %v6706 = vpop.f32.mrb[0].mxu0
        %6707 = vmatprep.mubr.bf16.mxu0 %v2957
        %6708 = vmatmul.mubr.bf16.gmra.mrb[0].mxu0 %v2956
        %v6709 = vpop.f32.mrb[0].mxu0
        %v6710 = vadd.f32 %v6293, %v6709
        %v6711 = vpop.f32.mrb[0].mxu0
        %v6712 = vpop.f32.mrb[0].mxu0
        %v6713 = vadd.f32 %v6296, %v6712
        %v6714 = vpop.f32.mrb[0].mxu0
        %6715 = vmatprep.mubr.bf16.mxu0 %v2969
        %6716 = vmatmul.mubr.bf16.gmra.mrb[0].mxu0 %v2968
        %v6717 = vpop.f32.mrb[0].mxu0
        %v6718 = vadd.f32 %v6301, %v6717
        %v6719 = vpop.f32.mrb[0].mxu0
        %v6720 = vpop.f32.mrb[0].mxu0
        %v6721 = vadd.f32 %v6304, %v6720
        %v6722 = vpop.f32.mrb[0].mxu0
        %6723 = vmatprep.mubr.bf16.mxu0 %v2981
        %6724 = vmatmul.mubr.bf16.gmra.mrb[0].mxu0 %v2980
        %v6725 = vpop.f32.mrb[0].mxu0
        %v6726 = vadd.f32 %v6309, %v6725
        %v6727 = vpop.f32.mrb[0].mxu0
        %v6728 = vpop.f32.mrb[0].mxu0
        %v6729 = vadd.f32 %v6312, %v6728
        %v6730 = vpop.f32.mrb[0].mxu0
        %6731 = vmatprep.mubr.bf16.mxu0 %v2993
        %6732 = vmatmul.mubr.bf16.gmra.mrb[0].mxu0 %v2992
        %v6733 = vpop.f32.mrb[0].mxu0
        %v6734 = vadd.f32 %v6317, %v6733
        %v6735 = vpop.f32.mrb[0].mxu0
        %v6736 = vpop.f32.mrb[0].mxu0
        %v6737 = vadd.f32 %v6320, %v6736
        %v6738 = vpop.f32.mrb[0].mxu0
        %6739 = vmatprep.mubr.bf16.mxu0 %v3005
        %6740 = vmatmul.mubr.bf16.gmra.mrb[0].mxu0 %v3004
        %v6741 = vpop.f32.mrb[0].mxu0
        %v6742 = vadd.f32 %v6325, %v6741
        %v6743 = vpop.f32.mrb[0].mxu0
        %v6744 = vpop.f32.mrb[0].mxu0
        %v6745 = vadd.f32 %v6328, %v6744
        %v6746 = vpop.f32.mrb[0].mxu0
        %6747 = vmatprep.mubr.bf16.mxu0 %v3017
        %6748 = vmatmul.mubr.bf16.gmra.mrb[0].mxu0 %v3016
        %v6749 = vpop.f32.mrb[0].mxu0
        %v6750 = vadd.f32 %v6333, %v6749
        %v6751 = vpop.f32.mrb[0].mxu0
        %v6752 = vpop.f32.mrb[0].mxu0
        %v6753 = vadd.f32 %v6336, %v6752
        %v6754 = vpop.f32.mrb[0].mxu0
        %6755 = vmatprep.mubr.bf16.mxu0 %v3029
        %6756 = vmatmul.mubr.bf16.gmra.mrb[0].mxu0 %v3028
        %v6757 = vpop.f32.mrb[0].mxu0
        %v6758 = vadd.f32 %v6341, %v6757
        %v6759 = vpop.f32.mrb[0].mxu0
        %v6760 = vpop.f32.mrb[0].mxu0
        %v6761 = vadd.f32 %v6344, %v6760
        %v6762 = vpop.f32.mrb[0].mxu0
        %6763 = vmatprep.mubr.bf16.mxu0 %v3041
        %6764 = vmatmul.mubr.bf16.gmra.mrb[0].mxu0 %v3040
        %v6765 = vpop.f32.mrb[0].mxu0
        %v6766 = vadd.f32 %v6349, %v6765
        %v6767 = vpop.f32.mrb[0].mxu0
        %v6768 = vpop.f32.mrb[0].mxu0
        %v6769 = vadd.f32 %v6352, %v6768
        %v6770 = vpop.f32.mrb[0].mxu0
        %6771 = vmatprep.mubr.bf16.mxu0 %v3053
        %6772 = vmatmul.mubr.bf16.gmra.mrb[0].mxu0 %v3052
        %v6773 = vpop.f32.mrb[0].mxu0
        %v6774 = vadd.f32 %v6357, %v6773
        %v6775 = vpop.f32.mrb[0].mxu0
        %v6776 = vpop.f32.mrb[0].mxu0
        %v6777 = vadd.f32 %v6360, %v6776
        %v6778 = vpop.f32.mrb[0].mxu0
        %6779 = vmatprep.mubr.bf16.mxu0 %v3065
        %6780 = vmatmul.mubr.bf16.gmra.mrb[0].mxu0 %v3064
        %v6781 = vpop.f32.mrb[0].mxu0
        %v6782 = vadd.f32 %v6365, %v6781
        %v6783 = vpop.f32.mrb[0].mxu0
        %v6784 = vpop.f32.mrb[0].mxu0
        %v6785 = vadd.f32 %v6368, %v6784
        %v6786 = vpop.f32.mrb[0].mxu0
        %6787 = vmatprep.mubr.bf16.mxu0 %v3077
        %6788 = vmatmul.mubr.bf16.gmra.mrb[0].mxu0 %v3076
        %v6789 = vpop.f32.mrb[0].mxu0
        %v6790 = vadd.f32 %v6373, %v6789
        %v6791 = vpop.f32.mrb[0].mxu0
        %v6792 = vpop.f32.mrb[0].mxu0
        %v6793 = vadd.f32 %v6376, %v6792
        %v6794 = vpop.f32.mrb[0].mxu0
        %6795 = vmatprep.mubr.bf16.mxu0 %v3089
        %6796 = vmatmul.mubr.bf16.gmra.mrb[0].mxu0 %v3088
        %v6797 = vpop.f32.mrb[0].mxu0
        %v6798 = vadd.f32 %v6381, %v6797
        %v6799 = vpop.f32.mrb[0].mxu0
        %v6800 = vpop.f32.mrb[0].mxu0
        %v6801 = vadd.f32 %v6384, %v6800
        %v6802 = vpop.f32.mrb[0].mxu0
        %6803 = vmatprep.mubr.bf16.mxu0 %v3101
        %6804 = vmatmul.mubr.bf16.gmra.mrb[0].mxu0 %v3100
        %v6805 = vpop.f32.mrb[0].mxu0
        %v6806 = vadd.f32 %v6389, %v6805
        %v6807 = vpop.f32.mrb[0].mxu0
        %v6808 = vpop.f32.mrb[0].mxu0
        %v6809 = vadd.f32 %v6392, %v6808
        %v6810 = vpop.f32.mrb[0].mxu0
        %6811 = vmatprep.mubr.bf16.mxu0 %v3113
        %6812 = vmatmul.mubr.bf16.gmra.mrb[0].mxu0 %v3112
        %v6813 = vpop.f32.mrb[0].mxu0
        %v6814 = vadd.f32 %v6397, %v6813
        %v6815 = vpop.f32.mrb[0].mxu0
        %v6816 = vpop.f32.mrb[0].mxu0
        %v6817 = vadd.f32 %v6400, %v6816
        %v6818 = vpop.f32.mrb[0].mxu0
        %6819 = vmatprep.mubr.bf16.mxu0 %v3125
        %6820 = vmatmul.mubr.bf16.gmra.mrb[0].mxu0 %v3124
        %v6821 = vpop.f32.mrb[0].mxu0
        %v6822 = vadd.f32 %v6405, %v6821
        %v6823 = vpop.f32.mrb[0].mxu0
        %v6824 = vpop.f32.mrb[0].mxu0
        %v6825 = vadd.f32 %v6408, %v6824
        %v6826 = vpop.f32.mrb[0].mxu0
        %6827 = vmatprep.mubr.bf16.mxu0 %v3137
        %6828 = vmatmul.mubr.bf16.gmra.mrb[0].mxu0 %v3136
        %v6829 = vpop.f32.mrb[0].mxu0
        %v6830 = vadd.f32 %v6413, %v6829
        %v6831 = vpop.f32.mrb[0].mxu0
        %v6832 = vpop.f32.mrb[0].mxu0
        %v6833 = vadd.f32 %v6416, %v6832
        %v6834 = vpop.f32.mrb[0].mxu0
        %6835 = vmatprep.mubr.bf16.mxu0 %v3149
        %6836 = vmatmul.mubr.bf16.gmra.mrb[0].mxu0 %v3148
        %v6837 = vpop.f32.mrb[0].mxu0
        %v6838 = vadd.f32 %v6421, %v6837
        %v6839 = vpop.f32.mrb[0].mxu0
        %v6840 = vpop.f32.mrb[0].mxu0
        %v6841 = vadd.f32 %v6424, %v6840
        %v6842 = vpop.f32.mrb[0].mxu0
        %6843 = vmatprep.mubr.bf16.mxu0 %v3161
        %6844 = vmatmul.mubr.bf16.gmra.mrb[0].mxu0 %v3160
        %v6845 = vpop.f32.mrb[0].mxu0
        %v6846 = vadd.f32 %v6429, %v6845
        %v6847 = vpop.f32.mrb[0].mxu0
        %v6848 = vpop.f32.mrb[0].mxu0
        %v6849 = vadd.f32 %v6432, %v6848
        %v6850 = vpop.f32.mrb[0].mxu0
        %6851 = vmatprep.mubr.bf16.mxu0 %v3173
        %6852 = vmatmul.mubr.bf16.gmra.mrb[0].mxu0 %v3172
        %v6853 = vpop.f32.mrb[0].mxu0
        %v6854 = vadd.f32 %v6437, %v6853
        %v6855 = vpop.f32.mrb[0].mxu0
        %v6856 = vpop.f32.mrb[0].mxu0
        %v6857 = vadd.f32 %v6440, %v6856
        %v6858 = vpop.f32.mrb[0].mxu0
        %6859 = vmatprep.mubr.bf16.mxu0 %v3185
        %6860 = vmatmul.mubr.bf16.gmra.mrb[0].mxu0 %v3184
        %v6861 = vpop.f32.mrb[0].mxu0
        %v6862 = vadd.f32 %v6445, %v6861
        %v6863 = vpop.f32.mrb[0].mxu0
        %v6864 = vpop.f32.mrb[0].mxu0
        %v6865 = vadd.f32 %v6448, %v6864
        %v6866 = vpop.f32.mrb[0].mxu0
        %6867 = vmatprep.mubr.bf16.mxu0 %v3197
        %6868 = vmatmul.mubr.bf16.gmra.mrb[0].mxu0 %v3196
        %v6869 = vpop.f32.mrb[0].mxu0
        %v6870 = vadd.f32 %v6453, %v6869
        %v6871 = vpop.f32.mrb[0].mxu0
        %v6872 = vpop.f32.mrb[0].mxu0
        %v6873 = vadd.f32 %v6456, %v6872
        %v6874 = vpop.f32.mrb[0].mxu0
        %6875 = vmatprep.mubr.bf16.mxu0 %v3209
        %6876 = vmatmul.mubr.bf16.gmra.mrb[0].mxu0 %v3208
        %v6877 = vpop.f32.mrb[0].mxu0
        %v6878 = vadd.f32 %v6461, %v6877
        %v6879 = vpop.f32.mrb[0].mxu0
        %v6880 = vpop.f32.mrb[0].mxu0
        %v6881 = vadd.f32 %v6464, %v6880
        %v6882 = vpop.f32.mrb[0].mxu0
        %6883 = vmatprep.mubr.bf16.mxu0 %v3221
        %6884 = vmatmul.mubr.bf16.gmra.mrb[0].mxu0 %v3220
        %v6885 = vpop.f32.mrb[0].mxu0
        %v6886 = vadd.f32 %v6469, %v6885
        %v6887 = vpop.f32.mrb[0].mxu0
        %v6888 = vpop.f32.mrb[0].mxu0
        %v6889 = vadd.f32 %v6472, %v6888
        %v6890 = vpop.f32.mrb[0].mxu0
        %6891 = vmatprep.mubr.bf16.mxu0 %v3233
        %6892 = vmatmul.mubr.bf16.gmra.mrb[0].mxu0 %v3232
        %v6893 = vpop.f32.mrb[0].mxu0
        %v6894 = vadd.f32 %v6477, %v6893
        %v6895 = vpop.f32.mrb[0].mxu0
        %v6896 = vpop.f32.mrb[0].mxu0
        %v6897 = vadd.f32 %v6480, %v6896
        %v6898 = vpop.f32.mrb[0].mxu0
        %6899 = vmatprep.mubr.bf16.mxu0 %v3245
        %6900 = vmatmul.mubr.bf16.gmra.mrb[0].mxu0 %v3244
        %v6901 = vpop.f32.mrb[0].mxu0
        %v6902 = vadd.f32 %v6485, %v6901
        %v6903 = vpop.f32.mrb[0].mxu0
        %v6904 = vpop.f32.mrb[0].mxu0
        %v6905 = vadd.f32 %v6488, %v6904
        %v6906 = vpop.f32.mrb[0].mxu0
        %6907 = vmatprep.mubr.bf16.mxu0 %v3257
        %6908 = vmatmul.mubr.bf16.gmra.mrb[0].mxu0 %v3256
        %v6909 = vpop.f32.mrb[0].mxu0
        %v6910 = vadd.f32 %v6493, %v6909
        %v6911 = vpop.f32.mrb[0].mxu0
        %v6912 = vpop.f32.mrb[0].mxu0
        %v6913 = vadd.f32 %v6496, %v6912
        %v6914 = vpop.f32.mrb[0].mxu0
        %6915 = vmatprep.mubr.bf16.mxu0 %v3269
        %6916 = vmatmul.mubr.bf16.gmra.mrb[0].mxu0 %v3268
        %v6917 = vpop.f32.mrb[0].mxu0
        %v6918 = vadd.f32 %v6501, %v6917
        %v6919 = vpop.f32.mrb[0].mxu0
        %v6920 = vpop.f32.mrb[0].mxu0
        %v6921 = vadd.f32 %v6504, %v6920
        %v6922 = vpop.f32.mrb[0].mxu0
        %6923 = vdwg.mxu0
        %vm6924 = vcmask 7168
        %6925 = vst.msk [vmem:[%s193] sm:$0xff] %vm6924, %v6542
        %6926 = vst.msk [vmem:[%s193 + $0x8] sm:$0xff] %vm6924, %v6545
        %6927 = vst.msk [vmem:[%s193 + $0x10] sm:$0xff] %vm6924, %v6550
        %6928 = vst.msk [vmem:[%s193 + $0x18] sm:$0xff] %vm6924, %v6553
        %6929 = vst.msk [vmem:[%s193 + $0x20] sm:$0xff] %vm6924, %v6558
        %6930 = vst.msk [vmem:[%s193 + $0x28] sm:$0xff] %vm6924, %v6561
        %6931 = vst.msk [vmem:[%s193 + $0x30] sm:$0xff] %vm6924, %v6566
        %6932 = vst.msk [vmem:[%s193 + $0x38] sm:$0xff] %vm6924, %v6569
        %6933 = vst.msk [vmem:[%s193 + $0x40] sm:$0xff] %vm6924, %v6574
        %6934 = vst.msk [vmem:[%s193 + $0x48] sm:$0xff] %vm6924, %v6577
        %6935 = vst.msk [vmem:[%s193 + $0x50] sm:$0xff] %vm6924, %v6582
        %6936 = vst.msk [vmem:[%s193 + $0x58] sm:$0xff] %vm6924, %v6585
        %6937 = vst.msk [vmem:[%s193 + $0x60] sm:$0xff] %vm6924, %v6590
        %6938 = vst.msk [vmem:[%s193 + $0x68] sm:$0xff] %vm6924, %v6593
        %6939 = vst.msk [vmem:[%s193 + $0x70] sm:$0xff] %vm6924, %v6598
        %6940 = vst.msk [vmem:[%s193 + $0x78] sm:$0xff] %vm6924, %v6601
        %6941 = vst.msk [vmem:[%s193 + $0x80] sm:$0xff] %vm6924, %v6606
        %6942 = vst.msk [vmem:[%s193 + $0x88] sm:$0xff] %vm6924, %v6609
        %6943 = vst.msk [vmem:[%s193 + $0x90] sm:$0xff] %vm6924, %v6614
        %6944 = vst.msk [vmem:[%s193 + $0x98] sm:$0xff] %vm6924, %v6617
        %6945 = vst.msk [vmem:[%s193 + $0xa0] sm:$0xff] %vm6924, %v6622
        %6946 = vst.msk [vmem:[%s193 + $0xa8] sm:$0xff] %vm6924, %v6625
        %6947 = vst.msk [vmem:[%s193 + $0xb0] sm:$0xff] %vm6924, %v6630
        %6948 = vst.msk [vmem:[%s193 + $0xb8] sm:$0xff] %vm6924, %v6633
        %6949 = vst.msk [vmem:[%s193 + $0xc0] sm:$0xff] %vm6924, %v6638
        %6950 = vst.msk [vmem:[%s193 + $0xc8] sm:$0xff] %vm6924, %v6641
        %6951 = vst.msk [vmem:[%s193 + $0xd0] sm:$0xff] %vm6924, %v6646
        %6952 = vst.msk [vmem:[%s193 + $0xd8] sm:$0xff] %vm6924, %v6649
        %6953 = vst.msk [vmem:[%s193 + $0xe0] sm:$0xff] %vm6924, %v6654
        %6954 = vst.msk [vmem:[%s193 + $0xe8] sm:$0xff] %vm6924, %v6657
        %6955 = vst.msk [vmem:[%s193 + $0xf0] sm:$0xff] %vm6924, %v6662
        %6956 = vst.msk [vmem:[%s193 + $0xf8] sm:$0xff] %vm6924, %v6665
        %6957 = vst.msk [vmem:[%s193 + $0x100] sm:$0xff] %vm6924, %v6670
        %6958 = vst.msk [vmem:[%s193 + $0x108] sm:$0xff] %vm6924, %v6673
        %6959 = vst.msk [vmem:[%s193 + $0x110] sm:$0xff] %vm6924, %v6678
        %6960 = vst.msk [vmem:[%s193 + $0x118] sm:$0xff] %vm6924, %v6681
        %6961 = vst.msk [vmem:[%s193 + $0x120] sm:$0xff] %vm6924, %v6686
        %6962 = vst.msk [vmem:[%s193 + $0x128] sm:$0xff] %vm6924, %v6689
        %6963 = vst.msk [vmem:[%s193 + $0x130] sm:$0xff] %vm6924, %v6694
        %6964 = vst.msk [vmem:[%s193 + $0x138] sm:$0xff] %vm6924, %v6697
        %6965 = vst.msk [vmem:[%s193 + $0x140] sm:$0xff] %vm6924, %v6702
        %6966 = vst.msk [vmem:[%s193 + $0x148] sm:$0xff] %vm6924, %v6705
        %6967 = vst.msk [vmem:[%s193 + $0x150] sm:$0xff] %vm6924, %v6710
        %6968 = vst.msk [vmem:[%s193 + $0x158] sm:$0xff] %vm6924, %v6713
        %6969 = vst.msk [vmem:[%s193 + $0x160] sm:$0xff] %vm6924, %v6718
        %6970 = vst.msk [vmem:[%s193 + $0x168] sm:$0xff] %vm6924, %v6721
        %6971 = vst.msk [vmem:[%s193 + $0x170] sm:$0xff] %vm6924, %v6726
        %6972 = vst.msk [vmem:[%s193 + $0x178] sm:$0xff] %vm6924, %v6729
        %6973 = vst.msk [vmem:[%s193 + $0x180] sm:$0xff] %vm6924, %v6734
        %6974 = vst.msk [vmem:[%s193 + $0x188] sm:$0xff] %vm6924, %v6737
        %6975 = vst.msk [vmem:[%s193 + $0x190] sm:$0xff] %vm6924, %v6742
        %6976 = vst.msk [vmem:[%s193 + $0x198] sm:$0xff] %vm6924, %v6745
        %6977 = vst.msk [vmem:[%s193 + $0x1a0] sm:$0xff] %vm6924, %v6750
        %6978 = vst.msk [vmem:[%s193 + $0x1a8] sm:$0xff] %vm6924, %v6753
        %6979 = vst.msk [vmem:[%s193 + $0x1b0] sm:$0xff] %vm6924, %v6758
        %6980 = vst.msk [vmem:[%s193 + $0x1b8] sm:$0xff] %vm6924, %v6761
        %6981 = vst.msk [vmem:[%s193 + $0x1c0] sm:$0xff] %vm6924, %v6766
        %6982 = vst.msk [vmem:[%s193 + $0x1c8] sm:$0xff] %vm6924, %v6769
        %6983 = vst.msk [vmem:[%s193 + $0x1d0] sm:$0xff] %vm6924, %v6774
        %6984 = vst.msk [vmem:[%s193 + $0x1d8] sm:$0xff] %vm6924, %v6777
        %6985 = vst.msk [vmem:[%s193 + $0x1e0] sm:$0xff] %vm6924, %v6782
        %6986 = vst.msk [vmem:[%s193 + $0x1e8] sm:$0xff] %vm6924, %v6785
        %6987 = vst.msk [vmem:[%s193 + $0x1f0] sm:$0xff] %vm6924, %v6790
        %6988 = vst.msk [vmem:[%s193 + $0x1f8] sm:$0xff] %vm6924, %v6793
        %6989 = vst.msk [vmem:[%s193 + $0x200] sm:$0xff] %vm6924, %v6798
        %6990 = vst.msk [vmem:[%s193 + $0x208] sm:$0xff] %vm6924, %v6801
        %6991 = vst.msk [vmem:[%s193 + $0x210] sm:$0xff] %vm6924, %v6806
        %6992 = vst.msk [vmem:[%s193 + $0x218] sm:$0xff] %vm6924, %v6809
        %6993 = vst.msk [vmem:[%s193 + $0x220] sm:$0xff] %vm6924, %v6814
        %6994 = vst.msk [vmem:[%s193 + $0x228] sm:$0xff] %vm6924, %v6817
        %6995 = vst.msk [vmem:[%s193 + $0x230] sm:$0xff] %vm6924, %v6822
        %6996 = vst.msk [vmem:[%s193 + $0x238] sm:$0xff] %vm6924, %v6825
        %6997 = vst.msk [vmem:[%s193 + $0x240] sm:$0xff] %vm6924, %v6830
        %6998 = vst.msk [vmem:[%s193 + $0x248] sm:$0xff] %vm6924, %v6833
        %6999 = vst.msk [vmem:[%s193 + $0x250] sm:$0xff] %vm6924, %v6838
        %7000 = vst.msk [vmem:[%s193 + $0x258] sm:$0xff] %vm6924, %v6841
        %7001 = vst.msk [vmem:[%s193 + $0x260] sm:$0xff] %vm6924, %v6846
        %7002 = vst.msk [vmem:[%s193 + $0x268] sm:$0xff] %vm6924, %v6849
        %7003 = vst.msk [vmem:[%s193 + $0x270] sm:$0xff] %vm6924, %v6854
        %7004 = vst.msk [vmem:[%s193 + $0x278] sm:$0xff] %vm6924, %v6857
        %7005 = vst.msk [vmem:[%s193 + $0x280] sm:$0xff] %vm6924, %v6862
        %7006 = vst.msk [vmem:[%s193 + $0x288] sm:$0xff] %vm6924, %v6865
        %7007 = vst.msk [vmem:[%s193 + $0x290] sm:$0xff] %vm6924, %v6870
        %7008 = vst.msk [vmem:[%s193 + $0x298] sm:$0xff] %vm6924, %v6873
        %7009 = vst.msk [vmem:[%s193 + $0x2a0] sm:$0xff] %vm6924, %v6878
        %7010 = vst.msk [vmem:[%s193 + $0x2a8] sm:$0xff] %vm6924, %v6881
        %7011 = vst.msk [vmem:[%s193 + $0x2b0] sm:$0xff] %vm6924, %v6886
        %7012 = vst.msk [vmem:[%s193 + $0x2b8] sm:$0xff] %vm6924, %v6889
        %7013 = vst.msk [vmem:[%s193 + $0x2c0] sm:$0xff] %vm6924, %v6894
        %7014 = vst.msk [vmem:[%s193 + $0x2c8] sm:$0xff] %vm6924, %v6897
        %7015 = vst.msk [vmem:[%s193 + $0x2d0] sm:$0xff] %vm6924, %v6902
        %7016 = vst.msk [vmem:[%s193 + $0x2d8] sm:$0xff] %vm6924, %v6905
        %7017 = vst.msk [vmem:[%s193 + $0x2e0] sm:$0xff] %vm6924, %v6910
        %7018 = vst.msk [vmem:[%s193 + $0x2e8] sm:$0xff] %vm6924, %v6913
        %7019 = vst.msk [vmem:[%s193 + $0x2f0] sm:$0xff] %vm6924, %v6918
        %7020 = vst.msk [vmem:[%s193 + $0x2f8] sm:$0xff] %vm6924, %v6921
        %s7021 = smul.u32 96, %s18
        %p7022 = scmp.lt.s32.totalorder %s7021, 191
        %s7023 = scalar_select %p7022, %s7021, 191
        %s7024 = smul.addr %s7023, 8
        %s7025 = scalar_lea.vmem %s3, %s7024
        // Predicated region
        $region37: #{tpu_custom_call.1} parent=31 // pred_check
          %p7026 = pneg %p104
        $region38: #{tpu_custom_call.1} parent=31 // pred_check_branch
          %7028 = sbr.rel (%p7026) target = $region40
        $region39: #{tpu_custom_call.1} parent=31 // pred_region
          %s7029 = smul.u32 96, %s18
        $region40: #{tpu_custom_call.1} parent=31 // pred_fallthru
          _
      $region32: #{tpu_custom_call.1} parent=5 // pred_fallthru
        _
      %p7030 = scmp.le.s32.totalorder 2, %s13
      // Predicated region
      $region41: #{tpu_custom_call.1} parent=5 // pred_check
        %p7031 = pneg %p7030
      $region42: #{tpu_custom_call.1} parent=5 // pred_check_branch
        %7033 = sbr.rel (%p7031) target = $region44
      $region43: #{tpu_custom_call.1} parent=5 // pred_region
        %s7034 = ssub.s32 %s13, 2
        // Predicated region
        $region45: #{tpu_custom_call.1} parent=43 // pred_check
          %p7035 = pneg %p110
        $region46: #{tpu_custom_call.1} parent=43 // pred_check_branch
          %7037 = sbr.rel (%p7035) target = $region48
        $region47: #{tpu_custom_call.1} parent=43 // pred_region
          %s7038 = smul.u32 96, %s19
          %p7039 = scmp.lt.s32.totalorder %s7038, 191
          %s7040 = scalar_select %p7039, %s7038, 191
          %s7041 = smul.addr %s7040, 8
          %s7042 = scalar_lea.vmem %s3, %s7041
        $region48: #{tpu_custom_call.1} parent=43 // pred_fallthru
          _
      $region44: #{tpu_custom_call.1} parent=5 // pred_fallthru
        _
    $region6: #{tpu_custom_call.1} parent=1 // loop_footer
      %s17 = sadd.s32 1, %s13
    $region7: #{tpu_custom_call.1} parent=1 // loop_footer_branch
      %12 = sbr.rel target = $region3
    $region8: #{tpu_custom_call.1} parent=1 // loop_exit
      _
    %7043 = vsyncpa [#allocation4], 1
    %s7044 = scalar_lea.sflag [#allocation4], 1
    %7045 = vsyncpa %s7044, 1

</llo_original>
